<compile_context>
chip_gen: v7x
topology: tpu7x:2x2x1
jax: 0.10.0
libtpu: 0.0.40
codegen_flags: <defaults>
</compile_context>

<pallas_src>
import jax
import jax.numpy as jnp
from jax.experimental import pallas as pl
from jax.experimental.pallas import tpu as pltpu

NEG = -1e30  # finite stand-in for -inf used by _mask_by_1dmask (exp underflows to exactly 0)


def _layer_norm(x, gamma, beta, eps=1e-5):
    mu = jnp.mean(x, axis=-1, keepdims=True)
    xc = x - mu
    var = jnp.mean(xc * xc, axis=-1, keepdims=True)
    return xc * jax.lax.rsqrt(var + eps) * gamma + beta


def _masked_softmax(x, valid_f):
    """PyTorch _mask_by_1dmask + softmax: mask to -inf, fully-masked rows reset to 0."""
    x = jnp.where(valid_f > 0.5, x, NEG)
    row_max = jnp.max(x, axis=-1, keepdims=True)
    dead = row_max <= NEG * 0.5
    x = jnp.where(dead, 0.0, x)
    row_max = jnp.where(dead, 0.0, row_max)
    e = jnp.exp(x - row_max)
    return e * pl.reciprocal(jnp.sum(e, axis=-1, keepdims=True), approx=True)


def _stacked_attention_kernel(x_ref, ref_ref, mrow_ref, mcol_ref,
                              wqkv_ref, bqkv_ref, wo_ref, bo_ref,
                              lng_ref, lnb_ref, fng_ref, fnb_ref, out_ref):
    bt, L, hdim = x_ref.shape
    num_layers = wqkv_ref.shape[0]
    num_heads = ref_ref.shape[0] // num_layers
    dk = hdim // num_heads
    scale = 1.0 / float(dk) ** 0.5

    mrow = mrow_ref[...]                        # (bt, 1, L)
    mcol = mcol_ref[...]                        # (bt, L, 1)
    valid = mrow * mcol                         # (bt, L, L) float {0,1}

    cur = x_ref[...]                            # (bt, L, h) f32

    for l in range(num_layers):                 # static unroll over layers
        residual = cur

        # ONE fused QKV projection per layer over all bt*L rows (bf16 in, f32 acc).
        cur2 = cur.reshape(bt * L, hdim)
        qkv = jnp.dot(cur2.astype(jnp.bfloat16), wqkv_ref[l],
                      preferred_element_type=jnp.float32) + bqkv_ref[l]    # (bt*L, 3h)
        q = qkv[:, :hdim].reshape(bt, L, hdim)
        k = qkv[:, hdim:2 * hdim].reshape(bt, L, hdim)
        v = qkv[:, 2 * hdim:].reshape(bt, L, hdim)

        heads = []
        for hd in range(num_heads):             # static unroll over heads, batched over tile
            sl = slice(hd * dk, (hd + 1) * dk)
            qh = q[:, :, sl].astype(jnp.bfloat16)                          # (bt, L, dk)
            kh = k[:, :, sl].astype(jnp.bfloat16)
            vh = v[:, :, sl].astype(jnp.bfloat16)

            scores = jnp.einsum('bqd,bkd->bqk', qh, kh,
                                preferred_element_type=jnp.float32) * scale  # (bt, L, L)
            attn = _masked_softmax(scores, valid)

            # ref logits precomputed in the wrapper (hoisted repr MLP)
            refw = _masked_softmax(ref_ref[l * num_heads + hd], valid)       # (bt, L, L)

            comb = attn + refw
            comb = comb / jnp.sum(comb, axis=-1, keepdims=True)              # exact renorm
            out_h = jnp.einsum('bqk,bkd->bqd', comb.astype(jnp.bfloat16), vh,
                               preferred_element_type=jnp.float32)           # (bt, L, dk)
            heads.append(out_h)

        # lane-concat heads back into the h lanes, then ONE output projection matmul.
        attn_out = jnp.concatenate(heads, axis=-1).reshape(bt * L, hdim)
        proj = jnp.dot(attn_out.astype(jnp.bfloat16), wo_ref[l],
                       preferred_element_type=jnp.float32) + bo_ref[l]       # (bt*L, h)
        cur = _layer_norm(residual + proj.reshape(bt, L, hdim),
                          lng_ref[l], lnb_ref[l])

    fin = _layer_norm(cur, fng_ref[...], fnb_ref[...])                       # (bt, L, h)
    # (input * mask.unsqueeze(-1)).sum(dim=1) as a masked sublane reduction, single store.
    out_ref[...] = jnp.sum(fin * mcol, axis=1, keepdims=True)                # (bt, 1, h)


def _process_node_feature(x, mask):
    """StackedAttention.process_node_feature: ragged (N_total,h) -> zero-padded (B,L,h)."""
    B, L = mask.shape
    lens = jnp.sum(mask, axis=1).astype(jnp.int32)
    starts = jnp.concatenate(
        [jnp.zeros((1,), jnp.int32), jnp.cumsum(lens)[:-1].astype(jnp.int32)])
    pos = jnp.arange(L, dtype=jnp.int32)
    gidx = jnp.clip(starts[:, None] + pos[None, :], 0, x.shape[0] - 1)
    node = jnp.where((pos[None, :] < lens[:, None])[..., None], x[gidx], 0.0)
    return node.astype(jnp.float32)


def stacked_attention_forward(x, mask, refCov, params, *, batch_tile=8):
    B, L = mask.shape
    h = x.shape[-1]
    NL = params['Wq'].shape[0]
    H = params['W2r'].shape[-1]

    node = _process_node_feature(x, mask)                              # (B, L, h)

    # --- refCov path hoisted out of the kernel: batched XLA matmuls over all pairs ---
    W1r = params['W1r'].astype(jnp.float32)
    b1r = params['b1r'].astype(jnp.float32)
    W2r = params['W2r'].astype(jnp.float32)
    b2r = params['b2r'].astype(jnp.float32)
    h1 = jnp.maximum(jnp.einsum('bijc,lcm->lbijm', refCov.astype(jnp.float32), W1r)
                     + b1r[:, None, None, :, :], 0.0)                  # (NL, B, L, L, 32)
    rlog = jnp.einsum('lbijm,lmh->lbijh', h1, W2r) + b2r[:, None, None, :, :]
    ref_logits = jnp.transpose(rlog, (0, 4, 1, 2, 3)).reshape(NL * H, B, L, L)

    maskf = mask.astype(jnp.float32)
    mask_row = maskf[:, None, :]                                       # (B, 1, L)
    mask_col = maskf[:, :, None]                                       # (B, L, 1)

    # >=2 grid steps whenever B >= 2 so both v7x TensorCores get work.
    bt = min(batch_tile, max(1, (B + 1) // 2))
    b_pad = ((B + bt - 1) // bt) * bt
    if b_pad != B:
        pb = b_pad - B
        node = jnp.pad(node, [(0, pb), (0, 0), (0, 0)])
        ref_logits = jnp.pad(ref_logits, [(0, 0), (0, pb), (0, 0), (0, 0)])
        mask_row = jnp.pad(mask_row, [(0, pb), (0, 0), (0, 0)])
        mask_col = jnp.pad(mask_col, [(0, pb), (0, 0), (0, 0)])

    # Fused QKV weights; matmul weights shipped as bf16 (f32 accumulation in-kernel).
    wqkv = jnp.concatenate([params['Wq'], params['Wk'], params['Wv']],
                           axis=-1).astype(jnp.bfloat16)               # (NL, h, 3h)
    bqkv = jnp.concatenate([params['bq'], params['bk'], params['bv']],
                           axis=-1).astype(jnp.float32)                # (NL, 1, 3h)
    wo = params['Wo'].astype(jnp.bfloat16)                             # (NL, h, h)
    bo = params['bo'].astype(jnp.float32)                              # (NL, 1, h)
    ln_g = params['ln_g'].astype(jnp.float32)
    ln_b = params['ln_b'].astype(jnp.float32)
    fn_g = params['fn_g'].astype(jnp.float32)
    fn_b = params['fn_b'].astype(jnp.float32)

    in_specs = [
        pl.BlockSpec((bt, L, h), lambda i: (i, 0, 0)),                  # node
        pl.BlockSpec((NL * H, bt, L, L), lambda i: (0, i, 0, 0)),       # ref logits
        pl.BlockSpec((bt, 1, L), lambda i: (i, 0, 0)),                  # mask row
        pl.BlockSpec((bt, L, 1), lambda i: (i, 0, 0)),                  # mask col
        pl.BlockSpec((NL, h, 3 * h), lambda i: (0, 0, 0)),              # Wqkv
        pl.BlockSpec((NL, 1, 3 * h), lambda i: (0, 0, 0)),              # bqkv
        pl.BlockSpec((NL, h, h), lambda i: (0, 0, 0)),                  # Wo
        pl.BlockSpec((NL, 1, h), lambda i: (0, 0, 0)),                  # bo
        pl.BlockSpec((NL, 1, h), lambda i: (0, 0, 0)),                  # ln_g
        pl.BlockSpec((NL, 1, h), lambda i: (0, 0, 0)),                  # ln_b
        pl.BlockSpec((1, h), lambda i: (0, 0)),                         # fn_g
        pl.BlockSpec((1, h), lambda i: (0, 0)),                         # fn_b
    ]

    out = pl.pallas_call(
        _stacked_attention_kernel,
        out_shape=jax.ShapeDtypeStruct((b_pad, 1, h), jnp.float32),
        grid=(b_pad // bt,),
        in_specs=in_specs,
        out_specs=pl.BlockSpec((bt, 1, h), lambda i: (i, 0, 0)),
        compiler_params=pltpu.CompilerParams(dimension_semantics=("parallel",)),
    )(node, ref_logits, mask_row, mask_col,
      wqkv, bqkv, wo, bo, ln_g, ln_b, fn_g, fn_b)
    return out[:B, 0, :]


def _reference(x, mask, refCov, params):
    """Pure-JAX mirror of the PyTorch forward, for verification."""
    node = _process_node_feature(x, mask)
    B, L, h = node.shape
    NL = params['Wq'].shape[0]
    H = params['W2r'].shape[-1]
    dk = h // H
    maskb = mask.astype(bool)

    def mask_by_1dmask(t):                                   # t: (B, H, L, L)
        m2 = (maskb[:, :, None] & maskb[:, None, :])[:, None, :, :]
        t = jnp.where(m2, t, NEG)
        dead = jnp.all(t <= NEG * 0.5, axis=-1, keepdims=True)
        return jnp.where(dead, 0.0, t)

    cur = node
    for l in range(NL):
        residual = cur
        q = cur @ params['Wq'][l] + params['bq'][l]
        k = cur @ params['Wk'][l] + params['bk'][l]
        v = cur @ params['Wv'][l] + params['bv'][l]
        q = q.reshape(B, L, H, dk).transpose(0, 2, 1, 3)
        k = k.reshape(B, L, H, dk).transpose(0, 2, 1, 3)
        v = v.reshape(B, L, H, dk).transpose(0, 2, 1, 3)
        scores = jnp.einsum('bhid,bhjd->bhij', q, k) / (dk ** 0.5)
        attn = jax.nn.softmax(mask_by_1dmask(scores), axis=-1)
        h1 = jnp.maximum(
            jnp.einsum('bijc,cm->bijm', refCov, params['W1r'][l]) + params['b1r'][l][0], 0.0)
        rlog = jnp.einsum('bijm,mh->bijh', h1, params['W2r'][l]) + params['b2r'][l][0]
        refw = jax.nn.softmax(mask_by_1dmask(rlog.transpose(0, 3, 1, 2)), axis=-1)
        comb = attn + refw
        comb = comb / jnp.sum(comb, axis=-1, keepdims=True)
        out = jnp.einsum('bhij,bhjd->bhid', comb, v)
        out = out.transpose(0, 2, 1, 3).reshape(B, L, h)
        out = out @ params['Wo'][l] + params['bo'][l]
        cur = _layer_norm(residual + out, params['ln_g'][l], params['ln_b'][l])
    fin = _layer_norm(cur, params['fn_g'], params['fn_b'])
    return jnp.sum(fin * mask[:, :, None].astype(jnp.float32), axis=1)


if __name__ == "__main__":
    B, L, HIDDEN, HEADS, LAYERS, C_REF = 2, 16, 32, 4, 2, 53
    keys = jax.random.split(jax.random.PRNGKey(0), 18)

    lens = jnp.array([10, 13], dtype=jnp.int32)
    mask = (jnp.arange(L)[None, :] < lens[:, None]).astype(jnp.int32)
    n_total = int(lens.sum())
    x = jax.random.normal(keys[0], (n_total, HIDDEN), jnp.float32)
    refCov = jax.random.normal(keys[1], (B, L, L, C_REF), jnp.float32)

    def w(k, shape, scale=0.1):
        return jax.random.normal(k, shape, jnp.float32) * scale

    params = {
        'Wq': w(keys[2], (LAYERS, HIDDEN, HIDDEN)),  'bq': w(keys[3], (LAYERS, 1, HIDDEN)),
        'Wk': w(keys[4], (LAYERS, HIDDEN, HIDDEN)),  'bk': w(keys[5], (LAYERS, 1, HIDDEN)),
        'Wv': w(keys[6], (LAYERS, HIDDEN, HIDDEN)),  'bv': w(keys[7], (LAYERS, 1, HIDDEN)),
        'Wo': w(keys[8], (LAYERS, HIDDEN, HIDDEN)),  'bo': w(keys[9], (LAYERS, 1, HIDDEN)),
        'W1r': w(keys[10], (LAYERS, C_REF, 32)),     'b1r': w(keys[11], (LAYERS, 1, 32)),
        'W2r': w(keys[12], (LAYERS, 32, HEADS)),     'b2r': w(keys[13], (LAYERS, 1, HEADS)),
        'ln_g': 1.0 + w(keys[14], (LAYERS, 1, HIDDEN)), 'ln_b': w(keys[15], (LAYERS, 1, HIDDEN)),
        'fn_g': 1.0 + w(keys[16], (1, HIDDEN)),         'fn_b': w(keys[17], (1, HIDDEN)),
    }

    out = stacked_attention_forward(x, mask, refCov, params)
    out = jax.block_until_ready(out)

    ref = _reference(x, mask, refCov, params)
    assert out.shape == (B, HIDDEN), out.shape
    # bf16 matmul inputs (f32 accumulate) in the kernel vs f32 reference -> modest tolerance
    assert jnp.allclose(out, ref, atol=5e-2, rtol=5e-2), float(jnp.max(jnp.abs(out - ref)))
    print("KERNEL_OK")
</pallas_src>

<mosaic_0001>
module attributes {stable_mosaic.version = 11 : i64} {
  func.func @_stacked_attention_kernel(%arg0: i32, %arg1: memref<1x16x32xf32, #tpu.memory_space<vmem>>, %arg2: memref<8x1x16x16xf32, #tpu.memory_space<vmem>>, %arg3: memref<1x1x16xf32, #tpu.memory_space<vmem>>, %arg4: memref<1x16x1xf32, #tpu.memory_space<vmem>>, %arg5: memref<2x32x96xbf16, #tpu.memory_space<vmem>>, %arg6: memref<2x1x96xf32, #tpu.memory_space<vmem>>, %arg7: memref<2x32x32xbf16, #tpu.memory_space<vmem>>, %arg8: memref<2x1x32xf32, #tpu.memory_space<vmem>>, %arg9: memref<2x1x32xf32, #tpu.memory_space<vmem>>, %arg10: memref<2x1x32xf32, #tpu.memory_space<vmem>>, %arg11: memref<1x32xf32, #tpu.memory_space<vmem>>, %arg12: memref<1x32xf32, #tpu.memory_space<vmem>>, %arg13: memref<1x1x32xf32, #tpu.memory_space<vmem>>) attributes {dimension_semantics = [#tpu.dimension_semantics<parallel>], iteration_bounds = array<i64: 2>, scalar_prefetch = 0 : i64, scratch_operands = 0 : i64, tpu.core_type = #tpu.core_type<tc>, window_params = [{transform_indices = @transform_0, window_bounds = array<i64: 1, 16, 32>}, {transform_indices = @transform_1, window_bounds = array<i64: 8, 1, 16, 16>}, {transform_indices = @transform_2, window_bounds = array<i64: 1, 1, 16>}, {transform_indices = @transform_3, window_bounds = array<i64: 1, 16, 1>}, {pipeline_mode = #tpu.pipeline_mode<synchronous>, transform_indices = @transform_4, window_bounds = array<i64: 2, 32, 96>}, {pipeline_mode = #tpu.pipeline_mode<synchronous>, transform_indices = @transform_5, window_bounds = array<i64: 2, 1, 96>}, {pipeline_mode = #tpu.pipeline_mode<synchronous>, transform_indices = @transform_6, window_bounds = array<i64: 2, 32, 32>}, {pipeline_mode = #tpu.pipeline_mode<synchronous>, transform_indices = @transform_7, window_bounds = array<i64: 2, 1, 32>}, {pipeline_mode = #tpu.pipeline_mode<synchronous>, transform_indices = @transform_8, window_bounds = array<i64: 2, 1, 32>}, {pipeline_mode = #tpu.pipeline_mode<synchronous>, transform_indices = @transform_9, window_bounds = array<i64: 2, 1, 32>}, {pipeline_mode = #tpu.pipeline_mode<synchronous>, transform_indices = @transform_10, window_bounds = array<i64: 1, 32>}, {pipeline_mode = #tpu.pipeline_mode<synchronous>, transform_indices = @transform_11, window_bounds = array<i64: 1, 32>}, {transform_indices = @transform_12, window_bounds = array<i64: 1, 1, 32>}]} {
    %c0 = arith.constant 0 : index
    %c0_0 = arith.constant 0 : index
    %c0_1 = arith.constant 0 : index
    %0 = vector.load %arg3[%c0, %c0_0, %c0_1] : memref<1x1x16xf32, #tpu.memory_space<vmem>>, vector<1x1x16xf32>
    %c0_2 = arith.constant 0 : index
    %c0_3 = arith.constant 0 : index
    %c0_4 = arith.constant 0 : index
    %1 = vector.load %arg4[%c0_2, %c0_3, %c0_4] : memref<1x16x1xf32, #tpu.memory_space<vmem>>, vector<1x16x1xf32>
    %2 = vector.broadcast %0 : vector<1x1x16xf32> to vector<1x16x16xf32>
    %3 = vector.broadcast %1 : vector<1x16x1xf32> to vector<1x16x16xf32>
    %4 = arith.mulf %2, %3 : vector<1x16x16xf32>
    %c0_5 = arith.constant 0 : index
    %c0_6 = arith.constant 0 : index
    %c0_7 = arith.constant 0 : index
    %5 = vector.load %arg1[%c0_5, %c0_6, %c0_7] : memref<1x16x32xf32, #tpu.memory_space<vmem>>, vector<1x16x32xf32>
    %6 = vector.shape_cast %5 : vector<1x16x32xf32> to vector<16x32xf32>
    %7 = arith.truncf %6 : vector<16x32xf32> to vector<16x32xbf16>
    %c0_8 = arith.constant 0 : index
    %c0_9 = arith.constant 0 : index
    %c0_10 = arith.constant 0 : index
    %8 = vector.load %arg5[%c0_8, %c0_9, %c0_10] : memref<2x32x96xbf16, #tpu.memory_space<vmem>>, vector<1x32x96xbf16>
    %9 = vector.shape_cast %8 : vector<1x32x96xbf16> to vector<32x96xbf16>
    %cst = arith.constant dense<0.000000e+00> : vector<16x96xf32>
    %10 = tpu.matmul %7, %9, %cst {dimension_numbers = #tpu.dot_dimension_numbers<[1], [0], [0], [1], [0, 0, 1, 1], [], []>} : vector<16x32xbf16>, vector<32x96xbf16>, vector<16x96xf32> -> vector<16x96xf32>
    %c0_11 = arith.constant 0 : index
    %c0_12 = arith.constant 0 : index
    %c0_13 = arith.constant 0 : index
    %11 = vector.load %arg6[%c0_11, %c0_12, %c0_13] : memref<2x1x96xf32, #tpu.memory_space<vmem>>, vector<1x1x96xf32>
    %12 = vector.shape_cast %11 : vector<1x1x96xf32> to vector<1x96xf32>
    %13 = vector.broadcast %12 : vector<1x96xf32> to vector<16x96xf32>
    %14 = arith.addf %10, %13 : vector<16x96xf32>
    %15 = vector.extract_strided_slice %14 {offsets = [0, 0], sizes = [16, 32], strides = [1, 1]} : vector<16x96xf32> to vector<16x32xf32>
    %16 = vector.shape_cast %15 : vector<16x32xf32> to vector<1x16x32xf32>
    %17 = vector.extract_strided_slice %14 {offsets = [0, 32], sizes = [16, 32], strides = [1, 1]} : vector<16x96xf32> to vector<16x32xf32>
    %18 = vector.shape_cast %17 : vector<16x32xf32> to vector<1x16x32xf32>
    %19 = vector.extract_strided_slice %14 {offsets = [0, 64], sizes = [16, 32], strides = [1, 1]} : vector<16x96xf32> to vector<16x32xf32>
    %20 = vector.shape_cast %19 : vector<16x32xf32> to vector<1x16x32xf32>
    %21 = vector.extract_strided_slice %16 {offsets = [0, 0, 0], sizes = [1, 16, 8], strides = [1, 1, 1]} : vector<1x16x32xf32> to vector<1x16x8xf32>
    %22 = arith.truncf %21 : vector<1x16x8xf32> to vector<1x16x8xbf16>
    %23 = vector.extract_strided_slice %18 {offsets = [0, 0, 0], sizes = [1, 16, 8], strides = [1, 1, 1]} : vector<1x16x32xf32> to vector<1x16x8xf32>
    %24 = arith.truncf %23 : vector<1x16x8xf32> to vector<1x16x8xbf16>
    %25 = vector.extract_strided_slice %20 {offsets = [0, 0, 0], sizes = [1, 16, 8], strides = [1, 1, 1]} : vector<1x16x32xf32> to vector<1x16x8xf32>
    %26 = arith.truncf %25 : vector<1x16x8xf32> to vector<1x16x8xbf16>
    "tpu.trace_start"() <{level = 10 : i32, message = "bqd,bkd->bqk"}> : () -> ()
    %cst_14 = arith.constant dense<0.000000e+00> : vector<1x16x16xf32>
    %27 = tpu.matmul %22, %24, %cst_14 {dimension_numbers = #tpu.dot_dimension_numbers<[2], [2], [1], [1], [0, 0, 0, 1, 1, 1], [0], [0]>} : vector<1x16x8xbf16>, vector<1x16x8xbf16>, vector<1x16x16xf32> -> vector<1x16x16xf32>
    "tpu.trace_stop"() : () -> ()
    %cst_15 = arith.constant 0.353553385 : f32
    %28 = vector.broadcast %cst_15 : f32 to vector<1x16x16xf32>
    %29 = arith.mulf %27, %28 : vector<1x16x16xf32>
    %cst_16 = arith.constant 5.000000e-01 : f32
    %30 = vector.broadcast %cst_16 : f32 to vector<1x16x16xf32>
    %31 = arith.cmpf ogt, %4, %30 : vector<1x16x16xf32>
    %cst_17 = arith.constant -1.000000e+30 : f32
    %32 = vector.broadcast %cst_17 : f32 to vector<1x16x16xf32>
    %33 = arith.select %31, %29, %32 : vector<1x16x16xi1>, vector<1x16x16xf32>
    %cst_18 = arith.constant dense<0xFF800000> : vector<1x16xf32>
    %34 = vector.multi_reduction <maximumf>, %33, %cst_18 [2] : vector<1x16x16xf32> to vector<1x16xf32>
    %35 = vector.shape_cast %34 : vector<1x16xf32> to vector<1x16x1xf32>
    %cst_19 = arith.constant -5.000000e+29 : f32
    %36 = vector.broadcast %cst_19 : f32 to vector<1x16x1xf32>
    %37 = arith.cmpf ole, %35, %36 : vector<1x16x1xf32>
    %cst_20 = arith.constant 0.000000e+00 : f32
    %38 = vector.shape_cast %37 : vector<1x16x1xi1> to vector<1x16x1xi1>
    %39 = vector.broadcast %38 : vector<1x16x1xi1> to vector<1x16x16xi1>
    %40 = vector.broadcast %cst_20 : f32 to vector<1x16x16xf32>
    %41 = arith.select %39, %40, %33 : vector<1x16x16xi1>, vector<1x16x16xf32>
    %cst_21 = arith.constant 0.000000e+00 : f32
    %42 = vector.broadcast %cst_21 : f32 to vector<1x16x1xf32>
    %43 = arith.select %37, %42, %35 : vector<1x16x1xi1>, vector<1x16x1xf32>
    %44 = vector.broadcast %43 : vector<1x16x1xf32> to vector<1x16x16xf32>
    %45 = arith.subf %41, %44 : vector<1x16x16xf32>
    %46 = math.exp %45 : vector<1x16x16xf32>
    %cst_22 = arith.constant dense<0.000000e+00> : vector<1x16xf32>
    %47 = vector.multi_reduction <add>, %46, %cst_22 [2] : vector<1x16x16xf32> to vector<1x16xf32>
    %48 = vector.shape_cast %47 : vector<1x16xf32> to vector<1x16x1xf32>
    %49 = tpu.reciprocal %48 {approx = true} : vector<1x16x1xf32> -> vector<1x16x1xf32>
    %50 = vector.broadcast %49 : vector<1x16x1xf32> to vector<1x16x16xf32>
    %51 = arith.mulf %46, %50 : vector<1x16x16xf32>
    %c0_23 = arith.constant 0 : index
    %c0_24 = arith.constant 0 : index
    %c0_25 = arith.constant 0 : index
    %c0_26 = arith.constant 0 : index
    %52 = vector.load %arg2[%c0_23, %c0_24, %c0_25, %c0_26] : memref<8x1x16x16xf32, #tpu.memory_space<vmem>>, vector<1x1x16x16xf32>
    %53 = vector.shape_cast %52 : vector<1x1x16x16xf32> to vector<1x16x16xf32>
    %cst_27 = arith.constant 5.000000e-01 : f32
    %54 = vector.broadcast %cst_27 : f32 to vector<1x16x16xf32>
    %55 = arith.cmpf ogt, %4, %54 : vector<1x16x16xf32>
    %cst_28 = arith.constant -1.000000e+30 : f32
    %56 = vector.broadcast %cst_28 : f32 to vector<1x16x16xf32>
    %57 = arith.select %55, %53, %56 : vector<1x16x16xi1>, vector<1x16x16xf32>
    %cst_29 = arith.constant dense<0xFF800000> : vector<1x16xf32>
    %58 = vector.multi_reduction <maximumf>, %57, %cst_29 [2] : vector<1x16x16xf32> to vector<1x16xf32>
    %59 = vector.shape_cast %58 : vector<1x16xf32> to vector<1x16x1xf32>
    %cst_30 = arith.constant -5.000000e+29 : f32
    %60 = vector.broadcast %cst_30 : f32 to vector<1x16x1xf32>
    %61 = arith.cmpf ole, %59, %60 : vector<1x16x1xf32>
    %cst_31 = arith.constant 0.000000e+00 : f32
    %62 = vector.shape_cast %61 : vector<1x16x1xi1> to vector<1x16x1xi1>
    %63 = vector.broadcast %62 : vector<1x16x1xi1> to vector<1x16x16xi1>
    %64 = vector.broadcast %cst_31 : f32 to vector<1x16x16xf32>
    %65 = arith.select %63, %64, %57 : vector<1x16x16xi1>, vector<1x16x16xf32>
    %cst_32 = arith.constant 0.000000e+00 : f32
    %66 = vector.broadcast %cst_32 : f32 to vector<1x16x1xf32>
    %67 = arith.select %61, %66, %59 : vector<1x16x1xi1>, vector<1x16x1xf32>
    %68 = vector.broadcast %67 : vector<1x16x1xf32> to vector<1x16x16xf32>
    %69 = arith.subf %65, %68 : vector<1x16x16xf32>
    %70 = math.exp %69 : vector<1x16x16xf32>
    %cst_33 = arith.constant dense<0.000000e+00> : vector<1x16xf32>
    %71 = vector.multi_reduction <add>, %70, %cst_33 [2] : vector<1x16x16xf32> to vector<1x16xf32>
    %72 = vector.shape_cast %71 : vector<1x16xf32> to vector<1x16x1xf32>
    %73 = tpu.reciprocal %72 {approx = true} : vector<1x16x1xf32> -> vector<1x16x1xf32>
    %74 = vector.broadcast %73 : vector<1x16x1xf32> to vector<1x16x16xf32>
    %75 = arith.mulf %70, %74 : vector<1x16x16xf32>
    %76 = arith.addf %51, %75 : vector<1x16x16xf32>
    %cst_34 = arith.constant dense<0.000000e+00> : vector<1x16xf32>
    %77 = vector.multi_reduction <add>, %76, %cst_34 [2] : vector<1x16x16xf32> to vector<1x16xf32>
    %78 = vector.shape_cast %77 : vector<1x16xf32> to vector<1x16x1xf32>
    %79 = vector.broadcast %78 : vector<1x16x1xf32> to vector<1x16x16xf32>
    %80 = arith.divf %76, %79 : vector<1x16x16xf32>
    %81 = arith.truncf %80 : vector<1x16x16xf32> to vector<1x16x16xbf16>
    "tpu.trace_start"() <{level = 10 : i32, message = "bqk,bkd->bqd"}> : () -> ()
    %cst_35 = arith.constant dense<0.000000e+00> : vector<1x16x8xf32>
    %82 = tpu.matmul %81, %26, %cst_35 {dimension_numbers = #tpu.dot_dimension_numbers<[2], [1], [1], [2], [0, 0, 0, 1, 1, 2], [0], [0]>} : vector<1x16x16xbf16>, vector<1x16x8xbf16>, vector<1x16x8xf32> -> vector<1x16x8xf32>
    "tpu.trace_stop"() : () -> ()
    %83 = vector.extract_strided_slice %16 {offsets = [0, 0, 8], sizes = [1, 16, 8], strides = [1, 1, 1]} : vector<1x16x32xf32> to vector<1x16x8xf32>
    %84 = arith.truncf %83 : vector<1x16x8xf32> to vector<1x16x8xbf16>
    %85 = vector.extract_strided_slice %18 {offsets = [0, 0, 8], sizes = [1, 16, 8], strides = [1, 1, 1]} : vector<1x16x32xf32> to vector<1x16x8xf32>
    %86 = arith.truncf %85 : vector<1x16x8xf32> to vector<1x16x8xbf16>
    %87 = vector.extract_strided_slice %20 {offsets = [0, 0, 8], sizes = [1, 16, 8], strides = [1, 1, 1]} : vector<1x16x32xf32> to vector<1x16x8xf32>
    %88 = arith.truncf %87 : vector<1x16x8xf32> to vector<1x16x8xbf16>
    "tpu.trace_start"() <{level = 10 : i32, message = "bqd,bkd->bqk"}> : () -> ()
    %cst_36 = arith.constant dense<0.000000e+00> : vector<1x16x16xf32>
    %89 = tpu.matmul %84, %86, %cst_36 {dimension_numbers = #tpu.dot_dimension_numbers<[2], [2], [1], [1], [0, 0, 0, 1, 1, 1], [0], [0]>} : vector<1x16x8xbf16>, vector<1x16x8xbf16>, vector<1x16x16xf32> -> vector<1x16x16xf32>
    "tpu.trace_stop"() : () -> ()
    %cst_37 = arith.constant 0.353553385 : f32
    %90 = vector.broadcast %cst_37 : f32 to vector<1x16x16xf32>
    %91 = arith.mulf %89, %90 : vector<1x16x16xf32>
    %cst_38 = arith.constant 5.000000e-01 : f32
    %92 = vector.broadcast %cst_38 : f32 to vector<1x16x16xf32>
    %93 = arith.cmpf ogt, %4, %92 : vector<1x16x16xf32>
    %cst_39 = arith.constant -1.000000e+30 : f32
    %94 = vector.broadcast %cst_39 : f32 to vector<1x16x16xf32>
    %95 = arith.select %93, %91, %94 : vector<1x16x16xi1>, vector<1x16x16xf32>
    %cst_40 = arith.constant dense<0xFF800000> : vector<1x16xf32>
    %96 = vector.multi_reduction <maximumf>, %95, %cst_40 [2] : vector<1x16x16xf32> to vector<1x16xf32>
    %97 = vector.shape_cast %96 : vector<1x16xf32> to vector<1x16x1xf32>
    %cst_41 = arith.constant -5.000000e+29 : f32
    %98 = vector.broadcast %cst_41 : f32 to vector<1x16x1xf32>
    %99 = arith.cmpf ole, %97, %98 : vector<1x16x1xf32>
    %cst_42 = arith.constant 0.000000e+00 : f32
    %100 = vector.shape_cast %99 : vector<1x16x1xi1> to vector<1x16x1xi1>
    %101 = vector.broadcast %100 : vector<1x16x1xi1> to vector<1x16x16xi1>
    %102 = vector.broadcast %cst_42 : f32 to vector<1x16x16xf32>
    %103 = arith.select %101, %102, %95 : vector<1x16x16xi1>, vector<1x16x16xf32>
    %cst_43 = arith.constant 0.000000e+00 : f32
    %104 = vector.broadcast %cst_43 : f32 to vector<1x16x1xf32>
    %105 = arith.select %99, %104, %97 : vector<1x16x1xi1>, vector<1x16x1xf32>
    %106 = vector.broadcast %105 : vector<1x16x1xf32> to vector<1x16x16xf32>
    %107 = arith.subf %103, %106 : vector<1x16x16xf32>
    %108 = math.exp %107 : vector<1x16x16xf32>
    %cst_44 = arith.constant dense<0.000000e+00> : vector<1x16xf32>
    %109 = vector.multi_reduction <add>, %108, %cst_44 [2] : vector<1x16x16xf32> to vector<1x16xf32>
    %110 = vector.shape_cast %109 : vector<1x16xf32> to vector<1x16x1xf32>
    %111 = tpu.reciprocal %110 {approx = true} : vector<1x16x1xf32> -> vector<1x16x1xf32>
    %112 = vector.broadcast %111 : vector<1x16x1xf32> to vector<1x16x16xf32>
    %113 = arith.mulf %108, %112 : vector<1x16x16xf32>
    %c1 = arith.constant 1 : index
    %c0_45 = arith.constant 0 : index
    %c0_46 = arith.constant 0 : index
    %c0_47 = arith.constant 0 : index
    %114 = vector.load %arg2[%c1, %c0_45, %c0_46, %c0_47] : memref<8x1x16x16xf32, #tpu.memory_space<vmem>>, vector<1x1x16x16xf32>
    %115 = vector.shape_cast %114 : vector<1x1x16x16xf32> to vector<1x16x16xf32>
    %cst_48 = arith.constant 5.000000e-01 : f32
    %116 = vector.broadcast %cst_48 : f32 to vector<1x16x16xf32>
    %117 = arith.cmpf ogt, %4, %116 : vector<1x16x16xf32>
    %cst_49 = arith.constant -1.000000e+30 : f32
    %118 = vector.broadcast %cst_49 : f32 to vector<1x16x16xf32>
    %119 = arith.select %117, %115, %118 : vector<1x16x16xi1>, vector<1x16x16xf32>
    %cst_50 = arith.constant dense<0xFF800000> : vector<1x16xf32>
    %120 = vector.multi_reduction <maximumf>, %119, %cst_50 [2] : vector<1x16x16xf32> to vector<1x16xf32>
    %121 = vector.shape_cast %120 : vector<1x16xf32> to vector<1x16x1xf32>
    %cst_51 = arith.constant -5.000000e+29 : f32
    %122 = vector.broadcast %cst_51 : f32 to vector<1x16x1xf32>
    %123 = arith.cmpf ole, %121, %122 : vector<1x16x1xf32>
    %cst_52 = arith.constant 0.000000e+00 : f32
    %124 = vector.shape_cast %123 : vector<1x16x1xi1> to vector<1x16x1xi1>
    %125 = vector.broadcast %124 : vector<1x16x1xi1> to vector<1x16x16xi1>
    %126 = vector.broadcast %cst_52 : f32 to vector<1x16x16xf32>
    %127 = arith.select %125, %126, %119 : vector<1x16x16xi1>, vector<1x16x16xf32>
    %cst_53 = arith.constant 0.000000e+00 : f32
    %128 = vector.broadcast %cst_53 : f32 to vector<1x16x1xf32>
    %129 = arith.select %123, %128, %121 : vector<1x16x1xi1>, vector<1x16x1xf32>
    %130 = vector.broadcast %129 : vector<1x16x1xf32> to vector<1x16x16xf32>
    %131 = arith.subf %127, %130 : vector<1x16x16xf32>
    %132 = math.exp %131 : vector<1x16x16xf32>
    %cst_54 = arith.constant dense<0.000000e+00> : vector<1x16xf32>
    %133 = vector.multi_reduction <add>, %132, %cst_54 [2] : vector<1x16x16xf32> to vector<1x16xf32>
    %134 = vector.shape_cast %133 : vector<1x16xf32> to vector<1x16x1xf32>
    %135 = tpu.reciprocal %134 {approx = true} : vector<1x16x1xf32> -> vector<1x16x1xf32>
    %136 = vector.broadcast %135 : vector<1x16x1xf32> to vector<1x16x16xf32>
    %137 = arith.mulf %132, %136 : vector<1x16x16xf32>
    %138 = arith.addf %113, %137 : vector<1x16x16xf32>
    %cst_55 = arith.constant dense<0.000000e+00> : vector<1x16xf32>
    %139 = vector.multi_reduction <add>, %138, %cst_55 [2] : vector<1x16x16xf32> to vector<1x16xf32>
    %140 = vector.shape_cast %139 : vector<1x16xf32> to vector<1x16x1xf32>
    %141 = vector.broadcast %140 : vector<1x16x1xf32> to vector<1x16x16xf32>
    %142 = arith.divf %138, %141 : vector<1x16x16xf32>
    %143 = arith.truncf %142 : vector<1x16x16xf32> to vector<1x16x16xbf16>
    "tpu.trace_start"() <{level = 10 : i32, message = "bqk,bkd->bqd"}> : () -> ()
    %cst_56 = arith.constant dense<0.000000e+00> : vector<1x16x8xf32>
    %144 = tpu.matmul %143, %88, %cst_56 {dimension_numbers = #tpu.dot_dimension_numbers<[2], [1], [1], [2], [0, 0, 0, 1, 1, 2], [0], [0]>} : vector<1x16x16xbf16>, vector<1x16x8xbf16>, vector<1x16x8xf32> -> vector<1x16x8xf32>
    "tpu.trace_stop"() : () -> ()
    %145 = vector.extract_strided_slice %16 {offsets = [0, 0, 16], sizes = [1, 16, 8], strides = [1, 1, 1]} : vector<1x16x32xf32> to vector<1x16x8xf32>
    %146 = arith.truncf %145 : vector<1x16x8xf32> to vector<1x16x8xbf16>
    %147 = vector.extract_strided_slice %18 {offsets = [0, 0, 16], sizes = [1, 16, 8], strides = [1, 1, 1]} : vector<1x16x32xf32> to vector<1x16x8xf32>
    %148 = arith.truncf %147 : vector<1x16x8xf32> to vector<1x16x8xbf16>
    %149 = vector.extract_strided_slice %20 {offsets = [0, 0, 16], sizes = [1, 16, 8], strides = [1, 1, 1]} : vector<1x16x32xf32> to vector<1x16x8xf32>
    %150 = arith.truncf %149 : vector<1x16x8xf32> to vector<1x16x8xbf16>
    "tpu.trace_start"() <{level = 10 : i32, message = "bqd,bkd->bqk"}> : () -> ()
    %cst_57 = arith.constant dense<0.000000e+00> : vector<1x16x16xf32>
    %151 = tpu.matmul %146, %148, %cst_57 {dimension_numbers = #tpu.dot_dimension_numbers<[2], [2], [1], [1], [0, 0, 0, 1, 1, 1], [0], [0]>} : vector<1x16x8xbf16>, vector<1x16x8xbf16>, vector<1x16x16xf32> -> vector<1x16x16xf32>
    "tpu.trace_stop"() : () -> ()
    %cst_58 = arith.constant 0.353553385 : f32
    %152 = vector.broadcast %cst_58 : f32 to vector<1x16x16xf32>
    %153 = arith.mulf %151, %152 : vector<1x16x16xf32>
    %cst_59 = arith.constant 5.000000e-01 : f32
    %154 = vector.broadcast %cst_59 : f32 to vector<1x16x16xf32>
    %155 = arith.cmpf ogt, %4, %154 : vector<1x16x16xf32>
    %cst_60 = arith.constant -1.000000e+30 : f32
    %156 = vector.broadcast %cst_60 : f32 to vector<1x16x16xf32>
    %157 = arith.select %155, %153, %156 : vector<1x16x16xi1>, vector<1x16x16xf32>
    %cst_61 = arith.constant dense<0xFF800000> : vector<1x16xf32>
    %158 = vector.multi_reduction <maximumf>, %157, %cst_61 [2] : vector<1x16x16xf32> to vector<1x16xf32>
    %159 = vector.shape_cast %158 : vector<1x16xf32> to vector<1x16x1xf32>
    %cst_62 = arith.constant -5.000000e+29 : f32
    %160 = vector.broadcast %cst_62 : f32 to vector<1x16x1xf32>
    %161 = arith.cmpf ole, %159, %160 : vector<1x16x1xf32>
    %cst_63 = arith.constant 0.000000e+00 : f32
    %162 = vector.shape_cast %161 : vector<1x16x1xi1> to vector<1x16x1xi1>
    %163 = vector.broadcast %162 : vector<1x16x1xi1> to vector<1x16x16xi1>
    %164 = vector.broadcast %cst_63 : f32 to vector<1x16x16xf32>
    %165 = arith.select %163, %164, %157 : vector<1x16x16xi1>, vector<1x16x16xf32>
    %cst_64 = arith.constant 0.000000e+00 : f32
    %166 = vector.broadcast %cst_64 : f32 to vector<1x16x1xf32>
    %167 = arith.select %161, %166, %159 : vector<1x16x1xi1>, vector<1x16x1xf32>
    %168 = vector.broadcast %167 : vector<1x16x1xf32> to vector<1x16x16xf32>
    %169 = arith.subf %165, %168 : vector<1x16x16xf32>
    %170 = math.exp %169 : vector<1x16x16xf32>
    %cst_65 = arith.constant dense<0.000000e+00> : vector<1x16xf32>
    %171 = vector.multi_reduction <add>, %170, %cst_65 [2] : vector<1x16x16xf32> to vector<1x16xf32>
    %172 = vector.shape_cast %171 : vector<1x16xf32> to vector<1x16x1xf32>
    %173 = tpu.reciprocal %172 {approx = true} : vector<1x16x1xf32> -> vector<1x16x1xf32>
    %174 = vector.broadcast %173 : vector<1x16x1xf32> to vector<1x16x16xf32>
    %175 = arith.mulf %170, %174 : vector<1x16x16xf32>
    %c2 = arith.constant 2 : index
    %c0_66 = arith.constant 0 : index
    %c0_67 = arith.constant 0 : index
    %c0_68 = arith.constant 0 : index
    %176 = vector.load %arg2[%c2, %c0_66, %c0_67, %c0_68] : memref<8x1x16x16xf32, #tpu.memory_space<vmem>>, vector<1x1x16x16xf32>
    %177 = vector.shape_cast %176 : vector<1x1x16x16xf32> to vector<1x16x16xf32>
    %cst_69 = arith.constant 5.000000e-01 : f32
    %178 = vector.broadcast %cst_69 : f32 to vector<1x16x16xf32>
    %179 = arith.cmpf ogt, %4, %178 : vector<1x16x16xf32>
    %cst_70 = arith.constant -1.000000e+30 : f32
    %180 = vector.broadcast %cst_70 : f32 to vector<1x16x16xf32>
    %181 = arith.select %179, %177, %180 : vector<1x16x16xi1>, vector<1x16x16xf32>
    %cst_71 = arith.constant dense<0xFF800000> : vector<1x16xf32>
    %182 = vector.multi_reduction <maximumf>, %181, %cst_71 [2] : vector<1x16x16xf32> to vector<1x16xf32>
    %183 = vector.shape_cast %182 : vector<1x16xf32> to vector<1x16x1xf32>
    %cst_72 = arith.constant -5.000000e+29 : f32
    %184 = vector.broadcast %cst_72 : f32 to vector<1x16x1xf32>
    %185 = arith.cmpf ole, %183, %184 : vector<1x16x1xf32>
    %cst_73 = arith.constant 0.000000e+00 : f32
    %186 = vector.shape_cast %185 : vector<1x16x1xi1> to vector<1x16x1xi1>
    %187 = vector.broadcast %186 : vector<1x16x1xi1> to vector<1x16x16xi1>
    %188 = vector.broadcast %cst_73 : f32 to vector<1x16x16xf32>
    %189 = arith.select %187, %188, %181 : vector<1x16x16xi1>, vector<1x16x16xf32>
    %cst_74 = arith.constant 0.000000e+00 : f32
    %190 = vector.broadcast %cst_74 : f32 to vector<1x16x1xf32>
    %191 = arith.select %185, %190, %183 : vector<1x16x1xi1>, vector<1x16x1xf32>
    %192 = vector.broadcast %191 : vector<1x16x1xf32> to vector<1x16x16xf32>
    %193 = arith.subf %189, %192 : vector<1x16x16xf32>
    %194 = math.exp %193 : vector<1x16x16xf32>
    %cst_75 = arith.constant dense<0.000000e+00> : vector<1x16xf32>
    %195 = vector.multi_reduction <add>, %194, %cst_75 [2] : vector<1x16x16xf32> to vector<1x16xf32>
    %196 = vector.shape_cast %195 : vector<1x16xf32> to vector<1x16x1xf32>
    %197 = tpu.reciprocal %196 {approx = true} : vector<1x16x1xf32> -> vector<1x16x1xf32>
    %198 = vector.broadcast %197 : vector<1x16x1xf32> to vector<1x16x16xf32>
    %199 = arith.mulf %194, %198 : vector<1x16x16xf32>
    %200 = arith.addf %175, %199 : vector<1x16x16xf32>
    %cst_76 = arith.constant dense<0.000000e+00> : vector<1x16xf32>
    %201 = vector.multi_reduction <add>, %200, %cst_76 [2] : vector<1x16x16xf32> to vector<1x16xf32>
    %202 = vector.shape_cast %201 : vector<1x16xf32> to vector<1x16x1xf32>
    %203 = vector.broadcast %202 : vector<1x16x1xf32> to vector<1x16x16xf32>
    %204 = arith.divf %200, %203 : vector<1x16x16xf32>
    %205 = arith.truncf %204 : vector<1x16x16xf32> to vector<1x16x16xbf16>
    "tpu.trace_start"() <{level = 10 : i32, message = "bqk,bkd->bqd"}> : () -> ()
    %cst_77 = arith.constant dense<0.000000e+00> : vector<1x16x8xf32>
    %206 = tpu.matmul %205, %150, %cst_77 {dimension_numbers = #tpu.dot_dimension_numbers<[2], [1], [1], [2], [0, 0, 0, 1, 1, 2], [0], [0]>} : vector<1x16x16xbf16>, vector<1x16x8xbf16>, vector<1x16x8xf32> -> vector<1x16x8xf32>
    "tpu.trace_stop"() : () -> ()
    %207 = vector.extract_strided_slice %16 {offsets = [0, 0, 24], sizes = [1, 16, 8], strides = [1, 1, 1]} : vector<1x16x32xf32> to vector<1x16x8xf32>
    %208 = arith.truncf %207 : vector<1x16x8xf32> to vector<1x16x8xbf16>
    %209 = vector.extract_strided_slice %18 {offsets = [0, 0, 24], sizes = [1, 16, 8], strides = [1, 1, 1]} : vector<1x16x32xf32> to vector<1x16x8xf32>
    %210 = arith.truncf %209 : vector<1x16x8xf32> to vector<1x16x8xbf16>
    %211 = vector.extract_strided_slice %20 {offsets = [0, 0, 24], sizes = [1, 16, 8], strides = [1, 1, 1]} : vector<1x16x32xf32> to vector<1x16x8xf32>
    %212 = arith.truncf %211 : vector<1x16x8xf32> to vector<1x16x8xbf16>
    "tpu.trace_start"() <{level = 10 : i32, message = "bqd,bkd->bqk"}> : () -> ()
    %cst_78 = arith.constant dense<0.000000e+00> : vector<1x16x16xf32>
    %213 = tpu.matmul %208, %210, %cst_78 {dimension_numbers = #tpu.dot_dimension_numbers<[2], [2], [1], [1], [0, 0, 0, 1, 1, 1], [0], [0]>} : vector<1x16x8xbf16>, vector<1x16x8xbf16>, vector<1x16x16xf32> -> vector<1x16x16xf32>
    "tpu.trace_stop"() : () -> ()
    %cst_79 = arith.constant 0.353553385 : f32
    %214 = vector.broadcast %cst_79 : f32 to vector<1x16x16xf32>
    %215 = arith.mulf %213, %214 : vector<1x16x16xf32>
    %cst_80 = arith.constant 5.000000e-01 : f32
    %216 = vector.broadcast %cst_80 : f32 to vector<1x16x16xf32>
    %217 = arith.cmpf ogt, %4, %216 : vector<1x16x16xf32>
    %cst_81 = arith.constant -1.000000e+30 : f32
    %218 = vector.broadcast %cst_81 : f32 to vector<1x16x16xf32>
    %219 = arith.select %217, %215, %218 : vector<1x16x16xi1>, vector<1x16x16xf32>
    %cst_82 = arith.constant dense<0xFF800000> : vector<1x16xf32>
    %220 = vector.multi_reduction <maximumf>, %219, %cst_82 [2] : vector<1x16x16xf32> to vector<1x16xf32>
    %221 = vector.shape_cast %220 : vector<1x16xf32> to vector<1x16x1xf32>
    %cst_83 = arith.constant -5.000000e+29 : f32
    %222 = vector.broadcast %cst_83 : f32 to vector<1x16x1xf32>
    %223 = arith.cmpf ole, %221, %222 : vector<1x16x1xf32>
    %cst_84 = arith.constant 0.000000e+00 : f32
    %224 = vector.shape_cast %223 : vector<1x16x1xi1> to vector<1x16x1xi1>
    %225 = vector.broadcast %224 : vector<1x16x1xi1> to vector<1x16x16xi1>
    %226 = vector.broadcast %cst_84 : f32 to vector<1x16x16xf32>
    %227 = arith.select %225, %226, %219 : vector<1x16x16xi1>, vector<1x16x16xf32>
    %cst_85 = arith.constant 0.000000e+00 : f32
    %228 = vector.broadcast %cst_85 : f32 to vector<1x16x1xf32>
    %229 = arith.select %223, %228, %221 : vector<1x16x1xi1>, vector<1x16x1xf32>
    %230 = vector.broadcast %229 : vector<1x16x1xf32> to vector<1x16x16xf32>
    %231 = arith.subf %227, %230 : vector<1x16x16xf32>
    %232 = math.exp %231 : vector<1x16x16xf32>
    %cst_86 = arith.constant dense<0.000000e+00> : vector<1x16xf32>
    %233 = vector.multi_reduction <add>, %232, %cst_86 [2] : vector<1x16x16xf32> to vector<1x16xf32>
    %234 = vector.shape_cast %233 : vector<1x16xf32> to vector<1x16x1xf32>
    %235 = tpu.reciprocal %234 {approx = true} : vector<1x16x1xf32> -> vector<1x16x1xf32>
    %236 = vector.broadcast %235 : vector<1x16x1xf32> to vector<1x16x16xf32>
    %237 = arith.mulf %232, %236 : vector<1x16x16xf32>
    %c3 = arith.constant 3 : index
    %c0_87 = arith.constant 0 : index
    %c0_88 = arith.constant 0 : index
    %c0_89 = arith.constant 0 : index
    %238 = vector.load %arg2[%c3, %c0_87, %c0_88, %c0_89] : memref<8x1x16x16xf32, #tpu.memory_space<vmem>>, vector<1x1x16x16xf32>
    %239 = vector.shape_cast %238 : vector<1x1x16x16xf32> to vector<1x16x16xf32>
    %cst_90 = arith.constant 5.000000e-01 : f32
    %240 = vector.broadcast %cst_90 : f32 to vector<1x16x16xf32>
    %241 = arith.cmpf ogt, %4, %240 : vector<1x16x16xf32>
    %cst_91 = arith.constant -1.000000e+30 : f32
    %242 = vector.broadcast %cst_91 : f32 to vector<1x16x16xf32>
    %243 = arith.select %241, %239, %242 : vector<1x16x16xi1>, vector<1x16x16xf32>
    %cst_92 = arith.constant dense<0xFF800000> : vector<1x16xf32>
    %244 = vector.multi_reduction <maximumf>, %243, %cst_92 [2] : vector<1x16x16xf32> to vector<1x16xf32>
    %245 = vector.shape_cast %244 : vector<1x16xf32> to vector<1x16x1xf32>
    %cst_93 = arith.constant -5.000000e+29 : f32
    %246 = vector.broadcast %cst_93 : f32 to vector<1x16x1xf32>
    %247 = arith.cmpf ole, %245, %246 : vector<1x16x1xf32>
    %cst_94 = arith.constant 0.000000e+00 : f32
    %248 = vector.shape_cast %247 : vector<1x16x1xi1> to vector<1x16x1xi1>
    %249 = vector.broadcast %248 : vector<1x16x1xi1> to vector<1x16x16xi1>
    %250 = vector.broadcast %cst_94 : f32 to vector<1x16x16xf32>
    %251 = arith.select %249, %250, %243 : vector<1x16x16xi1>, vector<1x16x16xf32>
    %cst_95 = arith.constant 0.000000e+00 : f32
    %252 = vector.broadcast %cst_95 : f32 to vector<1x16x1xf32>
    %253 = arith.select %247, %252, %245 : vector<1x16x1xi1>, vector<1x16x1xf32>
    %254 = vector.broadcast %253 : vector<1x16x1xf32> to vector<1x16x16xf32>
    %255 = arith.subf %251, %254 : vector<1x16x16xf32>
    %256 = math.exp %255 : vector<1x16x16xf32>
    %cst_96 = arith.constant dense<0.000000e+00> : vector<1x16xf32>
    %257 = vector.multi_reduction <add>, %256, %cst_96 [2] : vector<1x16x16xf32> to vector<1x16xf32>
    %258 = vector.shape_cast %257 : vector<1x16xf32> to vector<1x16x1xf32>
    %259 = tpu.reciprocal %258 {approx = true} : vector<1x16x1xf32> -> vector<1x16x1xf32>
    %260 = vector.broadcast %259 : vector<1x16x1xf32> to vector<1x16x16xf32>
    %261 = arith.mulf %256, %260 : vector<1x16x16xf32>
    %262 = arith.addf %237, %261 : vector<1x16x16xf32>
    %cst_97 = arith.constant dense<0.000000e+00> : vector<1x16xf32>
    %263 = vector.multi_reduction <add>, %262, %cst_97 [2] : vector<1x16x16xf32> to vector<1x16xf32>
    %264 = vector.shape_cast %263 : vector<1x16xf32> to vector<1x16x1xf32>
    %265 = vector.broadcast %264 : vector<1x16x1xf32> to vector<1x16x16xf32>
    %266 = arith.divf %262, %265 : vector<1x16x16xf32>
    %267 = arith.truncf %266 : vector<1x16x16xf32> to vector<1x16x16xbf16>
    "tpu.trace_start"() <{level = 10 : i32, message = "bqk,bkd->bqd"}> : () -> ()
    %cst_98 = arith.constant dense<0.000000e+00> : vector<1x16x8xf32>
    %268 = tpu.matmul %267, %212, %cst_98 {dimension_numbers = #tpu.dot_dimension_numbers<[2], [1], [1], [2], [0, 0, 0, 1, 1, 2], [0], [0]>} : vector<1x16x16xbf16>, vector<1x16x8xbf16>, vector<1x16x8xf32> -> vector<1x16x8xf32>
    "tpu.trace_stop"() : () -> ()
    %269 = tpu.concatenate %82, %144, %206, %268 in 2 : vector<1x16x8xf32>, vector<1x16x8xf32>, vector<1x16x8xf32>, vector<1x16x8xf32> -> vector<1x16x32xf32>
    %270 = vector.shape_cast %269 : vector<1x16x32xf32> to vector<16x32xf32>
    %271 = arith.truncf %270 : vector<16x32xf32> to vector<16x32xbf16>
    %c0_99 = arith.constant 0 : index
    %c0_100 = arith.constant 0 : index
    %c0_101 = arith.constant 0 : index
    %272 = vector.load %arg7[%c0_99, %c0_100, %c0_101] : memref<2x32x32xbf16, #tpu.memory_space<vmem>>, vector<1x32x32xbf16>
    %273 = vector.shape_cast %272 : vector<1x32x32xbf16> to vector<32x32xbf16>
    %cst_102 = arith.constant dense<0.000000e+00> : vector<16x32xf32>
    %274 = tpu.matmul %271, %273, %cst_102 {dimension_numbers = #tpu.dot_dimension_numbers<[1], [0], [0], [1], [0, 0, 1, 1], [], []>} : vector<16x32xbf16>, vector<32x32xbf16>, vector<16x32xf32> -> vector<16x32xf32>
    %c0_103 = arith.constant 0 : index
    %c0_104 = arith.constant 0 : index
    %c0_105 = arith.constant 0 : index
    %275 = vector.load %arg8[%c0_103, %c0_104, %c0_105] : memref<2x1x32xf32, #tpu.memory_space<vmem>>, vector<1x1x32xf32>
    %276 = vector.shape_cast %275 : vector<1x1x32xf32> to vector<1x32xf32>
    %277 = vector.broadcast %276 : vector<1x32xf32> to vector<16x32xf32>
    %278 = arith.addf %274, %277 : vector<16x32xf32>
    %279 = vector.shape_cast %278 : vector<16x32xf32> to vector<1x16x32xf32>
    %280 = arith.addf %5, %279 : vector<1x16x32xf32>
    %c0_106 = arith.constant 0 : index
    %c0_107 = arith.constant 0 : index
    %c0_108 = arith.constant 0 : index
    %281 = vector.load %arg9[%c0_106, %c0_107, %c0_108] : memref<2x1x32xf32, #tpu.memory_space<vmem>>, vector<1x1x32xf32>
    %282 = vector.shape_cast %281 : vector<1x1x32xf32> to vector<1x32xf32>
    %c0_109 = arith.constant 0 : index
    %c0_110 = arith.constant 0 : index
    %c0_111 = arith.constant 0 : index
    %283 = vector.load %arg10[%c0_109, %c0_110, %c0_111] : memref<2x1x32xf32, #tpu.memory_space<vmem>>, vector<1x1x32xf32>
    %284 = vector.shape_cast %283 : vector<1x1x32xf32> to vector<1x32xf32>
    %cst_112 = arith.constant dense<0.000000e+00> : vector<1x16xf32>
    %285 = vector.multi_reduction <add>, %280, %cst_112 [2] : vector<1x16x32xf32> to vector<1x16xf32>
    %286 = vector.shape_cast %285 : vector<1x16xf32> to vector<1x16x1xf32>
    %cst_113 = arith.constant 3.200000e+01 : f32
    %287 = vector.broadcast %cst_113 : f32 to vector<1x16x1xf32>
    %288 = arith.divf %286, %287 : vector<1x16x1xf32>
    %289 = vector.broadcast %288 : vector<1x16x1xf32> to vector<1x16x32xf32>
    %290 = arith.subf %280, %289 : vector<1x16x32xf32>
    %291 = arith.mulf %290, %290 : vector<1x16x32xf32>
    %cst_114 = arith.constant dense<0.000000e+00> : vector<1x16xf32>
    %292 = vector.multi_reduction <add>, %291, %cst_114 [2] : vector<1x16x32xf32> to vector<1x16xf32>
    %293 = vector.shape_cast %292 : vector<1x16xf32> to vector<1x16x1xf32>
    %cst_115 = arith.constant 3.200000e+01 : f32
    %294 = vector.broadcast %cst_115 : f32 to vector<1x16x1xf32>
    %295 = arith.divf %293, %294 : vector<1x16x1xf32>
    %cst_116 = arith.constant 9.99999974E-6 : f32
    %296 = vector.broadcast %cst_116 : f32 to vector<1x16x1xf32>
    %297 = arith.addf %295, %296 : vector<1x16x1xf32>
    %298 = math.rsqrt %297 : vector<1x16x1xf32>
    %299 = vector.broadcast %298 : vector<1x16x1xf32> to vector<1x16x32xf32>
    %300 = arith.mulf %290, %299 : vector<1x16x32xf32>
    %301 = vector.shape_cast %282 : vector<1x32xf32> to vector<1x1x32xf32>
    %302 = vector.broadcast %301 : vector<1x1x32xf32> to vector<1x16x32xf32>
    %303 = arith.mulf %300, %302 : vector<1x16x32xf32>
    %304 = vector.shape_cast %284 : vector<1x32xf32> to vector<1x1x32xf32>
    %305 = vector.broadcast %304 : vector<1x1x32xf32> to vector<1x16x32xf32>
    %306 = arith.addf %303, %305 : vector<1x16x32xf32>
    %307 = vector.shape_cast %306 : vector<1x16x32xf32> to vector<16x32xf32>
    %308 = arith.truncf %307 : vector<16x32xf32> to vector<16x32xbf16>
    %c1_117 = arith.constant 1 : index
    %c0_118 = arith.constant 0 : index
    %c0_119 = arith.constant 0 : index
    %309 = vector.load %arg5[%c1_117, %c0_118, %c0_119] : memref<2x32x96xbf16, #tpu.memory_space<vmem>>, vector<1x32x96xbf16>
    %310 = vector.shape_cast %309 : vector<1x32x96xbf16> to vector<32x96xbf16>
    %cst_120 = arith.constant dense<0.000000e+00> : vector<16x96xf32>
    %311 = tpu.matmul %308, %310, %cst_120 {dimension_numbers = #tpu.dot_dimension_numbers<[1], [0], [0], [1], [0, 0, 1, 1], [], []>} : vector<16x32xbf16>, vector<32x96xbf16>, vector<16x96xf32> -> vector<16x96xf32>
    %c1_121 = arith.constant 1 : index
    %c0_122 = arith.constant 0 : index
    %c0_123 = arith.constant 0 : index
    %312 = vector.load %arg6[%c1_121, %c0_122, %c0_123] : memref<2x1x96xf32, #tpu.memory_space<vmem>>, vector<1x1x96xf32>
    %313 = vector.shape_cast %312 : vector<1x1x96xf32> to vector<1x96xf32>
    %314 = vector.broadcast %313 : vector<1x96xf32> to vector<16x96xf32>
    %315 = arith.addf %311, %314 : vector<16x96xf32>
    %316 = vector.extract_strided_slice %315 {offsets = [0, 0], sizes = [16, 32], strides = [1, 1]} : vector<16x96xf32> to vector<16x32xf32>
    %317 = vector.shape_cast %316 : vector<16x32xf32> to vector<1x16x32xf32>
    %318 = vector.extract_strided_slice %315 {offsets = [0, 32], sizes = [16, 32], strides = [1, 1]} : vector<16x96xf32> to vector<16x32xf32>
    %319 = vector.shape_cast %318 : vector<16x32xf32> to vector<1x16x32xf32>
    %320 = vector.extract_strided_slice %315 {offsets = [0, 64], sizes = [16, 32], strides = [1, 1]} : vector<16x96xf32> to vector<16x32xf32>
    %321 = vector.shape_cast %320 : vector<16x32xf32> to vector<1x16x32xf32>
    %322 = vector.extract_strided_slice %317 {offsets = [0, 0, 0], sizes = [1, 16, 8], strides = [1, 1, 1]} : vector<1x16x32xf32> to vector<1x16x8xf32>
    %323 = arith.truncf %322 : vector<1x16x8xf32> to vector<1x16x8xbf16>
    %324 = vector.extract_strided_slice %319 {offsets = [0, 0, 0], sizes = [1, 16, 8], strides = [1, 1, 1]} : vector<1x16x32xf32> to vector<1x16x8xf32>
    %325 = arith.truncf %324 : vector<1x16x8xf32> to vector<1x16x8xbf16>
    %326 = vector.extract_strided_slice %321 {offsets = [0, 0, 0], sizes = [1, 16, 8], strides = [1, 1, 1]} : vector<1x16x32xf32> to vector<1x16x8xf32>
    %327 = arith.truncf %326 : vector<1x16x8xf32> to vector<1x16x8xbf16>
    "tpu.trace_start"() <{level = 10 : i32, message = "bqd,bkd->bqk"}> : () -> ()
    %cst_124 = arith.constant dense<0.000000e+00> : vector<1x16x16xf32>
    %328 = tpu.matmul %323, %325, %cst_124 {dimension_numbers = #tpu.dot_dimension_numbers<[2], [2], [1], [1], [0, 0, 0, 1, 1, 1], [0], [0]>} : vector<1x16x8xbf16>, vector<1x16x8xbf16>, vector<1x16x16xf32> -> vector<1x16x16xf32>
    "tpu.trace_stop"() : () -> ()
    %cst_125 = arith.constant 0.353553385 : f32
    %329 = vector.broadcast %cst_125 : f32 to vector<1x16x16xf32>
    %330 = arith.mulf %328, %329 : vector<1x16x16xf32>
    %cst_126 = arith.constant 5.000000e-01 : f32
    %331 = vector.broadcast %cst_126 : f32 to vector<1x16x16xf32>
    %332 = arith.cmpf ogt, %4, %331 : vector<1x16x16xf32>
    %cst_127 = arith.constant -1.000000e+30 : f32
    %333 = vector.broadcast %cst_127 : f32 to vector<1x16x16xf32>
    %334 = arith.select %332, %330, %333 : vector<1x16x16xi1>, vector<1x16x16xf32>
    %cst_128 = arith.constant dense<0xFF800000> : vector<1x16xf32>
    %335 = vector.multi_reduction <maximumf>, %334, %cst_128 [2] : vector<1x16x16xf32> to vector<1x16xf32>
    %336 = vector.shape_cast %335 : vector<1x16xf32> to vector<1x16x1xf32>
    %cst_129 = arith.constant -5.000000e+29 : f32
    %337 = vector.broadcast %cst_129 : f32 to vector<1x16x1xf32>
    %338 = arith.cmpf ole, %336, %337 : vector<1x16x1xf32>
    %cst_130 = arith.constant 0.000000e+00 : f32
    %339 = vector.shape_cast %338 : vector<1x16x1xi1> to vector<1x16x1xi1>
    %340 = vector.broadcast %339 : vector<1x16x1xi1> to vector<1x16x16xi1>
    %341 = vector.broadcast %cst_130 : f32 to vector<1x16x16xf32>
    %342 = arith.select %340, %341, %334 : vector<1x16x16xi1>, vector<1x16x16xf32>
    %cst_131 = arith.constant 0.000000e+00 : f32
    %343 = vector.broadcast %cst_131 : f32 to vector<1x16x1xf32>
    %344 = arith.select %338, %343, %336 : vector<1x16x1xi1>, vector<1x16x1xf32>
    %345 = vector.broadcast %344 : vector<1x16x1xf32> to vector<1x16x16xf32>
    %346 = arith.subf %342, %345 : vector<1x16x16xf32>
    %347 = math.exp %346 : vector<1x16x16xf32>
    %cst_132 = arith.constant dense<0.000000e+00> : vector<1x16xf32>
    %348 = vector.multi_reduction <add>, %347, %cst_132 [2] : vector<1x16x16xf32> to vector<1x16xf32>
    %349 = vector.shape_cast %348 : vector<1x16xf32> to vector<1x16x1xf32>
    %350 = tpu.reciprocal %349 {approx = true} : vector<1x16x1xf32> -> vector<1x16x1xf32>
    %351 = vector.broadcast %350 : vector<1x16x1xf32> to vector<1x16x16xf32>
    %352 = arith.mulf %347, %351 : vector<1x16x16xf32>
    %c4 = arith.constant 4 : index
    %c0_133 = arith.constant 0 : index
    %c0_134 = arith.constant 0 : index
    %c0_135 = arith.constant 0 : index
    %353 = vector.load %arg2[%c4, %c0_133, %c0_134, %c0_135] : memref<8x1x16x16xf32, #tpu.memory_space<vmem>>, vector<1x1x16x16xf32>
    %354 = vector.shape_cast %353 : vector<1x1x16x16xf32> to vector<1x16x16xf32>
    %cst_136 = arith.constant 5.000000e-01 : f32
    %355 = vector.broadcast %cst_136 : f32 to vector<1x16x16xf32>
    %356 = arith.cmpf ogt, %4, %355 : vector<1x16x16xf32>
    %cst_137 = arith.constant -1.000000e+30 : f32
    %357 = vector.broadcast %cst_137 : f32 to vector<1x16x16xf32>
    %358 = arith.select %356, %354, %357 : vector<1x16x16xi1>, vector<1x16x16xf32>
    %cst_138 = arith.constant dense<0xFF800000> : vector<1x16xf32>
    %359 = vector.multi_reduction <maximumf>, %358, %cst_138 [2] : vector<1x16x16xf32> to vector<1x16xf32>
    %360 = vector.shape_cast %359 : vector<1x16xf32> to vector<1x16x1xf32>
    %cst_139 = arith.constant -5.000000e+29 : f32
    %361 = vector.broadcast %cst_139 : f32 to vector<1x16x1xf32>
    %362 = arith.cmpf ole, %360, %361 : vector<1x16x1xf32>
    %cst_140 = arith.constant 0.000000e+00 : f32
    %363 = vector.shape_cast %362 : vector<1x16x1xi1> to vector<1x16x1xi1>
    %364 = vector.broadcast %363 : vector<1x16x1xi1> to vector<1x16x16xi1>
    %365 = vector.broadcast %cst_140 : f32 to vector<1x16x16xf32>
    %366 = arith.select %364, %365, %358 : vector<1x16x16xi1>, vector<1x16x16xf32>
    %cst_141 = arith.constant 0.000000e+00 : f32
    %367 = vector.broadcast %cst_141 : f32 to vector<1x16x1xf32>
    %368 = arith.select %362, %367, %360 : vector<1x16x1xi1>, vector<1x16x1xf32>
    %369 = vector.broadcast %368 : vector<1x16x1xf32> to vector<1x16x16xf32>
    %370 = arith.subf %366, %369 : vector<1x16x16xf32>
    %371 = math.exp %370 : vector<1x16x16xf32>
    %cst_142 = arith.constant dense<0.000000e+00> : vector<1x16xf32>
    %372 = vector.multi_reduction <add>, %371, %cst_142 [2] : vector<1x16x16xf32> to vector<1x16xf32>
    %373 = vector.shape_cast %372 : vector<1x16xf32> to vector<1x16x1xf32>
    %374 = tpu.reciprocal %373 {approx = true} : vector<1x16x1xf32> -> vector<1x16x1xf32>
    %375 = vector.broadcast %374 : vector<1x16x1xf32> to vector<1x16x16xf32>
    %376 = arith.mulf %371, %375 : vector<1x16x16xf32>
    %377 = arith.addf %352, %376 : vector<1x16x16xf32>
    %cst_143 = arith.constant dense<0.000000e+00> : vector<1x16xf32>
    %378 = vector.multi_reduction <add>, %377, %cst_143 [2] : vector<1x16x16xf32> to vector<1x16xf32>
    %379 = vector.shape_cast %378 : vector<1x16xf32> to vector<1x16x1xf32>
    %380 = vector.broadcast %379 : vector<1x16x1xf32> to vector<1x16x16xf32>
    %381 = arith.divf %377, %380 : vector<1x16x16xf32>
    %382 = arith.truncf %381 : vector<1x16x16xf32> to vector<1x16x16xbf16>
    "tpu.trace_start"() <{level = 10 : i32, message = "bqk,bkd->bqd"}> : () -> ()
    %cst_144 = arith.constant dense<0.000000e+00> : vector<1x16x8xf32>
    %383 = tpu.matmul %382, %327, %cst_144 {dimension_numbers = #tpu.dot_dimension_numbers<[2], [1], [1], [2], [0, 0, 0, 1, 1, 2], [0], [0]>} : vector<1x16x16xbf16>, vector<1x16x8xbf16>, vector<1x16x8xf32> -> vector<1x16x8xf32>
    "tpu.trace_stop"() : () -> ()
    %384 = vector.extract_strided_slice %317 {offsets = [0, 0, 8], sizes = [1, 16, 8], strides = [1, 1, 1]} : vector<1x16x32xf32> to vector<1x16x8xf32>
    %385 = arith.truncf %384 : vector<1x16x8xf32> to vector<1x16x8xbf16>
    %386 = vector.extract_strided_slice %319 {offsets = [0, 0, 8], sizes = [1, 16, 8], strides = [1, 1, 1]} : vector<1x16x32xf32> to vector<1x16x8xf32>
    %387 = arith.truncf %386 : vector<1x16x8xf32> to vector<1x16x8xbf16>
    %388 = vector.extract_strided_slice %321 {offsets = [0, 0, 8], sizes = [1, 16, 8], strides = [1, 1, 1]} : vector<1x16x32xf32> to vector<1x16x8xf32>
    %389 = arith.truncf %388 : vector<1x16x8xf32> to vector<1x16x8xbf16>
    "tpu.trace_start"() <{level = 10 : i32, message = "bqd,bkd->bqk"}> : () -> ()
    %cst_145 = arith.constant dense<0.000000e+00> : vector<1x16x16xf32>
    %390 = tpu.matmul %385, %387, %cst_145 {dimension_numbers = #tpu.dot_dimension_numbers<[2], [2], [1], [1], [0, 0, 0, 1, 1, 1], [0], [0]>} : vector<1x16x8xbf16>, vector<1x16x8xbf16>, vector<1x16x16xf32> -> vector<1x16x16xf32>
    "tpu.trace_stop"() : () -> ()
    %cst_146 = arith.constant 0.353553385 : f32
    %391 = vector.broadcast %cst_146 : f32 to vector<1x16x16xf32>
    %392 = arith.mulf %390, %391 : vector<1x16x16xf32>
    %cst_147 = arith.constant 5.000000e-01 : f32
    %393 = vector.broadcast %cst_147 : f32 to vector<1x16x16xf32>
    %394 = arith.cmpf ogt, %4, %393 : vector<1x16x16xf32>
    %cst_148 = arith.constant -1.000000e+30 : f32
    %395 = vector.broadcast %cst_148 : f32 to vector<1x16x16xf32>
    %396 = arith.select %394, %392, %395 : vector<1x16x16xi1>, vector<1x16x16xf32>
    %cst_149 = arith.constant dense<0xFF800000> : vector<1x16xf32>
    %397 = vector.multi_reduction <maximumf>, %396, %cst_149 [2] : vector<1x16x16xf32> to vector<1x16xf32>
    %398 = vector.shape_cast %397 : vector<1x16xf32> to vector<1x16x1xf32>
    %cst_150 = arith.constant -5.000000e+29 : f32
    %399 = vector.broadcast %cst_150 : f32 to vector<1x16x1xf32>
    %400 = arith.cmpf ole, %398, %399 : vector<1x16x1xf32>
    %cst_151 = arith.constant 0.000000e+00 : f32
    %401 = vector.shape_cast %400 : vector<1x16x1xi1> to vector<1x16x1xi1>
    %402 = vector.broadcast %401 : vector<1x16x1xi1> to vector<1x16x16xi1>
    %403 = vector.broadcast %cst_151 : f32 to vector<1x16x16xf32>
    %404 = arith.select %402, %403, %396 : vector<1x16x16xi1>, vector<1x16x16xf32>
    %cst_152 = arith.constant 0.000000e+00 : f32
    %405 = vector.broadcast %cst_152 : f32 to vector<1x16x1xf32>
    %406 = arith.select %400, %405, %398 : vector<1x16x1xi1>, vector<1x16x1xf32>
    %407 = vector.broadcast %406 : vector<1x16x1xf32> to vector<1x16x16xf32>
    %408 = arith.subf %404, %407 : vector<1x16x16xf32>
    %409 = math.exp %408 : vector<1x16x16xf32>
    %cst_153 = arith.constant dense<0.000000e+00> : vector<1x16xf32>
    %410 = vector.multi_reduction <add>, %409, %cst_153 [2] : vector<1x16x16xf32> to vector<1x16xf32>
    %411 = vector.shape_cast %410 : vector<1x16xf32> to vector<1x16x1xf32>
    %412 = tpu.reciprocal %411 {approx = true} : vector<1x16x1xf32> -> vector<1x16x1xf32>
    %413 = vector.broadcast %412 : vector<1x16x1xf32> to vector<1x16x16xf32>
    %414 = arith.mulf %409, %413 : vector<1x16x16xf32>
    %c5 = arith.constant 5 : index
    %c0_154 = arith.constant 0 : index
    %c0_155 = arith.constant 0 : index
    %c0_156 = arith.constant 0 : index
    %415 = vector.load %arg2[%c5, %c0_154, %c0_155, %c0_156] : memref<8x1x16x16xf32, #tpu.memory_space<vmem>>, vector<1x1x16x16xf32>
    %416 = vector.shape_cast %415 : vector<1x1x16x16xf32> to vector<1x16x16xf32>
    %cst_157 = arith.constant 5.000000e-01 : f32
    %417 = vector.broadcast %cst_157 : f32 to vector<1x16x16xf32>
    %418 = arith.cmpf ogt, %4, %417 : vector<1x16x16xf32>
    %cst_158 = arith.constant -1.000000e+30 : f32
    %419 = vector.broadcast %cst_158 : f32 to vector<1x16x16xf32>
    %420 = arith.select %418, %416, %419 : vector<1x16x16xi1>, vector<1x16x16xf32>
    %cst_159 = arith.constant dense<0xFF800000> : vector<1x16xf32>
    %421 = vector.multi_reduction <maximumf>, %420, %cst_159 [2] : vector<1x16x16xf32> to vector<1x16xf32>
    %422 = vector.shape_cast %421 : vector<1x16xf32> to vector<1x16x1xf32>
    %cst_160 = arith.constant -5.000000e+29 : f32
    %423 = vector.broadcast %cst_160 : f32 to vector<1x16x1xf32>
    %424 = arith.cmpf ole, %422, %423 : vector<1x16x1xf32>
    %cst_161 = arith.constant 0.000000e+00 : f32
    %425 = vector.shape_cast %424 : vector<1x16x1xi1> to vector<1x16x1xi1>
    %426 = vector.broadcast %425 : vector<1x16x1xi1> to vector<1x16x16xi1>
    %427 = vector.broadcast %cst_161 : f32 to vector<1x16x16xf32>
    %428 = arith.select %426, %427, %420 : vector<1x16x16xi1>, vector<1x16x16xf32>
    %cst_162 = arith.constant 0.000000e+00 : f32
    %429 = vector.broadcast %cst_162 : f32 to vector<1x16x1xf32>
    %430 = arith.select %424, %429, %422 : vector<1x16x1xi1>, vector<1x16x1xf32>
    %431 = vector.broadcast %430 : vector<1x16x1xf32> to vector<1x16x16xf32>
    %432 = arith.subf %428, %431 : vector<1x16x16xf32>
    %433 = math.exp %432 : vector<1x16x16xf32>
    %cst_163 = arith.constant dense<0.000000e+00> : vector<1x16xf32>
    %434 = vector.multi_reduction <add>, %433, %cst_163 [2] : vector<1x16x16xf32> to vector<1x16xf32>
    %435 = vector.shape_cast %434 : vector<1x16xf32> to vector<1x16x1xf32>
    %436 = tpu.reciprocal %435 {approx = true} : vector<1x16x1xf32> -> vector<1x16x1xf32>
    %437 = vector.broadcast %436 : vector<1x16x1xf32> to vector<1x16x16xf32>
    %438 = arith.mulf %433, %437 : vector<1x16x16xf32>
    %439 = arith.addf %414, %438 : vector<1x16x16xf32>
    %cst_164 = arith.constant dense<0.000000e+00> : vector<1x16xf32>
    %440 = vector.multi_reduction <add>, %439, %cst_164 [2] : vector<1x16x16xf32> to vector<1x16xf32>
    %441 = vector.shape_cast %440 : vector<1x16xf32> to vector<1x16x1xf32>
    %442 = vector.broadcast %441 : vector<1x16x1xf32> to vector<1x16x16xf32>
    %443 = arith.divf %439, %442 : vector<1x16x16xf32>
    %444 = arith.truncf %443 : vector<1x16x16xf32> to vector<1x16x16xbf16>
    "tpu.trace_start"() <{level = 10 : i32, message = "bqk,bkd->bqd"}> : () -> ()
    %cst_165 = arith.constant dense<0.000000e+00> : vector<1x16x8xf32>
    %445 = tpu.matmul %444, %389, %cst_165 {dimension_numbers = #tpu.dot_dimension_numbers<[2], [1], [1], [2], [0, 0, 0, 1, 1, 2], [0], [0]>} : vector<1x16x16xbf16>, vector<1x16x8xbf16>, vector<1x16x8xf32> -> vector<1x16x8xf32>
    "tpu.trace_stop"() : () -> ()
    %446 = vector.extract_strided_slice %317 {offsets = [0, 0, 16], sizes = [1, 16, 8], strides = [1, 1, 1]} : vector<1x16x32xf32> to vector<1x16x8xf32>
    %447 = arith.truncf %446 : vector<1x16x8xf32> to vector<1x16x8xbf16>
    %448 = vector.extract_strided_slice %319 {offsets = [0, 0, 16], sizes = [1, 16, 8], strides = [1, 1, 1]} : vector<1x16x32xf32> to vector<1x16x8xf32>
    %449 = arith.truncf %448 : vector<1x16x8xf32> to vector<1x16x8xbf16>
    %450 = vector.extract_strided_slice %321 {offsets = [0, 0, 16], sizes = [1, 16, 8], strides = [1, 1, 1]} : vector<1x16x32xf32> to vector<1x16x8xf32>
    %451 = arith.truncf %450 : vector<1x16x8xf32> to vector<1x16x8xbf16>
    "tpu.trace_start"() <{level = 10 : i32, message = "bqd,bkd->bqk"}> : () -> ()
    %cst_166 = arith.constant dense<0.000000e+00> : vector<1x16x16xf32>
    %452 = tpu.matmul %447, %449, %cst_166 {dimension_numbers = #tpu.dot_dimension_numbers<[2], [2], [1], [1], [0, 0, 0, 1, 1, 1], [0], [0]>} : vector<1x16x8xbf16>, vector<1x16x8xbf16>, vector<1x16x16xf32> -> vector<1x16x16xf32>
    "tpu.trace_stop"() : () -> ()
    %cst_167 = arith.constant 0.353553385 : f32
    %453 = vector.broadcast %cst_167 : f32 to vector<1x16x16xf32>
    %454 = arith.mulf %452, %453 : vector<1x16x16xf32>
    %cst_168 = arith.constant 5.000000e-01 : f32
    %455 = vector.broadcast %cst_168 : f32 to vector<1x16x16xf32>
    %456 = arith.cmpf ogt, %4, %455 : vector<1x16x16xf32>
    %cst_169 = arith.constant -1.000000e+30 : f32
    %457 = vector.broadcast %cst_169 : f32 to vector<1x16x16xf32>
    %458 = arith.select %456, %454, %457 : vector<1x16x16xi1>, vector<1x16x16xf32>
    %cst_170 = arith.constant dense<0xFF800000> : vector<1x16xf32>
    %459 = vector.multi_reduction <maximumf>, %458, %cst_170 [2] : vector<1x16x16xf32> to vector<1x16xf32>
    %460 = vector.shape_cast %459 : vector<1x16xf32> to vector<1x16x1xf32>
    %cst_171 = arith.constant -5.000000e+29 : f32
    %461 = vector.broadcast %cst_171 : f32 to vector<1x16x1xf32>
    %462 = arith.cmpf ole, %460, %461 : vector<1x16x1xf32>
    %cst_172 = arith.constant 0.000000e+00 : f32
    %463 = vector.shape_cast %462 : vector<1x16x1xi1> to vector<1x16x1xi1>
    %464 = vector.broadcast %463 : vector<1x16x1xi1> to vector<1x16x16xi1>
    %465 = vector.broadcast %cst_172 : f32 to vector<1x16x16xf32>
    %466 = arith.select %464, %465, %458 : vector<1x16x16xi1>, vector<1x16x16xf32>
    %cst_173 = arith.constant 0.000000e+00 : f32
    %467 = vector.broadcast %cst_173 : f32 to vector<1x16x1xf32>
    %468 = arith.select %462, %467, %460 : vector<1x16x1xi1>, vector<1x16x1xf32>
    %469 = vector.broadcast %468 : vector<1x16x1xf32> to vector<1x16x16xf32>
    %470 = arith.subf %466, %469 : vector<1x16x16xf32>
    %471 = math.exp %470 : vector<1x16x16xf32>
    %cst_174 = arith.constant dense<0.000000e+00> : vector<1x16xf32>
    %472 = vector.multi_reduction <add>, %471, %cst_174 [2] : vector<1x16x16xf32> to vector<1x16xf32>
    %473 = vector.shape_cast %472 : vector<1x16xf32> to vector<1x16x1xf32>
    %474 = tpu.reciprocal %473 {approx = true} : vector<1x16x1xf32> -> vector<1x16x1xf32>
    %475 = vector.broadcast %474 : vector<1x16x1xf32> to vector<1x16x16xf32>
    %476 = arith.mulf %471, %475 : vector<1x16x16xf32>
    %c6 = arith.constant 6 : index
    %c0_175 = arith.constant 0 : index
    %c0_176 = arith.constant 0 : index
    %c0_177 = arith.constant 0 : index
    %477 = vector.load %arg2[%c6, %c0_175, %c0_176, %c0_177] : memref<8x1x16x16xf32, #tpu.memory_space<vmem>>, vector<1x1x16x16xf32>
    %478 = vector.shape_cast %477 : vector<1x1x16x16xf32> to vector<1x16x16xf32>
    %cst_178 = arith.constant 5.000000e-01 : f32
    %479 = vector.broadcast %cst_178 : f32 to vector<1x16x16xf32>
    %480 = arith.cmpf ogt, %4, %479 : vector<1x16x16xf32>
    %cst_179 = arith.constant -1.000000e+30 : f32
    %481 = vector.broadcast %cst_179 : f32 to vector<1x16x16xf32>
    %482 = arith.select %480, %478, %481 : vector<1x16x16xi1>, vector<1x16x16xf32>
    %cst_180 = arith.constant dense<0xFF800000> : vector<1x16xf32>
    %483 = vector.multi_reduction <maximumf>, %482, %cst_180 [2] : vector<1x16x16xf32> to vector<1x16xf32>
    %484 = vector.shape_cast %483 : vector<1x16xf32> to vector<1x16x1xf32>
    %cst_181 = arith.constant -5.000000e+29 : f32
    %485 = vector.broadcast %cst_181 : f32 to vector<1x16x1xf32>
    %486 = arith.cmpf ole, %484, %485 : vector<1x16x1xf32>
    %cst_182 = arith.constant 0.000000e+00 : f32
    %487 = vector.shape_cast %486 : vector<1x16x1xi1> to vector<1x16x1xi1>
    %488 = vector.broadcast %487 : vector<1x16x1xi1> to vector<1x16x16xi1>
    %489 = vector.broadcast %cst_182 : f32 to vector<1x16x16xf32>
    %490 = arith.select %488, %489, %482 : vector<1x16x16xi1>, vector<1x16x16xf32>
    %cst_183 = arith.constant 0.000000e+00 : f32
    %491 = vector.broadcast %cst_183 : f32 to vector<1x16x1xf32>
    %492 = arith.select %486, %491, %484 : vector<1x16x1xi1>, vector<1x16x1xf32>
    %493 = vector.broadcast %492 : vector<1x16x1xf32> to vector<1x16x16xf32>
    %494 = arith.subf %490, %493 : vector<1x16x16xf32>
    %495 = math.exp %494 : vector<1x16x16xf32>
    %cst_184 = arith.constant dense<0.000000e+00> : vector<1x16xf32>
    %496 = vector.multi_reduction <add>, %495, %cst_184 [2] : vector<1x16x16xf32> to vector<1x16xf32>
    %497 = vector.shape_cast %496 : vector<1x16xf32> to vector<1x16x1xf32>
    %498 = tpu.reciprocal %497 {approx = true} : vector<1x16x1xf32> -> vector<1x16x1xf32>
    %499 = vector.broadcast %498 : vector<1x16x1xf32> to vector<1x16x16xf32>
    %500 = arith.mulf %495, %499 : vector<1x16x16xf32>
    %501 = arith.addf %476, %500 : vector<1x16x16xf32>
    %cst_185 = arith.constant dense<0.000000e+00> : vector<1x16xf32>
    %502 = vector.multi_reduction <add>, %501, %cst_185 [2] : vector<1x16x16xf32> to vector<1x16xf32>
    %503 = vector.shape_cast %502 : vector<1x16xf32> to vector<1x16x1xf32>
    %504 = vector.broadcast %503 : vector<1x16x1xf32> to vector<1x16x16xf32>
    %505 = arith.divf %501, %504 : vector<1x16x16xf32>
    %506 = arith.truncf %505 : vector<1x16x16xf32> to vector<1x16x16xbf16>
    "tpu.trace_start"() <{level = 10 : i32, message = "bqk,bkd->bqd"}> : () -> ()
    %cst_186 = arith.constant dense<0.000000e+00> : vector<1x16x8xf32>
    %507 = tpu.matmul %506, %451, %cst_186 {dimension_numbers = #tpu.dot_dimension_numbers<[2], [1], [1], [2], [0, 0, 0, 1, 1, 2], [0], [0]>} : vector<1x16x16xbf16>, vector<1x16x8xbf16>, vector<1x16x8xf32> -> vector<1x16x8xf32>
    "tpu.trace_stop"() : () -> ()
    %508 = vector.extract_strided_slice %317 {offsets = [0, 0, 24], sizes = [1, 16, 8], strides = [1, 1, 1]} : vector<1x16x32xf32> to vector<1x16x8xf32>
    %509 = arith.truncf %508 : vector<1x16x8xf32> to vector<1x16x8xbf16>
    %510 = vector.extract_strided_slice %319 {offsets = [0, 0, 24], sizes = [1, 16, 8], strides = [1, 1, 1]} : vector<1x16x32xf32> to vector<1x16x8xf32>
    %511 = arith.truncf %510 : vector<1x16x8xf32> to vector<1x16x8xbf16>
    %512 = vector.extract_strided_slice %321 {offsets = [0, 0, 24], sizes = [1, 16, 8], strides = [1, 1, 1]} : vector<1x16x32xf32> to vector<1x16x8xf32>
    %513 = arith.truncf %512 : vector<1x16x8xf32> to vector<1x16x8xbf16>
    "tpu.trace_start"() <{level = 10 : i32, message = "bqd,bkd->bqk"}> : () -> ()
    %cst_187 = arith.constant dense<0.000000e+00> : vector<1x16x16xf32>
    %514 = tpu.matmul %509, %511, %cst_187 {dimension_numbers = #tpu.dot_dimension_numbers<[2], [2], [1], [1], [0, 0, 0, 1, 1, 1], [0], [0]>} : vector<1x16x8xbf16>, vector<1x16x8xbf16>, vector<1x16x16xf32> -> vector<1x16x16xf32>
    "tpu.trace_stop"() : () -> ()
    %cst_188 = arith.constant 0.353553385 : f32
    %515 = vector.broadcast %cst_188 : f32 to vector<1x16x16xf32>
    %516 = arith.mulf %514, %515 : vector<1x16x16xf32>
    %cst_189 = arith.constant 5.000000e-01 : f32
    %517 = vector.broadcast %cst_189 : f32 to vector<1x16x16xf32>
    %518 = arith.cmpf ogt, %4, %517 : vector<1x16x16xf32>
    %cst_190 = arith.constant -1.000000e+30 : f32
    %519 = vector.broadcast %cst_190 : f32 to vector<1x16x16xf32>
    %520 = arith.select %518, %516, %519 : vector<1x16x16xi1>, vector<1x16x16xf32>
    %cst_191 = arith.constant dense<0xFF800000> : vector<1x16xf32>
    %521 = vector.multi_reduction <maximumf>, %520, %cst_191 [2] : vector<1x16x16xf32> to vector<1x16xf32>
    %522 = vector.shape_cast %521 : vector<1x16xf32> to vector<1x16x1xf32>
    %cst_192 = arith.constant -5.000000e+29 : f32
    %523 = vector.broadcast %cst_192 : f32 to vector<1x16x1xf32>
    %524 = arith.cmpf ole, %522, %523 : vector<1x16x1xf32>
    %cst_193 = arith.constant 0.000000e+00 : f32
    %525 = vector.shape_cast %524 : vector<1x16x1xi1> to vector<1x16x1xi1>
    %526 = vector.broadcast %525 : vector<1x16x1xi1> to vector<1x16x16xi1>
    %527 = vector.broadcast %cst_193 : f32 to vector<1x16x16xf32>
    %528 = arith.select %526, %527, %520 : vector<1x16x16xi1>, vector<1x16x16xf32>
    %cst_194 = arith.constant 0.000000e+00 : f32
    %529 = vector.broadcast %cst_194 : f32 to vector<1x16x1xf32>
    %530 = arith.select %524, %529, %522 : vector<1x16x1xi1>, vector<1x16x1xf32>
    %531 = vector.broadcast %530 : vector<1x16x1xf32> to vector<1x16x16xf32>
    %532 = arith.subf %528, %531 : vector<1x16x16xf32>
    %533 = math.exp %532 : vector<1x16x16xf32>
    %cst_195 = arith.constant dense<0.000000e+00> : vector<1x16xf32>
    %534 = vector.multi_reduction <add>, %533, %cst_195 [2] : vector<1x16x16xf32> to vector<1x16xf32>
    %535 = vector.shape_cast %534 : vector<1x16xf32> to vector<1x16x1xf32>
    %536 = tpu.reciprocal %535 {approx = true} : vector<1x16x1xf32> -> vector<1x16x1xf32>
    %537 = vector.broadcast %536 : vector<1x16x1xf32> to vector<1x16x16xf32>
    %538 = arith.mulf %533, %537 : vector<1x16x16xf32>
    %c7 = arith.constant 7 : index
    %c0_196 = arith.constant 0 : index
    %c0_197 = arith.constant 0 : index
    %c0_198 = arith.constant 0 : index
    %539 = vector.load %arg2[%c7, %c0_196, %c0_197, %c0_198] : memref<8x1x16x16xf32, #tpu.memory_space<vmem>>, vector<1x1x16x16xf32>
    %540 = vector.shape_cast %539 : vector<1x1x16x16xf32> to vector<1x16x16xf32>
    %cst_199 = arith.constant 5.000000e-01 : f32
    %541 = vector.broadcast %cst_199 : f32 to vector<1x16x16xf32>
    %542 = arith.cmpf ogt, %4, %541 : vector<1x16x16xf32>
    %cst_200 = arith.constant -1.000000e+30 : f32
    %543 = vector.broadcast %cst_200 : f32 to vector<1x16x16xf32>
    %544 = arith.select %542, %540, %543 : vector<1x16x16xi1>, vector<1x16x16xf32>
    %cst_201 = arith.constant dense<0xFF800000> : vector<1x16xf32>
    %545 = vector.multi_reduction <maximumf>, %544, %cst_201 [2] : vector<1x16x16xf32> to vector<1x16xf32>
    %546 = vector.shape_cast %545 : vector<1x16xf32> to vector<1x16x1xf32>
    %cst_202 = arith.constant -5.000000e+29 : f32
    %547 = vector.broadcast %cst_202 : f32 to vector<1x16x1xf32>
    %548 = arith.cmpf ole, %546, %547 : vector<1x16x1xf32>
    %cst_203 = arith.constant 0.000000e+00 : f32
    %549 = vector.shape_cast %548 : vector<1x16x1xi1> to vector<1x16x1xi1>
    %550 = vector.broadcast %549 : vector<1x16x1xi1> to vector<1x16x16xi1>
    %551 = vector.broadcast %cst_203 : f32 to vector<1x16x16xf32>
    %552 = arith.select %550, %551, %544 : vector<1x16x16xi1>, vector<1x16x16xf32>
    %cst_204 = arith.constant 0.000000e+00 : f32
    %553 = vector.broadcast %cst_204 : f32 to vector<1x16x1xf32>
    %554 = arith.select %548, %553, %546 : vector<1x16x1xi1>, vector<1x16x1xf32>
    %555 = vector.broadcast %554 : vector<1x16x1xf32> to vector<1x16x16xf32>
    %556 = arith.subf %552, %555 : vector<1x16x16xf32>
    %557 = math.exp %556 : vector<1x16x16xf32>
    %cst_205 = arith.constant dense<0.000000e+00> : vector<1x16xf32>
    %558 = vector.multi_reduction <add>, %557, %cst_205 [2] : vector<1x16x16xf32> to vector<1x16xf32>
    %559 = vector.shape_cast %558 : vector<1x16xf32> to vector<1x16x1xf32>
    %560 = tpu.reciprocal %559 {approx = true} : vector<1x16x1xf32> -> vector<1x16x1xf32>
    %561 = vector.broadcast %560 : vector<1x16x1xf32> to vector<1x16x16xf32>
    %562 = arith.mulf %557, %561 : vector<1x16x16xf32>
    %563 = arith.addf %538, %562 : vector<1x16x16xf32>
    %cst_206 = arith.constant dense<0.000000e+00> : vector<1x16xf32>
    %564 = vector.multi_reduction <add>, %563, %cst_206 [2] : vector<1x16x16xf32> to vector<1x16xf32>
    %565 = vector.shape_cast %564 : vector<1x16xf32> to vector<1x16x1xf32>
    %566 = vector.broadcast %565 : vector<1x16x1xf32> to vector<1x16x16xf32>
    %567 = arith.divf %563, %566 : vector<1x16x16xf32>
    %568 = arith.truncf %567 : vector<1x16x16xf32> to vector<1x16x16xbf16>
    "tpu.trace_start"() <{level = 10 : i32, message = "bqk,bkd->bqd"}> : () -> ()
    %cst_207 = arith.constant dense<0.000000e+00> : vector<1x16x8xf32>
    %569 = tpu.matmul %568, %513, %cst_207 {dimension_numbers = #tpu.dot_dimension_numbers<[2], [1], [1], [2], [0, 0, 0, 1, 1, 2], [0], [0]>} : vector<1x16x16xbf16>, vector<1x16x8xbf16>, vector<1x16x8xf32> -> vector<1x16x8xf32>
    "tpu.trace_stop"() : () -> ()
    %570 = tpu.concatenate %383, %445, %507, %569 in 2 : vector<1x16x8xf32>, vector<1x16x8xf32>, vector<1x16x8xf32>, vector<1x16x8xf32> -> vector<1x16x32xf32>
    %571 = vector.shape_cast %570 : vector<1x16x32xf32> to vector<16x32xf32>
    %572 = arith.truncf %571 : vector<16x32xf32> to vector<16x32xbf16>
    %c1_208 = arith.constant 1 : index
    %c0_209 = arith.constant 0 : index
    %c0_210 = arith.constant 0 : index
    %573 = vector.load %arg7[%c1_208, %c0_209, %c0_210] : memref<2x32x32xbf16, #tpu.memory_space<vmem>>, vector<1x32x32xbf16>
    %574 = vector.shape_cast %573 : vector<1x32x32xbf16> to vector<32x32xbf16>
    %cst_211 = arith.constant dense<0.000000e+00> : vector<16x32xf32>
    %575 = tpu.matmul %572, %574, %cst_211 {dimension_numbers = #tpu.dot_dimension_numbers<[1], [0], [0], [1], [0, 0, 1, 1], [], []>} : vector<16x32xbf16>, vector<32x32xbf16>, vector<16x32xf32> -> vector<16x32xf32>
    %c1_212 = arith.constant 1 : index
    %c0_213 = arith.constant 0 : index
    %c0_214 = arith.constant 0 : index
    %576 = vector.load %arg8[%c1_212, %c0_213, %c0_214] : memref<2x1x32xf32, #tpu.memory_space<vmem>>, vector<1x1x32xf32>
    %577 = vector.shape_cast %576 : vector<1x1x32xf32> to vector<1x32xf32>
    %578 = vector.broadcast %577 : vector<1x32xf32> to vector<16x32xf32>
    %579 = arith.addf %575, %578 : vector<16x32xf32>
    %580 = vector.shape_cast %579 : vector<16x32xf32> to vector<1x16x32xf32>
    %581 = arith.addf %306, %580 : vector<1x16x32xf32>
    %c1_215 = arith.constant 1 : index
    %c0_216 = arith.constant 0 : index
    %c0_217 = arith.constant 0 : index
    %582 = vector.load %arg9[%c1_215, %c0_216, %c0_217] : memref<2x1x32xf32, #tpu.memory_space<vmem>>, vector<1x1x32xf32>
    %583 = vector.shape_cast %582 : vector<1x1x32xf32> to vector<1x32xf32>
    %c1_218 = arith.constant 1 : index
    %c0_219 = arith.constant 0 : index
    %c0_220 = arith.constant 0 : index
    %584 = vector.load %arg10[%c1_218, %c0_219, %c0_220] : memref<2x1x32xf32, #tpu.memory_space<vmem>>, vector<1x1x32xf32>
    %585 = vector.shape_cast %584 : vector<1x1x32xf32> to vector<1x32xf32>
    %cst_221 = arith.constant dense<0.000000e+00> : vector<1x16xf32>
    %586 = vector.multi_reduction <add>, %581, %cst_221 [2] : vector<1x16x32xf32> to vector<1x16xf32>
    %587 = vector.shape_cast %586 : vector<1x16xf32> to vector<1x16x1xf32>
    %cst_222 = arith.constant 3.200000e+01 : f32
    %588 = vector.broadcast %cst_222 : f32 to vector<1x16x1xf32>
    %589 = arith.divf %587, %588 : vector<1x16x1xf32>
    %590 = vector.broadcast %589 : vector<1x16x1xf32> to vector<1x16x32xf32>
    %591 = arith.subf %581, %590 : vector<1x16x32xf32>
    %592 = arith.mulf %591, %591 : vector<1x16x32xf32>
    %cst_223 = arith.constant dense<0.000000e+00> : vector<1x16xf32>
    %593 = vector.multi_reduction <add>, %592, %cst_223 [2] : vector<1x16x32xf32> to vector<1x16xf32>
    %594 = vector.shape_cast %593 : vector<1x16xf32> to vector<1x16x1xf32>
    %cst_224 = arith.constant 3.200000e+01 : f32
    %595 = vector.broadcast %cst_224 : f32 to vector<1x16x1xf32>
    %596 = arith.divf %594, %595 : vector<1x16x1xf32>
    %cst_225 = arith.constant 9.99999974E-6 : f32
    %597 = vector.broadcast %cst_225 : f32 to vector<1x16x1xf32>
    %598 = arith.addf %596, %597 : vector<1x16x1xf32>
    %599 = math.rsqrt %598 : vector<1x16x1xf32>
    %600 = vector.broadcast %599 : vector<1x16x1xf32> to vector<1x16x32xf32>
    %601 = arith.mulf %591, %600 : vector<1x16x32xf32>
    %602 = vector.shape_cast %583 : vector<1x32xf32> to vector<1x1x32xf32>
    %603 = vector.broadcast %602 : vector<1x1x32xf32> to vector<1x16x32xf32>
    %604 = arith.mulf %601, %603 : vector<1x16x32xf32>
    %605 = vector.shape_cast %585 : vector<1x32xf32> to vector<1x1x32xf32>
    %606 = vector.broadcast %605 : vector<1x1x32xf32> to vector<1x16x32xf32>
    %607 = arith.addf %604, %606 : vector<1x16x32xf32>
    %c0_226 = arith.constant 0 : index
    %c0_227 = arith.constant 0 : index
    %608 = vector.load %arg11[%c0_226, %c0_227] : memref<1x32xf32, #tpu.memory_space<vmem>>, vector<1x32xf32>
    %c0_228 = arith.constant 0 : index
    %c0_229 = arith.constant 0 : index
    %609 = vector.load %arg12[%c0_228, %c0_229] : memref<1x32xf32, #tpu.memory_space<vmem>>, vector<1x32xf32>
    %cst_230 = arith.constant dense<0.000000e+00> : vector<1x16xf32>
    %610 = vector.multi_reduction <add>, %607, %cst_230 [2] : vector<1x16x32xf32> to vector<1x16xf32>
    %611 = vector.shape_cast %610 : vector<1x16xf32> to vector<1x16x1xf32>
    %cst_231 = arith.constant 3.200000e+01 : f32
    %612 = vector.broadcast %cst_231 : f32 to vector<1x16x1xf32>
    %613 = arith.divf %611, %612 : vector<1x16x1xf32>
    %614 = vector.broadcast %613 : vector<1x16x1xf32> to vector<1x16x32xf32>
    %615 = arith.subf %607, %614 : vector<1x16x32xf32>
    %616 = arith.mulf %615, %615 : vector<1x16x32xf32>
    %cst_232 = arith.constant dense<0.000000e+00> : vector<1x16xf32>
    %617 = vector.multi_reduction <add>, %616, %cst_232 [2] : vector<1x16x32xf32> to vector<1x16xf32>
    %618 = vector.shape_cast %617 : vector<1x16xf32> to vector<1x16x1xf32>
    %cst_233 = arith.constant 3.200000e+01 : f32
    %619 = vector.broadcast %cst_233 : f32 to vector<1x16x1xf32>
    %620 = arith.divf %618, %619 : vector<1x16x1xf32>
    %cst_234 = arith.constant 9.99999974E-6 : f32
    %621 = vector.broadcast %cst_234 : f32 to vector<1x16x1xf32>
    %622 = arith.addf %620, %621 : vector<1x16x1xf32>
    %623 = math.rsqrt %622 : vector<1x16x1xf32>
    %624 = vector.broadcast %623 : vector<1x16x1xf32> to vector<1x16x32xf32>
    %625 = arith.mulf %615, %624 : vector<1x16x32xf32>
    %626 = vector.shape_cast %608 : vector<1x32xf32> to vector<1x1x32xf32>
    %627 = vector.broadcast %626 : vector<1x1x32xf32> to vector<1x16x32xf32>
    %628 = arith.mulf %625, %627 : vector<1x16x32xf32>
    %629 = vector.shape_cast %609 : vector<1x32xf32> to vector<1x1x32xf32>
    %630 = vector.broadcast %629 : vector<1x1x32xf32> to vector<1x16x32xf32>
    %631 = arith.addf %628, %630 : vector<1x16x32xf32>
    %632 = vector.broadcast %1 : vector<1x16x1xf32> to vector<1x16x32xf32>
    %633 = arith.mulf %631, %632 : vector<1x16x32xf32>
    %cst_235 = arith.constant dense<0.000000e+00> : vector<1x32xf32>
    %634 = vector.multi_reduction <add>, %633, %cst_235 [1] : vector<1x16x32xf32> to vector<1x32xf32>
    %635 = vector.shape_cast %634 : vector<1x32xf32> to vector<1x1x32xf32>
    %c0_236 = arith.constant 0 : index
    %c0_237 = arith.constant 0 : index
    %c0_238 = arith.constant 0 : index
    %636 = vector.load %arg13[%c0_236, %c0_237, %c0_238] : memref<1x1x32xf32, #tpu.memory_space<vmem>>, vector<1x1x32xf32>
    tpu.vector_store %arg13[%c0_236, %c0_237, %c0_238], %635 {strides = array<i32>} : memref<1x1x32xf32, #tpu.memory_space<vmem>>, vector<1x1x32xf32>,
    return
  }
  func.func @transform_0(%arg0: i32) -> (i32, i32, i32) {
    %c0_i32 = arith.constant 0 : i32
    %c0_i32_0 = arith.constant 0 : i32
    %c0_i32_1 = arith.constant 0 : i32
    return %arg0, %c0_i32, %c0_i32_0 : i32, i32, i32
  }
  func.func @transform_1(%arg0: i32) -> (i32, i32, i32, i32) {
    %c0_i32 = arith.constant 0 : i32
    %c0_i32_0 = arith.constant 0 : i32
    %c0_i32_1 = arith.constant 0 : i32
    %c0_i32_2 = arith.constant 0 : i32
    return %c0_i32, %arg0, %c0_i32_0, %c0_i32_1 : i32, i32, i32, i32
  }
  func.func @transform_2(%arg0: i32) -> (i32, i32, i32) {
    %c0_i32 = arith.constant 0 : i32
    %c0_i32_0 = arith.constant 0 : i32
    %c0_i32_1 = arith.constant 0 : i32
    return %arg0, %c0_i32, %c0_i32_0 : i32, i32, i32
  }
  func.func @transform_3(%arg0: i32) -> (i32, i32, i32) {
    %c0_i32 = arith.constant 0 : i32
    %c0_i32_0 = arith.constant 0 : i32
    %c0_i32_1 = arith.constant 0 : i32
    return %arg0, %c0_i32, %c0_i32_0 : i32, i32, i32
  }
  func.func @transform_4(%arg0: i32) -> (i32, i32, i32) {
    %c0_i32 = arith.constant 0 : i32
    %c0_i32_0 = arith.constant 0 : i32
    %c0_i32_1 = arith.constant 0 : i32
    %c0_i32_2 = arith.constant 0 : i32
    return %c0_i32, %c0_i32_0, %c0_i32_1 : i32, i32, i32
  }
  func.func @transform_5(%arg0: i32) -> (i32, i32, i32) {
    %c0_i32 = arith.constant 0 : i32
    %c0_i32_0 = arith.constant 0 : i32
    %c0_i32_1 = arith.constant 0 : i32
    %c0_i32_2 = arith.constant 0 : i32
    return %c0_i32, %c0_i32_0, %c0_i32_1 : i32, i32, i32
  }
  func.func @transform_6(%arg0: i32) -> (i32, i32, i32) {
    %c0_i32 = arith.constant 0 : i32
    %c0_i32_0 = arith.constant 0 : i32
    %c0_i32_1 = arith.constant 0 : i32
    %c0_i32_2 = arith.constant 0 : i32
    return %c0_i32, %c0_i32_0, %c0_i32_1 : i32, i32, i32
  }
  func.func @transform_7(%arg0: i32) -> (i32, i32, i32) {
    %c0_i32 = arith.constant 0 : i32
    %c0_i32_0 = arith.constant 0 : i32
    %c0_i32_1 = arith.constant 0 : i32
    %c0_i32_2 = arith.constant 0 : i32
    return %c0_i32, %c0_i32_0, %c0_i32_1 : i32, i32, i32
  }
  func.func @transform_8(%arg0: i32) -> (i32, i32, i32) {
    %c0_i32 = arith.constant 0 : i32
    %c0_i32_0 = arith.constant 0 : i32
    %c0_i32_1 = arith.constant 0 : i32
    %c0_i32_2 = arith.constant 0 : i32
    return %c0_i32, %c0_i32_0, %c0_i32_1 : i32, i32, i32
  }
  func.func @transform_9(%arg0: i32) -> (i32, i32, i32) {
    %c0_i32 = arith.constant 0 : i32
    %c0_i32_0 = arith.constant 0 : i32
    %c0_i32_1 = arith.constant 0 : i32
    %c0_i32_2 = arith.constant 0 : i32
    return %c0_i32, %c0_i32_0, %c0_i32_1 : i32, i32, i32
  }
  func.func @transform_10(%arg0: i32) -> (i32, i32) {
    %c0_i32 = arith.constant 0 : i32
    %c0_i32_0 = arith.constant 0 : i32
    %c0_i32_1 = arith.constant 0 : i32
    return %c0_i32, %c0_i32_0 : i32, i32
  }
  func.func @transform_11(%arg0: i32) -> (i32, i32) {
    %c0_i32 = arith.constant 0 : i32
    %c0_i32_0 = arith.constant 0 : i32
    %c0_i32_1 = arith.constant 0 : i32
    return %c0_i32, %c0_i32_0 : i32, i32
  }
  func.func @transform_12(%arg0: i32) -> (i32, i32, i32) {
    %c0_i32 = arith.constant 0 : i32
    %c0_i32_0 = arith.constant 0 : i32
    %c0_i32_1 = arith.constant 0 : i32
    return %arg0, %c0_i32, %c0_i32_0 : i32, i32, i32
  }
}

</mosaic_0001>

<llo_original>
// kernel: tpu_custom_call.1
$region0: #{tpu_custom_call.1}
  #allocation0 [shape = 'u32[]', space=smem, size = 0x4, offset = 0x4, fixed_abs, tag = 'smem constant byte address 0x4 - core index']
  #allocation1 [shape = 'u32[144,128]{1,0:T(1,128)}', space=vmem, size = 0x12000, scoped, tag = 'internal scratch']
  #allocation9 [shape = 's32[]', space=sflag, size = 0x4, offset = 0, fixed_abs, tag = 'sflag constant byte address 0x0 - dummy sync flag']
  %s0 = inlined_call_operand.vmem [shape: f32[2,16,32], index: 0, kind: input, shape index: {}]
  %s1 = inlined_call_operand.hbm [shape: f32[8,2,16,16], index: 1, kind: input, shape index: {}]
  %s2 = inlined_call_operand.vmem [shape: f32[2,1,16], index: 2, kind: input, shape index: {}]
  %s3 = inlined_call_operand.vmem [shape: f32[2,16,1], index: 3, kind: input, shape index: {}]
  %s4 = inlined_call_operand.hbm [shape: bf16[2,32,96], index: 4, kind: input, shape index: {}]
  %s5 = inlined_call_operand.vmem [shape: f32[2,1,96], index: 5, kind: input, shape index: {}]
  %s6 = inlined_call_operand.hbm [shape: bf16[2,32,32], index: 6, kind: input, shape index: {}]
  %s7 = inlined_call_operand.vmem [shape: f32[2,1,32], index: 7, kind: input, shape index: {}]
  %s8 = inlined_call_operand.vmem [shape: f32[2,1,32], index: 8, kind: input, shape index: {}]
  %s9 = inlined_call_operand.vmem [shape: f32[2,1,32], index: 9, kind: input, shape index: {}]
  %s10 = inlined_call_operand.vmem [shape: f32[1,32], index: 10, kind: input, shape index: {}]
  %s11 = inlined_call_operand.vmem [shape: f32[1,32], index: 11, kind: input, shape index: {}]
  %s12 = inlined_call_operand.hbm [shape: f32[2,1,32], index: 12, kind: output, shape index: {}]
  %s13 = sld [smem:[#allocation0]]
  $region93: #{tpu_custom_call.1} parent=0
    _
  %s15 = ssub.s32 1, %s13
  %s16 = scalar_select 0, %s15, %s13
  $region1: #{tpu_custom_call.1} parent=0
    #allocation2 [shape = 'u8[131072]{0}', space=vmem, size = 0x20000, scoped, tag = 'input window, operand 1']
    #allocation3 [shape = 's32[2]{0}', space=sflag, size = 0x8, scoped, tag = 'scoped memory for tpu_custom_call.1']
    #allocation4 [shape = 's32[2]{0}', space=sflag, size = 0x8, scoped, tag = 'scoped memory for tpu_custom_call.1']
    #allocation5 [shape = 'u8[16384]{0}', space=vmem, size = 0x4000, scoped, tag = 'input window, operand 4, single buffered']
    #allocation6 [shape = 's32[1]{0}', space=sflag, size = 0x4, scoped, tag = 'scoped memory for tpu_custom_call.1']
    #allocation7 [shape = 'u8[16384]{0}', space=vmem, size = 0x4000, scoped, tag = 'input window, operand 6, single buffered']
    #allocation8 [shape = 'u8[1024]{0}', space=vmem, size = 0x400, scoped, tag = 'output window, operand 0']
    %17 = vsyncpa [#allocation3], 0
    %s18 = scalar_lea.sflag [#allocation3], 1
    %19 = vsyncpa %s18, 0
    %20 = vsyncpa [#allocation6], 0
    %21 = vsyncpa [#allocation4], 0
    %s22 = scalar_lea.sflag [#allocation4], 1
    %23 = vsyncpa %s22, 0
    loop: start=0, step=1, limit=4
    $region2: #{tpu_custom_call.1} parent=1 // loop_pre_header
      _
    $region3: #{tpu_custom_call.1} parent=1 // loop_header
      %s25 = sphi 0, %s29
      %p26 = scmp.ge.s32.totalorder %s25, 4
      %s35 = sphi 0, %s37
      %s38 = sphi 0, %s35
      %s39 = sphi 0, %s38
      %s55 = sphi 0, %s39
      %s61 = sphi 0, %s63
      %s64 = sphi 0, %s61
      %s65 = sphi 0, %s64
      %s81 = sphi 0, %s65
      %s87 = sphi 0, %s89
      %s90 = sphi 0, %s87
      %s91 = sphi 0, %s90
      %s107 = sphi 0, %s91
      %s113 = sphi 0, %s115
      %s116 = sphi 0, %s113
      %s117 = sphi 0, %s116
      %s133 = sphi 0, %s117
      %s137 = sphi 0, %s137
      %s139 = sphi 0, %s137
      %s140 = sphi 0, %s139
      %s154 = sphi 0, %s140
      %s158 = sphi 0, %s158
      %s160 = sphi 0, %s158
      %s161 = sphi 0, %s160
      %s175 = sphi 0, %s161
      %s179 = sphi 0, %s179
      %s181 = sphi 0, %s179
      %s182 = sphi 0, %s181
      %s196 = sphi 0, %s182
      %s200 = sphi 0, %s200
      %s202 = sphi 0, %s200
      %s203 = sphi 0, %s202
      %s217 = sphi 0, %s203
      %s221 = sphi 0, %s221
      %s223 = sphi 0, %s221
      %s224 = sphi 0, %s223
      %s238 = sphi 0, %s224
      %s242 = sphi 0, %s242
      %s244 = sphi 0, %s242
      %s245 = sphi 0, %s244
      %s259 = sphi 0, %s245
      %s263 = sphi 0, %s263
      %s265 = sphi 0, %s263
      %s266 = sphi 0, %s265
      %s280 = sphi 0, %s266
      %s284 = sphi 0, %s284
      %s286 = sphi 0, %s284
      %s287 = sphi 0, %s286
      %s301 = sphi 0, %s287
      %s307 = sphi 0, %s309
      %s310 = sphi 0, %s307
      %s311 = sphi 0, %s310
      %s327 = sphi 0, %s311
    $region4: #{tpu_custom_call.1} parent=1 // loop_header_branch
      %28 = sbr.rel (%p26) target = $region8
    $region5: #{tpu_custom_call.1} parent=1 // loop_body
      %s30 = ssub.s32 %s25, 1
      %s31 = ssub.s32 %s25, 2
      %s32 = sadd.s32 %s25, 1
      %s33 = ssub.s32 %s25, %s32
      %p34 = scmp.eq.s32.totalorder %s33, 0
      %s36 = sadd.s32 %s35, 1
      %s37 = scalar_select %p34, %s35, %s36
      %p40 = pneg %p34
      %p41 = scmp.eq.s32.totalorder %s25, 1
      %p42 = por %p40, %p41
      %p43 = scmp.ne.s32.totalorder %s35, %s38
      %p44 = scmp.eq.s32.totalorder %s25, 0
      %p45 = por %p43, %p44
      %p46 = scmp.ne.s32.totalorder %s35, %s38
      %p47 = scmp.eq.s32.totalorder %s30, 1
      %p48 = por %p46, %p47
      %p49 = scmp.ne.s32.totalorder %s38, %s39
      %p50 = scmp.eq.s32.totalorder %s30, 0
      %p51 = por %p49, %p50
      %p52 = scmp.ne.s32.totalorder %s38, %s39
      %p53 = scmp.eq.s32.totalorder %s31, 1
      %p54 = por %p52, %p53
      %p56 = scmp.ne.s32.totalorder %s39, %s55
      %p57 = scmp.eq.s32.totalorder %s31, 0
      %p58 = por %p56, %p57
      %s59 = ssub.s32 %s25, %s32
      %p60 = scmp.eq.s32.totalorder %s59, 0
      %s62 = sadd.s32 %s61, 1
      %s63 = scalar_select %p60, %s61, %s62
      %p66 = pneg %p60
      %p67 = scmp.eq.s32.totalorder %s25, 1
      %p68 = por %p66, %p67
      %p69 = scmp.ne.s32.totalorder %s61, %s64
      %p70 = scmp.eq.s32.totalorder %s25, 0
      %p71 = por %p69, %p70
      %p72 = scmp.ne.s32.totalorder %s61, %s64
      %p73 = scmp.eq.s32.totalorder %s30, 1
      %p74 = por %p72, %p73
      %p75 = scmp.ne.s32.totalorder %s64, %s65
      %p76 = scmp.eq.s32.totalorder %s30, 0
      %p77 = por %p75, %p76
      %p78 = scmp.ne.s32.totalorder %s64, %s65
      %p79 = scmp.eq.s32.totalorder %s31, 1
      %p80 = por %p78, %p79
      %p82 = scmp.ne.s32.totalorder %s65, %s81
      %p83 = scmp.eq.s32.totalorder %s31, 0
      %p84 = por %p82, %p83
      %s85 = ssub.s32 %s25, %s32
      %p86 = scmp.eq.s32.totalorder %s85, 0
      %s88 = sadd.s32 %s87, 1
      %s89 = scalar_select %p86, %s87, %s88
      %p92 = pneg %p86
      %p93 = scmp.eq.s32.totalorder %s25, 1
      %p94 = por %p92, %p93
      %p95 = scmp.ne.s32.totalorder %s87, %s90
      %p96 = scmp.eq.s32.totalorder %s25, 0
      %p97 = por %p95, %p96
      %p98 = scmp.ne.s32.totalorder %s87, %s90
      %p99 = scmp.eq.s32.totalorder %s30, 1
      %p100 = por %p98, %p99
      %p101 = scmp.ne.s32.totalorder %s90, %s91
      %p102 = scmp.eq.s32.totalorder %s30, 0
      %p103 = por %p101, %p102
      %p104 = scmp.ne.s32.totalorder %s90, %s91
      %p105 = scmp.eq.s32.totalorder %s31, 1
      %p106 = por %p104, %p105
      %p108 = scmp.ne.s32.totalorder %s91, %s107
      %p109 = scmp.eq.s32.totalorder %s31, 0
      %p110 = por %p108, %p109
      %s111 = ssub.s32 %s25, %s32
      %p112 = scmp.eq.s32.totalorder %s111, 0
      %s114 = sadd.s32 %s113, 1
      %s115 = scalar_select %p112, %s113, %s114
      %p118 = pneg %p112
      %p119 = scmp.eq.s32.totalorder %s25, 1
      %p120 = por %p118, %p119
      %p121 = scmp.ne.s32.totalorder %s113, %s116
      %p122 = scmp.eq.s32.totalorder %s25, 0
      %p123 = por %p121, %p122
      %p124 = scmp.ne.s32.totalorder %s113, %s116
      %p125 = scmp.eq.s32.totalorder %s30, 1
      %p126 = por %p124, %p125
      %p127 = scmp.ne.s32.totalorder %s116, %s117
      %p128 = scmp.eq.s32.totalorder %s30, 0
      %p129 = por %p127, %p128
      %p130 = scmp.ne.s32.totalorder %s116, %s117
      %p131 = scmp.eq.s32.totalorder %s31, 1
      %p132 = por %p130, %p131
      %p134 = scmp.ne.s32.totalorder %s117, %s133
      %p135 = scmp.eq.s32.totalorder %s31, 0
      %p136 = por %p134, %p135
      %s138 = sadd.s32 %s137, 1
      %p141 = scmp.eq.s32.totalorder %s25, 1
      %p142 = scmp.ne.s32.totalorder %s137, %s139
      %p143 = scmp.eq.s32.totalorder %s25, 0
      %p144 = por %p142, %p143
      %p145 = scmp.ne.s32.totalorder %s137, %s139
      %p146 = scmp.eq.s32.totalorder %s30, 1
      %p147 = por %p145, %p146
      %p148 = scmp.ne.s32.totalorder %s139, %s140
      %p149 = scmp.eq.s32.totalorder %s30, 0
      %p150 = por %p148, %p149
      %p151 = scmp.ne.s32.totalorder %s139, %s140
      %p152 = scmp.eq.s32.totalorder %s31, 1
      %p153 = por %p151, %p152
      %p155 = scmp.ne.s32.totalorder %s140, %s154
      %p156 = scmp.eq.s32.totalorder %s31, 0
      %p157 = por %p155, %p156
      %s159 = sadd.s32 %s158, 1
      %p162 = scmp.eq.s32.totalorder %s25, 1
      %p163 = scmp.ne.s32.totalorder %s158, %s160
      %p164 = scmp.eq.s32.totalorder %s25, 0
      %p165 = por %p163, %p164
      %p166 = scmp.ne.s32.totalorder %s158, %s160
      %p167 = scmp.eq.s32.totalorder %s30, 1
      %p168 = por %p166, %p167
      %p169 = scmp.ne.s32.totalorder %s160, %s161
      %p170 = scmp.eq.s32.totalorder %s30, 0
      %p171 = por %p169, %p170
      %p172 = scmp.ne.s32.totalorder %s160, %s161
      %p173 = scmp.eq.s32.totalorder %s31, 1
      %p174 = por %p172, %p173
      %p176 = scmp.ne.s32.totalorder %s161, %s175
      %p177 = scmp.eq.s32.totalorder %s31, 0
      %p178 = por %p176, %p177
      %s180 = sadd.s32 %s179, 1
      %p183 = scmp.eq.s32.totalorder %s25, 1
      %p184 = scmp.ne.s32.totalorder %s179, %s181
      %p185 = scmp.eq.s32.totalorder %s25, 0
      %p186 = por %p184, %p185
      %p187 = scmp.ne.s32.totalorder %s179, %s181
      %p188 = scmp.eq.s32.totalorder %s30, 1
      %p189 = por %p187, %p188
      %p190 = scmp.ne.s32.totalorder %s181, %s182
      %p191 = scmp.eq.s32.totalorder %s30, 0
      %p192 = por %p190, %p191
      %p193 = scmp.ne.s32.totalorder %s181, %s182
      %p194 = scmp.eq.s32.totalorder %s31, 1
      %p195 = por %p193, %p194
      %p197 = scmp.ne.s32.totalorder %s182, %s196
      %p198 = scmp.eq.s32.totalorder %s31, 0
      %p199 = por %p197, %p198
      %s201 = sadd.s32 %s200, 1
      %p204 = scmp.eq.s32.totalorder %s25, 1
      %p205 = scmp.ne.s32.totalorder %s200, %s202
      %p206 = scmp.eq.s32.totalorder %s25, 0
      %p207 = por %p205, %p206
      %p208 = scmp.ne.s32.totalorder %s200, %s202
      %p209 = scmp.eq.s32.totalorder %s30, 1
      %p210 = por %p208, %p209
      %p211 = scmp.ne.s32.totalorder %s202, %s203
      %p212 = scmp.eq.s32.totalorder %s30, 0
      %p213 = por %p211, %p212
      %p214 = scmp.ne.s32.totalorder %s202, %s203
      %p215 = scmp.eq.s32.totalorder %s31, 1
      %p216 = por %p214, %p215
      %p218 = scmp.ne.s32.totalorder %s203, %s217
      %p219 = scmp.eq.s32.totalorder %s31, 0
      %p220 = por %p218, %p219
      %s222 = sadd.s32 %s221, 1
      %p225 = scmp.eq.s32.totalorder %s25, 1
      %p226 = scmp.ne.s32.totalorder %s221, %s223
      %p227 = scmp.eq.s32.totalorder %s25, 0
      %p228 = por %p226, %p227
      %p229 = scmp.ne.s32.totalorder %s221, %s223
      %p230 = scmp.eq.s32.totalorder %s30, 1
      %p231 = por %p229, %p230
      %p232 = scmp.ne.s32.totalorder %s223, %s224
      %p233 = scmp.eq.s32.totalorder %s30, 0
      %p234 = por %p232, %p233
      %p235 = scmp.ne.s32.totalorder %s223, %s224
      %p236 = scmp.eq.s32.totalorder %s31, 1
      %p237 = por %p235, %p236
      %p239 = scmp.ne.s32.totalorder %s224, %s238
      %p240 = scmp.eq.s32.totalorder %s31, 0
      %p241 = por %p239, %p240
      %s243 = sadd.s32 %s242, 1
      %p246 = scmp.eq.s32.totalorder %s25, 1
      %p247 = scmp.ne.s32.totalorder %s242, %s244
      %p248 = scmp.eq.s32.totalorder %s25, 0
      %p249 = por %p247, %p248
      %p250 = scmp.ne.s32.totalorder %s242, %s244
      %p251 = scmp.eq.s32.totalorder %s30, 1
      %p252 = por %p250, %p251
      %p253 = scmp.ne.s32.totalorder %s244, %s245
      %p254 = scmp.eq.s32.totalorder %s30, 0
      %p255 = por %p253, %p254
      %p256 = scmp.ne.s32.totalorder %s244, %s245
      %p257 = scmp.eq.s32.totalorder %s31, 1
      %p258 = por %p256, %p257
      %p260 = scmp.ne.s32.totalorder %s245, %s259
      %p261 = scmp.eq.s32.totalorder %s31, 0
      %p262 = por %p260, %p261
      %s264 = sadd.s32 %s263, 1
      %p267 = scmp.eq.s32.totalorder %s25, 1
      %p268 = scmp.ne.s32.totalorder %s263, %s265
      %p269 = scmp.eq.s32.totalorder %s25, 0
      %p270 = por %p268, %p269
      %p271 = scmp.ne.s32.totalorder %s263, %s265
      %p272 = scmp.eq.s32.totalorder %s30, 1
      %p273 = por %p271, %p272
      %p274 = scmp.ne.s32.totalorder %s265, %s266
      %p275 = scmp.eq.s32.totalorder %s30, 0
      %p276 = por %p274, %p275
      %p277 = scmp.ne.s32.totalorder %s265, %s266
      %p278 = scmp.eq.s32.totalorder %s31, 1
      %p279 = por %p277, %p278
      %p281 = scmp.ne.s32.totalorder %s266, %s280
      %p282 = scmp.eq.s32.totalorder %s31, 0
      %p283 = por %p281, %p282
      %s285 = sadd.s32 %s284, 1
      %p288 = scmp.eq.s32.totalorder %s25, 1
      %p289 = scmp.ne.s32.totalorder %s284, %s286
      %p290 = scmp.eq.s32.totalorder %s25, 0
      %p291 = por %p289, %p290
      %p292 = scmp.ne.s32.totalorder %s284, %s286
      %p293 = scmp.eq.s32.totalorder %s30, 1
      %p294 = por %p292, %p293
      %p295 = scmp.ne.s32.totalorder %s286, %s287
      %p296 = scmp.eq.s32.totalorder %s30, 0
      %p297 = por %p295, %p296
      %p298 = scmp.ne.s32.totalorder %s286, %s287
      %p299 = scmp.eq.s32.totalorder %s31, 1
      %p300 = por %p298, %p299
      %p302 = scmp.ne.s32.totalorder %s287, %s301
      %p303 = scmp.eq.s32.totalorder %s31, 0
      %p304 = por %p302, %p303
      %s305 = ssub.s32 %s25, %s32
      %p306 = scmp.eq.s32.totalorder %s305, 0
      %s308 = sadd.s32 %s307, 1
      %s309 = scalar_select %p306, %s307, %s308
      %p312 = pneg %p306
      %p313 = scmp.eq.s32.totalorder %s25, 1
      %p314 = por %p312, %p313
      %p315 = scmp.ne.s32.totalorder %s307, %s310
      %p316 = scmp.eq.s32.totalorder %s25, 0
      %p317 = por %p315, %p316
      %p318 = scmp.ne.s32.totalorder %s307, %s310
      %p319 = scmp.eq.s32.totalorder %s30, 1
      %p320 = por %p318, %p319
      %p321 = scmp.ne.s32.totalorder %s310, %s311
      %p322 = scmp.eq.s32.totalorder %s30, 0
      %p323 = por %p321, %p322
      %p324 = scmp.ne.s32.totalorder %s310, %s311
      %p325 = scmp.eq.s32.totalorder %s31, 1
      %p326 = por %p324, %p325
      %p328 = scmp.ne.s32.totalorder %s311, %s327
      %p329 = scmp.eq.s32.totalorder %s31, 0
      %p330 = por %p328, %p329
      %p331 = scmp.le.s32.totalorder 1, %s25
      %p332 = scmp.lt.s32.totalorder %s25, 3
      %p333 = pnand %p331, %p332
      %p334 = pneg %p333
      // Predicated region
      $region9: #{tpu_custom_call.1} parent=5 // pred_check
        _
      $region10: #{tpu_custom_call.1} parent=5 // pred_check_branch
        %336 = sbr.rel (%p333) target = $region12
      $region11: #{tpu_custom_call.1} parent=5 // pred_region
        %s337 = ssub.s32 %s25, 1
        // Predicated region
        $region13: #{tpu_custom_call.1} parent=11 // pred_check
          %p338 = pneg %p150
        $region14: #{tpu_custom_call.1} parent=11 // pred_check_branch
          %340 = sbr.rel (%p338) target = $region16
        $region15: #{tpu_custom_call.1} parent=11 // pred_region
          %s342 = ssub.s32 512, 512
          %343 = vsyncadd [#allocation6], %s342
          %s344 = sshll.u32 [#allocation5], 4
          %s345 = int_to_ptr.vmem [resolvable:$true] %s344
          %350 = dma.hbm_to_vmem [thread:$0]  %s4, 512, %s345, [#allocation6], 64, 64, 4
        $region16: #{tpu_custom_call.1} parent=11 // pred_fallthru
          _
        // Predicated region
        $region17: #{tpu_custom_call.1} parent=11 // pred_check
          %p351 = pneg %p171
        $region18: #{tpu_custom_call.1} parent=11 // pred_check_branch
          %353 = sbr.rel (%p351) target = $region20
        $region19: #{tpu_custom_call.1} parent=11 // pred_region
          _
        $region20: #{tpu_custom_call.1} parent=11 // pred_fallthru
          _
        // Predicated region
        $region21: #{tpu_custom_call.1} parent=11 // pred_check
          %p354 = pneg %p192
        $region22: #{tpu_custom_call.1} parent=11 // pred_check_branch
          %356 = sbr.rel (%p354) target = $region24
        $region23: #{tpu_custom_call.1} parent=11 // pred_region
          %s358 = ssub.s32 512, 512
          %359 = vsyncadd [#allocation6], %s358
          %s360 = sshll.u32 [#allocation7], 4
          %s361 = int_to_ptr.vmem [resolvable:$true] %s360
          %366 = dma.hbm_to_vmem [thread:$0]  %s6, 512, %s361, [#allocation6], 64, 64, 4
        $region24: #{tpu_custom_call.1} parent=11 // pred_fallthru
          _
        // Predicated region
        $region25: #{tpu_custom_call.1} parent=11 // pred_check
          %p367 = pneg %p213
        $region26: #{tpu_custom_call.1} parent=11 // pred_check_branch
          %369 = sbr.rel (%p367) target = $region28
        $region27: #{tpu_custom_call.1} parent=11 // pred_region
          _
        $region28: #{tpu_custom_call.1} parent=11 // pred_fallthru
          _
        // Predicated region
        $region29: #{tpu_custom_call.1} parent=11 // pred_check
          %p370 = pneg %p234
        $region30: #{tpu_custom_call.1} parent=11 // pred_check_branch
          %372 = sbr.rel (%p370) target = $region32
        $region31: #{tpu_custom_call.1} parent=11 // pred_region
          _
        $region32: #{tpu_custom_call.1} parent=11 // pred_fallthru
          _
        // Predicated region
        $region33: #{tpu_custom_call.1} parent=11 // pred_check
          %p373 = pneg %p255
        $region34: #{tpu_custom_call.1} parent=11 // pred_check_branch
          %375 = sbr.rel (%p373) target = $region36
        $region35: #{tpu_custom_call.1} parent=11 // pred_region
          _
        $region36: #{tpu_custom_call.1} parent=11 // pred_fallthru
          _
        // Predicated region
        $region37: #{tpu_custom_call.1} parent=11 // pred_check
          %p376 = pneg %p276
        $region38: #{tpu_custom_call.1} parent=11 // pred_check_branch
          %378 = sbr.rel (%p376) target = $region40
        $region39: #{tpu_custom_call.1} parent=11 // pred_region
          _
        $region40: #{tpu_custom_call.1} parent=11 // pred_fallthru
          _
        // Predicated region
        $region41: #{tpu_custom_call.1} parent=11 // pred_check
          %p379 = pneg %p297
        $region42: #{tpu_custom_call.1} parent=11 // pred_check_branch
          %381 = sbr.rel (%p379) target = $region44
        $region43: #{tpu_custom_call.1} parent=11 // pred_region
          _
        $region44: #{tpu_custom_call.1} parent=11 // pred_fallthru
          _
      $region12: #{tpu_custom_call.1} parent=5 // pred_fallthru
        _
      %p382 = scmp.lt.s32.totalorder %s25, 2
      // Predicated region
      $region45: #{tpu_custom_call.1} parent=5 // pred_check
        %p383 = pneg %p382
      $region46: #{tpu_custom_call.1} parent=5 // pred_check_branch
        %385 = sbr.rel (%p383) target = $region48
      $region47: #{tpu_custom_call.1} parent=5 // pred_region
        // Predicated region
        $region49: #{tpu_custom_call.1} parent=47 // pred_check
          %p386 = pneg %p45
        $region50: #{tpu_custom_call.1} parent=47 // pred_check_branch
          %388 = sbr.rel (%p386) target = $region52
        $region51: #{tpu_custom_call.1} parent=47 // pred_region
          %p389 = scmp.lt.s32.totalorder %s25, 1
          %s390 = scalar_select %p389, %s25, 1
          %s391 = smul.addr %s390, 2
          %s392 = smul.addr %s391, 8
          %s393 = scalar_lea.vmem %s0, %s392
        $region52: #{tpu_custom_call.1} parent=47 // pred_fallthru
          _
        // Predicated region
        $region53: #{tpu_custom_call.1} parent=47 // pred_check
          %p394 = pneg %p71
        $region54: #{tpu_custom_call.1} parent=47 // pred_check_branch
          %396 = sbr.rel (%p394) target = $region56
        $region55: #{tpu_custom_call.1} parent=47 // pred_region
          #allocation10 [shape = 'u32[6]{0}', space=smem, size = 0x18, scoped, tag = 'DMA stride descriptor']
          %s397 = sand.u32 %s61, 1
          %s398 = scalar_lea.sflag [#allocation3], %s397
          %s399 = sand.u32 %s61, 1
          %s400 = smul.addr %s399, 128
          %s401 = scalar_lea.vmem [#allocation2], %s400
          %s403 = ssub.s32 2048, 2048
          %404 = vsyncadd %s398, %s403
          %s405 = smul.addr %s25, 2
          %s406 = smul.addr %s405, 128
          %s407 = scalar_lea.hbm %s1, %s406
          %s409 = sshll.u32 1, 14
          %s410 = sxor.u32 4294967295, %s409
          %s412 = sld [smem:[#allocation0]]
          %s413 = sadd.s32 2, %s412
          %s415 = sshll.u32 7, 26
          %s416 = sxor.u32 4294967295, %s415
          %s417 = sand.u32 0, %s416
          %s418 = sshll.u32 %s413, 26
          %s419 = sor.u32 %s417, %s418
          %s420 = sshll.u32 %s401, 4
          %s421 = int_to_ptr.vmem [resolvable:$true] %s420
          %427 = sst [smem:[#allocation10]] 512
          %s428 = scalar_lea.smem [#allocation10], 1
          %429 = sst [smem:[%s428]] 256
          %s430 = scalar_lea.smem [#allocation10], 2
          %431 = sst [smem:[%s430]] 2
          %s432 = scalar_lea.smem [#allocation10], 3
          %433 = sst [smem:[%s432]] 128
          %s434 = scalar_lea.smem [#allocation10], 4
          %435 = sst [smem:[%s434]] 128
          %s436 = scalar_lea.smem [#allocation10], 5
          %437 = sst [smem:[%s436]] 8
          %439 = dma.general %s407, 2048, %s421, %s398, [#allocation9], [#allocation10], %s419, 0
        $region56: #{tpu_custom_call.1} parent=47 // pred_fallthru
          _
        // Predicated region
        $region57: #{tpu_custom_call.1} parent=47 // pred_check
          %p440 = pneg %p97
        $region58: #{tpu_custom_call.1} parent=47 // pred_check_branch
          %442 = sbr.rel (%p440) target = $region60
        $region59: #{tpu_custom_call.1} parent=47 // pred_region
          %p443 = scmp.lt.s32.totalorder %s25, 1
          %s444 = scalar_select %p443, %s25, 1
          %s445 = scalar_lea.vmem %s2, %s444
        $region60: #{tpu_custom_call.1} parent=47 // pred_fallthru
          _
        // Predicated region
        $region61: #{tpu_custom_call.1} parent=47 // pred_check
          %p446 = pneg %p123
        $region62: #{tpu_custom_call.1} parent=47 // pred_check_branch
          %448 = sbr.rel (%p446) target = $region64
        $region63: #{tpu_custom_call.1} parent=47 // pred_region
          %p449 = scmp.lt.s32.totalorder %s25, 1
          %s450 = scalar_select %p449, %s25, 1
          %s451 = smul.addr %s450, 2
          %s452 = smul.addr %s451, 8
          %s453 = scalar_lea.vmem %s3, %s452
        $region64: #{tpu_custom_call.1} parent=47 // pred_fallthru
          _
      $region48: #{tpu_custom_call.1} parent=5 // pred_fallthru
        _
      %p454 = scmp.le.s32.totalorder 1, %s25
      %p455 = scmp.lt.s32.totalorder %s25, 3
      %p456 = pnand %p454, %p455
      %p457 = pneg %p456
      // Predicated region
      $region65: #{tpu_custom_call.1} parent=5 // pred_check
        _
      $region66: #{tpu_custom_call.1} parent=5 // pred_check_branch
        %459 = sbr.rel (%p456) target = $region68
      $region67: #{tpu_custom_call.1} parent=5 // pred_region
        %s460 = ssub.s32 %s25, 1
        %s461 = sand.u32 %s64, 1
        %s462 = scalar_lea.sflag [#allocation3], %s461
        %s463 = sand.u32 %s64, 1
        %s464 = smul.addr %s463, 128
        %s465 = scalar_lea.vmem [#allocation2], %s464
        // Predicated region
        $region69: #{tpu_custom_call.1} parent=67 // pred_check
          %p466 = pneg %p77
        $region70: #{tpu_custom_call.1} parent=67 // pred_check_branch
          %468 = sbr.rel (%p466) target = $region72
        $region71: #{tpu_custom_call.1} parent=67 // pred_region
          %469 = dma.done %s462, 2048
        $region72: #{tpu_custom_call.1} parent=67 // pred_fallthru
          _
        // Predicated region
        $region73: #{tpu_custom_call.1} parent=67 // pred_check
          %p470 = pneg %p150
        $region74: #{tpu_custom_call.1} parent=67 // pred_check_branch
          %472 = sbr.rel (%p470) target = $region76
        $region75: #{tpu_custom_call.1} parent=67 // pred_region
          %473 = dma.done [#allocation6], 512
        $region76: #{tpu_custom_call.1} parent=67 // pred_fallthru
          _
        // Predicated region
        $region77: #{tpu_custom_call.1} parent=67 // pred_check
          %p474 = pneg %p192
        $region78: #{tpu_custom_call.1} parent=67 // pred_check_branch
          %476 = sbr.rel (%p474) target = $region80
        $region79: #{tpu_custom_call.1} parent=67 // pred_region
          %477 = dma.done [#allocation6], 512
        $region80: #{tpu_custom_call.1} parent=67 // pred_fallthru
          _
        %p478 = scmp.lt.s32.totalorder %s30, 1
        %s479 = scalar_select %p478, %s30, 1
        %s480 = smul.addr %s479, 2
        %s481 = smul.addr %s480, 8
        %s482 = scalar_lea.vmem %s0, %s481
        %p483 = pneg %p51
        %p484 = pneg %p48
        %s485 = sand.u32 %s64, 1
        %s486 = scalar_lea.sflag [#allocation3], %s485
        %s487 = sand.u32 %s64, 1
        %s488 = smul.addr %s487, 128
        %s489 = scalar_lea.vmem [#allocation2], %s488
        %p490 = pneg %p77
        %p491 = pneg %p74
        %p492 = scmp.lt.s32.totalorder %s30, 1
        %s493 = scalar_select %p492, %s30, 1
        %s494 = scalar_lea.vmem %s2, %s493
        %p495 = pneg %p103
        %p496 = pneg %p100
        %p497 = scmp.lt.s32.totalorder %s30, 1
        %s498 = scalar_select %p497, %s30, 1
        %s499 = smul.addr %s498, 2
        %s500 = smul.addr %s499, 8
        %s501 = scalar_lea.vmem %s3, %s500
        %p502 = pneg %p129
        %p503 = pneg %p126
        %p504 = pneg %p150
        %p505 = pneg %p147
        %p506 = pneg %p171
        %p507 = pneg %p168
        %p508 = pneg %p192
        %p509 = pneg %p189
        %p510 = pneg %p213
        %p511 = pneg %p210
        %p512 = pneg %p234
        %p513 = pneg %p231
        %p514 = pneg %p255
        %p515 = pneg %p252
        %p516 = pneg %p276
        %p517 = pneg %p273
        %p518 = pneg %p297
        %p519 = pneg %p294
        %p520 = pneg %p323
        %p521 = pneg %p320
        %s522 = sand.u32 %s310, 1
        %s523 = scalar_lea.sflag [#allocation4], %s522
        %s524 = sand.u32 %s310, 1
        %s525 = scalar_lea.vmem [#allocation8], %s524
        %p526 = scmp.lt.s32.totalorder %s30, 1
        %s527 = scalar_select %p526, %s30, 1
        %s528 = smul.addr %s527, 2
        %s529 = smul.addr %s528, 8
        %s530 = scalar_lea.vmem %s0, %s529
        %p531 = scmp.lt.s32.totalorder %s30, 1
        %s532 = scalar_select %p531, %s30, 1
        %s533 = scalar_lea.vmem %s2, %s532
        %p534 = scmp.lt.s32.totalorder %s30, 1
        %s535 = scalar_select %p534, %s30, 1
        %s536 = smul.addr %s535, 2
        %s537 = smul.addr %s536, 8
        %s538 = scalar_lea.vmem %s3, %s537
        %v540 = vld [vmem:[%s533] sm:$0x1]
        %v541 = vld [vmem:[%s538] sm:$0xff]
        %v542 = vld [vmem:[%s538 + $0x8] sm:$0xff]
        %v544 = vlaneseq
        %v545 = vshrl.u32 %v544, 7
        %v546 = vsub.s32 0, %v545
        %v547 = vrot.slane %v540, %v546
        %550 = vset.pattern.permute.xlu0 0
        %551 = vperm.xlu0 %550, %v541
        %v552 = vpop.permute.xlu0 %551
        %555 = vset.pattern.permute.xlu0 0
        %556 = vperm.xlu0 %555, %v542
        %v557 = vpop.permute.xlu0 %556
        %v559 = vmul.f32 %v547, %v552
        %v560 = vmul.f32 %v547, %v557
        %v561 = vld [vmem:[%s530] sm:$0xff]
        %v562 = vld [vmem:[%s530 + $0x8] sm:$0xff]
        %v563 = vpack.c.bf16 %v562, %v561
        %v564 = vld [vmem:[#allocation5] sm:$0xf]
        %v565 = vld [vmem:[#allocation5 + $0x4] sm:$0xf]
        %v566 = vld [vmem:[#allocation5 + $0x8] sm:$0xf]
        %v567 = vld [vmem:[#allocation5 + $0xc] sm:$0xf]
        %v568 = vld [vmem:[%s5] sm:$0x1]
        %v570 = vlaneseq
        %v571 = vshrl.u32 %v570, 7
        %v572 = vsub.s32 0, %v571
        %v573 = vrot.slane %v568, %v572
        %v579 = vunpack.c.l.b16 %v564
        %v580 = vunpack.c.l.b16 %v565
        %v581 = vunpack.c.l.b16 %v566
        %v582 = vunpack.c.l.b16 %v567
        %v583 = vpack.c.b16 %v580, %v579
        %v584 = vpack.c.b16 %v582, %v581
        %vm587 = vcmask 261120
        %v589 = vsel %vm587, %v563, 0
        %591 = vmatprep.subr.bf16.mxu0 0
        %592 = vmatpush1.bf16.msra.mxu0 %v583
        %593 = vmatprep.subr.bf16.mxu0 0
        %594 = vmatpush1.bf16.msra.mxu0 %v584
        %595 = vmatprep.subr.bf16.mxu0 0
        %596 = vmatpush1.bf16.msra.mxu0 0
        %597 = vmatprep.subr.bf16.mxu0 0
        %598 = vmatpush1.bf16.msra.mxu0 0
        %599 = vmatprep.subr.bf16.mxu0 0
        %600 = vmatpush1.bf16.msra.mxu0 0
        %601 = vmatprep.subr.bf16.mxu0 0
        %602 = vmatpush1.bf16.msra.mxu0 0
        %603 = vmatprep.subr.bf16.mxu0 0
        %604 = vmatpush1.bf16.msra.mxu0 0
        %605 = vmatprep.subr.bf16.mxu0 0
        %606 = vmatpush1.bf16.msra.mxu0 0
        %607 = vmatprep.subr.bf16.mxu0 0
        %608 = vmatpush1.bf16.msra.mxu0 0
        %609 = vmatprep.subr.bf16.mxu0 0
        %610 = vmatpush1.bf16.msra.mxu0 0
        %611 = vmatprep.subr.bf16.mxu0 0
        %612 = vmatpush1.bf16.msra.mxu0 0
        %613 = vmatprep.subr.bf16.mxu0 0
        %614 = vmatpush1.bf16.msra.mxu0 0
        %615 = vmatprep.subr.bf16.mxu0 0
        %616 = vmatpush1.bf16.msra.mxu0 0
        %617 = vmatprep.subr.bf16.mxu0 0
        %618 = vmatpush1.bf16.msra.mxu0 0
        %619 = vmatprep.subr.bf16.mxu0 0
        %620 = vmatpush1.bf16.msra.mxu0 0
        %621 = vmatprep.subr.bf16.mxu0 0
        %622 = vmatpush1.bf16.msra.mxu0 0
        %623 = vmatprep.mubr.bf16.mxu0 0
        %624 = vmatmul.mubr.bf16.gmra.mrb[0].mxu0 %v589
        %v625 = vpop.f32.mrb[0].mxu0
        %v626 = vadd.f32 %v573, %v625
        %v627 = vpop.f32.mrb[0].mxu0
        %v628 = vpop.f32.mrb[0].mxu0
        %v629 = vadd.f32 %v573, %v628
        %v630 = vpop.f32.mrb[0].mxu0
        %631 = vdwg.mxu0
        %v632 = vpack.c.bf16 %v629, %v626
        %634 = vrot.lane.b32.xlu0 %v632, 96
        %v635 = vpop.permute.xlu0 %634
        %vm636 = vcmask 64512
        %v638 = vsel %vm636, %v632, 0
        %v641 = vsel %vm636, %v635, 0
        %643 = vmatprep.subr.bf16.mxu0 0
        %644 = vmatpush1.bf16.xpose.msra.mxu0 %v641
        %645 = vmatprep.subr.bf16.mxu0 0
        %646 = vmatpush1.bf16.xpose.msra.mxu0 0
        %647 = vmatprep.subr.bf16.mxu0 0
        %648 = vmatpush1.bf16.xpose.msra.mxu0 0
        %649 = vmatprep.subr.bf16.mxu0 0
        %650 = vmatpush1.bf16.xpose.msra.mxu0 0
        %651 = vmatprep.subr.bf16.mxu0 0
        %652 = vmatpush1.bf16.xpose.msra.mxu0 0
        %653 = vmatprep.subr.bf16.mxu0 0
        %654 = vmatpush1.bf16.xpose.msra.mxu0 0
        %655 = vmatprep.subr.bf16.mxu0 0
        %656 = vmatpush1.bf16.xpose.msra.mxu0 0
        %657 = vmatprep.subr.bf16.mxu0 0
        %658 = vmatpush1.bf16.xpose.msra.mxu0 0
        %659 = vmatprep.subr.bf16.mxu0 0
        %660 = vmatpush1.bf16.xpose.msra.mxu0 0
        %661 = vmatprep.subr.bf16.mxu0 0
        %662 = vmatpush1.bf16.xpose.msra.mxu0 0
        %663 = vmatprep.subr.bf16.mxu0 0
        %664 = vmatpush1.bf16.xpose.msra.mxu0 0
        %665 = vmatprep.subr.bf16.mxu0 0
        %666 = vmatpush1.bf16.xpose.msra.mxu0 0
        %667 = vmatprep.subr.bf16.mxu0 0
        %668 = vmatpush1.bf16.xpose.msra.mxu0 0
        %669 = vmatprep.subr.bf16.mxu0 0
        %670 = vmatpush1.bf16.xpose.msra.mxu0 0
        %671 = vmatprep.subr.bf16.mxu0 0
        %672 = vmatpush1.bf16.xpose.msra.mxu0 0
        %673 = vmatprep.subr.bf16.mxu0 0
        %674 = vmatpush1.bf16.xpose.msra.mxu0 0
        %675 = vmatprep.mubr.bf16.mxu0 0
        %676 = vmatmul.mubr.bf16.gmra.mrb[0].mxu0 %v638
        %v677 = vpop.f32.mrb[0].mxu0
        %v678 = vadd.f32 0.0, %v677
        %v679 = vpop.f32.mrb[0].mxu0
        %v680 = vpop.f32.mrb[0].mxu0
        %v681 = vadd.f32 0.0, %v680
        %v682 = vpop.f32.mrb[0].mxu0
        %683 = vdwg.mxu0
        %v684 = vmul.f32 %v678, 0.35355338
        %v685 = vmul.f32 %v681, 0.35355338
        %vm686 = vcmp.gt.f32.partialorder %v559, 0.5
        %vm687 = vcmp.gt.f32.partialorder %v560, 0.5
        %v688 = vsel %vm686, %v684, -1e+30
        %v689 = vsel %vm687, %v685, -1e+30
        %vm690 = vcmask 130048
        %v691 = vsel %vm690, %v688, -inf
        %692 = vmax.xlane.f32.xlu0 %v691
        %v693 = vpop.xlane.xlu0 %692
        %v694 = vsel %vm690, %v689, -inf
        %695 = vmax.xlane.f32.xlu0 %v694
        %v696 = vpop.xlane.xlu0 %695
        %vm697 = vcmp.le.f32.partialorder %v693, -5e+29
        %vm698 = vcmp.le.f32.partialorder %v696, -5e+29
        %v699 = vsel %vm697, 1, 0
        %v700 = vsel %vm698, 1, 0
        %vm701 = vcmp.eq.s32.totalorder %v699, 1
        %vm702 = vcmp.eq.s32.totalorder %v700, 1
        %v703 = vsel %vm701, 0.0, %v688
        %v704 = vsel %vm702, 0.0, %v689
        %v705 = vsel %vm697, 0.0, %v693
        %v706 = vsel %vm698, 0.0, %v696
        %v707 = vsub.f32 %v703, %v705
        %v708 = vsub.f32 %v704, %v706
        %v709 = vmul.f32 %v707, 1.442695
        %v710 = vpow.pop %v709
        %v711 = vmul.f32 %v708, 1.442695
        %v712 = vpow.pop %v711
        %v713 = vsel %vm690, %v710, 0.0
        %714 = vadd.xlane.f32.xlu0 %v713
        %v715 = vpop.xlane.xlu0 %714
        %v716 = vsel %vm690, %v712, 0.0
        %717 = vadd.xlane.f32.xlu0 %v716
        %v718 = vpop.xlane.xlu0 %717
        %v719 = vrcp.pop %v715
        %v720 = vrcp.pop %v718
        %v721 = vmul.f32 %v710, %v719
        %v722 = vmul.f32 %v712, %v720
        %v723 = vld [vmem:[%s465] sm:$0xff]
        %v724 = vld [vmem:[%s465 + $0x8] sm:$0xff]
        %v725 = vsel %vm686, %v723, -1e+30
        %v726 = vsel %vm687, %v724, -1e+30
        %v727 = vsel %vm690, %v725, -inf
        %728 = vmax.xlane.f32.xlu0 %v727
        %v729 = vpop.xlane.xlu0 %728
        %v730 = vsel %vm690, %v726, -inf
        %731 = vmax.xlane.f32.xlu0 %v730
        %v732 = vpop.xlane.xlu0 %731
        %vm733 = vcmp.le.f32.partialorder %v729, -5e+29
        %vm734 = vcmp.le.f32.partialorder %v732, -5e+29
        %v735 = vsel %vm733, 1, 0
        %v736 = vsel %vm734, 1, 0
        %vm737 = vcmp.eq.s32.totalorder %v735, 1
        %vm738 = vcmp.eq.s32.totalorder %v736, 1
        %v739 = vsel %vm737, 0.0, %v725
        %v740 = vsel %vm738, 0.0, %v726
        %v741 = vsel %vm733, 0.0, %v729
        %v742 = vsel %vm734, 0.0, %v732
        %v743 = vsub.f32 %v739, %v741
        %v744 = vsub.f32 %v740, %v742
        %v745 = vmul.f32 %v743, 1.442695
        %v746 = vpow.pop %v745
        %v747 = vmul.f32 %v744, 1.442695
        %v748 = vpow.pop %v747
        %v749 = vsel %vm690, %v746, 0.0
        %750 = vadd.xlane.f32.xlu0 %v749
        %v751 = vpop.xlane.xlu0 %750
        %v752 = vsel %vm690, %v748, 0.0
        %753 = vadd.xlane.f32.xlu0 %v752
        %v754 = vpop.xlane.xlu0 %753
        %v755 = vrcp.pop %v751
        %v756 = vrcp.pop %v754
        %v757 = vmul.f32 %v746, %v755
        %v758 = vmul.f32 %v748, %v756
        %v759 = vadd.f32 %v721, %v757
        %v760 = vadd.f32 %v722, %v758
        %v761 = vsel %vm690, %v759, 0.0
        %762 = vadd.xlane.f32.xlu0 %v761
        %v763 = vpop.xlane.xlu0 %762
        %v764 = vsel %vm690, %v760, 0.0
        %765 = vadd.xlane.f32.xlu0 %v764
        %v766 = vpop.xlane.xlu0 %765
        %v767 = vrcp.pop %v763
        %v768 = vmul.f32 %v759, %v767
        %v769 = vrcp.pop %v766
        %v770 = vmul.f32 %v760, %v769
        %v771 = vpack.c.bf16 %v770, %v768
        %772 = vrot.lane.b32.xlu0 %v632, 64
        %v773 = vpop.permute.xlu0 %772
        %v776 = vsel %vm690, %v771, 0
        %778 = vmatprep.subr.bf16.mxu0 0
        %779 = vmatpush1.bf16.msra.mxu0 %v773
        %780 = vmatprep.subr.bf16.mxu0 0
        %781 = vmatpush1.bf16.msra.mxu0 0
        %782 = vmatprep.subr.bf16.mxu0 0
        %783 = vmatpush1.bf16.msra.mxu0 0
        %784 = vmatprep.subr.bf16.mxu0 0
        %785 = vmatpush1.bf16.msra.mxu0 0
        %786 = vmatprep.subr.bf16.mxu0 0
        %787 = vmatpush1.bf16.msra.mxu0 0
        %788 = vmatprep.subr.bf16.mxu0 0
        %789 = vmatpush1.bf16.msra.mxu0 0
        %790 = vmatprep.subr.bf16.mxu0 0
        %791 = vmatpush1.bf16.msra.mxu0 0
        %792 = vmatprep.subr.bf16.mxu0 0
        %793 = vmatpush1.bf16.msra.mxu0 0
        %794 = vmatprep.subr.bf16.mxu0 0
        %795 = vmatpush1.bf16.msra.mxu0 0
        %796 = vmatprep.subr.bf16.mxu0 0
        %797 = vmatpush1.bf16.msra.mxu0 0
        %798 = vmatprep.subr.bf16.mxu0 0
        %799 = vmatpush1.bf16.msra.mxu0 0
        %800 = vmatprep.subr.bf16.mxu0 0
        %801 = vmatpush1.bf16.msra.mxu0 0
        %802 = vmatprep.subr.bf16.mxu0 0
        %803 = vmatpush1.bf16.msra.mxu0 0
        %804 = vmatprep.subr.bf16.mxu0 0
        %805 = vmatpush1.bf16.msra.mxu0 0
        %806 = vmatprep.subr.bf16.mxu0 0
        %807 = vmatpush1.bf16.msra.mxu0 0
        %808 = vmatprep.subr.bf16.mxu0 0
        %809 = vmatpush1.bf16.msra.mxu0 0
        %810 = vmatprep.mubr.bf16.mxu0 0
        %811 = vmatmul.mubr.bf16.gmra.mrb[0].mxu0 %v776
        %v812 = vpop.f32.mrb[0].mxu0
        %v813 = vadd.f32 0.0, %v812
        %v814 = vpop.f32.mrb[0].mxu0
        %v815 = vpop.f32.mrb[0].mxu0
        %v816 = vadd.f32 0.0, %v815
        %v817 = vpop.f32.mrb[0].mxu0
        %818 = vdwg.mxu0
        %819 = vrot.lane.b32.xlu0 %v632, 120
        %v820 = vpop.permute.xlu0 %819
        %821 = vrot.lane.b32.xlu0 %v632, 88
        %v822 = vpop.permute.xlu0 %821
        %v824 = vsel %vm636, %v820, 0
        %v827 = vsel %vm636, %v822, 0
        %829 = vmatprep.subr.bf16.mxu0 0
        %830 = vmatpush1.bf16.xpose.msra.mxu0 %v827
        %831 = vmatprep.subr.bf16.mxu0 0
        %832 = vmatpush1.bf16.xpose.msra.mxu0 0
        %833 = vmatprep.subr.bf16.mxu0 0
        %834 = vmatpush1.bf16.xpose.msra.mxu0 0
        %835 = vmatprep.subr.bf16.mxu0 0
        %836 = vmatpush1.bf16.xpose.msra.mxu0 0
        %837 = vmatprep.subr.bf16.mxu0 0
        %838 = vmatpush1.bf16.xpose.msra.mxu0 0
        %839 = vmatprep.subr.bf16.mxu0 0
        %840 = vmatpush1.bf16.xpose.msra.mxu0 0
        %841 = vmatprep.subr.bf16.mxu0 0
        %842 = vmatpush1.bf16.xpose.msra.mxu0 0
        %843 = vmatprep.subr.bf16.mxu0 0
        %844 = vmatpush1.bf16.xpose.msra.mxu0 0
        %845 = vmatprep.subr.bf16.mxu0 0
        %846 = vmatpush1.bf16.xpose.msra.mxu0 0
        %847 = vmatprep.subr.bf16.mxu0 0
        %848 = vmatpush1.bf16.xpose.msra.mxu0 0
        %849 = vmatprep.subr.bf16.mxu0 0
        %850 = vmatpush1.bf16.xpose.msra.mxu0 0
        %851 = vmatprep.subr.bf16.mxu0 0
        %852 = vmatpush1.bf16.xpose.msra.mxu0 0
        %853 = vmatprep.subr.bf16.mxu0 0
        %854 = vmatpush1.bf16.xpose.msra.mxu0 0
        %855 = vmatprep.subr.bf16.mxu0 0
        %856 = vmatpush1.bf16.xpose.msra.mxu0 0
        %857 = vmatprep.subr.bf16.mxu0 0
        %858 = vmatpush1.bf16.xpose.msra.mxu0 0
        %859 = vmatprep.subr.bf16.mxu0 0
        %860 = vmatpush1.bf16.xpose.msra.mxu0 0
        %861 = vmatprep.mubr.bf16.mxu0 0
        %862 = vmatmul.mubr.bf16.gmra.mrb[0].mxu0 %v824
        %v863 = vpop.f32.mrb[0].mxu0
        %v864 = vadd.f32 0.0, %v863
        %v865 = vpop.f32.mrb[0].mxu0
        %v866 = vpop.f32.mrb[0].mxu0
        %v867 = vadd.f32 0.0, %v866
        %v868 = vpop.f32.mrb[0].mxu0
        %869 = vdwg.mxu0
        %v870 = vmul.f32 %v864, 0.35355338
        %v871 = vmul.f32 %v867, 0.35355338
        %v872 = vsel %vm686, %v870, -1e+30
        %v873 = vsel %vm687, %v871, -1e+30
        %v874 = vsel %vm690, %v872, -inf
        %875 = vmax.xlane.f32.xlu0 %v874
        %v876 = vpop.xlane.xlu0 %875
        %v877 = vsel %vm690, %v873, -inf
        %878 = vmax.xlane.f32.xlu0 %v877
        %v879 = vpop.xlane.xlu0 %878
        %vm880 = vcmp.le.f32.partialorder %v876, -5e+29
        %vm881 = vcmp.le.f32.partialorder %v879, -5e+29
        %v882 = vsel %vm880, 1, 0
        %v883 = vsel %vm881, 1, 0
        %vm884 = vcmp.eq.s32.totalorder %v882, 1
        %vm885 = vcmp.eq.s32.totalorder %v883, 1
        %v886 = vsel %vm884, 0.0, %v872
        %v887 = vsel %vm885, 0.0, %v873
        %v888 = vsel %vm880, 0.0, %v876
        %v889 = vsel %vm881, 0.0, %v879
        %v890 = vsub.f32 %v886, %v888
        %v891 = vsub.f32 %v887, %v889
        %v892 = vmul.f32 %v890, 1.442695
        %v893 = vpow.pop %v892
        %v894 = vmul.f32 %v891, 1.442695
        %v895 = vpow.pop %v894
        %v896 = vsel %vm690, %v893, 0.0
        %897 = vadd.xlane.f32.xlu0 %v896
        %v898 = vpop.xlane.xlu0 %897
        %v899 = vsel %vm690, %v895, 0.0
        %900 = vadd.xlane.f32.xlu0 %v899
        %v901 = vpop.xlane.xlu0 %900
        %v902 = vrcp.pop %v898
        %v903 = vrcp.pop %v901
        %v904 = vmul.f32 %v893, %v902
        %v905 = vmul.f32 %v895, %v903
        %s906 = scalar_lea.vmem %s465, 16 [#allocation2]
        %v907 = vld [vmem:[%s906] sm:$0xff]
        %v908 = vld [vmem:[%s906 + $0x8] sm:$0xff]
        %v909 = vsel %vm686, %v907, -1e+30
        %v910 = vsel %vm687, %v908, -1e+30
        %v911 = vsel %vm690, %v909, -inf
        %912 = vmax.xlane.f32.xlu0 %v911
        %v913 = vpop.xlane.xlu0 %912
        %v914 = vsel %vm690, %v910, -inf
        %915 = vmax.xlane.f32.xlu0 %v914
        %v916 = vpop.xlane.xlu0 %915
        %vm917 = vcmp.le.f32.partialorder %v913, -5e+29
        %vm918 = vcmp.le.f32.partialorder %v916, -5e+29
        %v919 = vsel %vm917, 1, 0
        %v920 = vsel %vm918, 1, 0
        %vm921 = vcmp.eq.s32.totalorder %v919, 1
        %vm922 = vcmp.eq.s32.totalorder %v920, 1
        %v923 = vsel %vm921, 0.0, %v909
        %v924 = vsel %vm922, 0.0, %v910
        %v925 = vsel %vm917, 0.0, %v913
        %v926 = vsel %vm918, 0.0, %v916
        %v927 = vsub.f32 %v923, %v925
        %v928 = vsub.f32 %v924, %v926
        %v929 = vmul.f32 %v927, 1.442695
        %v930 = vpow.pop %v929
        %v931 = vmul.f32 %v928, 1.442695
        %v932 = vpow.pop %v931
        %v933 = vsel %vm690, %v930, 0.0
        %934 = vadd.xlane.f32.xlu0 %v933
        %v935 = vpop.xlane.xlu0 %934
        %v936 = vsel %vm690, %v932, 0.0
        %937 = vadd.xlane.f32.xlu0 %v936
        %v938 = vpop.xlane.xlu0 %937
        %v939 = vrcp.pop %v935
        %v940 = vrcp.pop %v938
        %v941 = vmul.f32 %v930, %v939
        %v942 = vmul.f32 %v932, %v940
        %v943 = vadd.f32 %v904, %v941
        %v944 = vadd.f32 %v905, %v942
        %v945 = vsel %vm690, %v943, 0.0
        %946 = vadd.xlane.f32.xlu0 %v945
        %v947 = vpop.xlane.xlu0 %946
        %v948 = vsel %vm690, %v944, 0.0
        %949 = vadd.xlane.f32.xlu0 %v948
        %v950 = vpop.xlane.xlu0 %949
        %v951 = vrcp.pop %v947
        %v952 = vmul.f32 %v943, %v951
        %v953 = vrcp.pop %v950
        %v954 = vmul.f32 %v944, %v953
        %v955 = vpack.c.bf16 %v954, %v952
        %956 = vrot.lane.b32.xlu0 %v632, 56
        %v957 = vpop.permute.xlu0 %956
        %v960 = vsel %vm690, %v955, 0
        %962 = vmatprep.subr.bf16.mxu0 0
        %963 = vmatpush1.bf16.msra.mxu0 %v957
        %964 = vmatprep.subr.bf16.mxu0 0
        %965 = vmatpush1.bf16.msra.mxu0 0
        %966 = vmatprep.subr.bf16.mxu0 0
        %967 = vmatpush1.bf16.msra.mxu0 0
        %968 = vmatprep.subr.bf16.mxu0 0
        %969 = vmatpush1.bf16.msra.mxu0 0
        %970 = vmatprep.subr.bf16.mxu0 0
        %971 = vmatpush1.bf16.msra.mxu0 0
        %972 = vmatprep.subr.bf16.mxu0 0
        %973 = vmatpush1.bf16.msra.mxu0 0
        %974 = vmatprep.subr.bf16.mxu0 0
        %975 = vmatpush1.bf16.msra.mxu0 0
        %976 = vmatprep.subr.bf16.mxu0 0
        %977 = vmatpush1.bf16.msra.mxu0 0
        %978 = vmatprep.subr.bf16.mxu0 0
        %979 = vmatpush1.bf16.msra.mxu0 0
        %980 = vmatprep.subr.bf16.mxu0 0
        %981 = vmatpush1.bf16.msra.mxu0 0
        %982 = vmatprep.subr.bf16.mxu0 0
        %983 = vmatpush1.bf16.msra.mxu0 0
        %984 = vmatprep.subr.bf16.mxu0 0
        %985 = vmatpush1.bf16.msra.mxu0 0
        %986 = vmatprep.subr.bf16.mxu0 0
        %987 = vmatpush1.bf16.msra.mxu0 0
        %988 = vmatprep.subr.bf16.mxu0 0
        %989 = vmatpush1.bf16.msra.mxu0 0
        %990 = vmatprep.subr.bf16.mxu0 0
        %991 = vmatpush1.bf16.msra.mxu0 0
        %992 = vmatprep.subr.bf16.mxu0 0
        %993 = vmatpush1.bf16.msra.mxu0 0
        %994 = vmatprep.mubr.bf16.mxu0 0
        %995 = vmatmul.mubr.bf16.gmra.mrb[0].mxu0 %v960
        %v996 = vpop.f32.mrb[0].mxu0
        %v997 = vadd.f32 0.0, %v996
        %v998 = vpop.f32.mrb[0].mxu0
        %v999 = vpop.f32.mrb[0].mxu0
        %v1000 = vadd.f32 0.0, %v999
        %v1001 = vpop.f32.mrb[0].mxu0
        %1002 = vdwg.mxu0
        %1003 = vrot.lane.b32.xlu0 %v632, 112
        %v1004 = vpop.permute.xlu0 %1003
        %1005 = vrot.lane.b32.xlu0 %v632, 80
        %v1006 = vpop.permute.xlu0 %1005
        %v1008 = vsel %vm636, %v1004, 0
        %v1011 = vsel %vm636, %v1006, 0
        %1013 = vmatprep.subr.bf16.mxu0 0
        %1014 = vmatpush1.bf16.xpose.msra.mxu0 %v1011
        %1015 = vmatprep.subr.bf16.mxu0 0
        %1016 = vmatpush1.bf16.xpose.msra.mxu0 0
        %1017 = vmatprep.subr.bf16.mxu0 0
        %1018 = vmatpush1.bf16.xpose.msra.mxu0 0
        %1019 = vmatprep.subr.bf16.mxu0 0
        %1020 = vmatpush1.bf16.xpose.msra.mxu0 0
        %1021 = vmatprep.subr.bf16.mxu0 0
        %1022 = vmatpush1.bf16.xpose.msra.mxu0 0
        %1023 = vmatprep.subr.bf16.mxu0 0
        %1024 = vmatpush1.bf16.xpose.msra.mxu0 0
        %1025 = vmatprep.subr.bf16.mxu0 0
        %1026 = vmatpush1.bf16.xpose.msra.mxu0 0
        %1027 = vmatprep.subr.bf16.mxu0 0
        %1028 = vmatpush1.bf16.xpose.msra.mxu0 0
        %1029 = vmatprep.subr.bf16.mxu0 0
        %1030 = vmatpush1.bf16.xpose.msra.mxu0 0
        %1031 = vmatprep.subr.bf16.mxu0 0
        %1032 = vmatpush1.bf16.xpose.msra.mxu0 0
        %1033 = vmatprep.subr.bf16.mxu0 0
        %1034 = vmatpush1.bf16.xpose.msra.mxu0 0
        %1035 = vmatprep.subr.bf16.mxu0 0
        %1036 = vmatpush1.bf16.xpose.msra.mxu0 0
        %1037 = vmatprep.subr.bf16.mxu0 0
        %1038 = vmatpush1.bf16.xpose.msra.mxu0 0
        %1039 = vmatprep.subr.bf16.mxu0 0
        %1040 = vmatpush1.bf16.xpose.msra.mxu0 0
        %1041 = vmatprep.subr.bf16.mxu0 0
        %1042 = vmatpush1.bf16.xpose.msra.mxu0 0
        %1043 = vmatprep.subr.bf16.mxu0 0
        %1044 = vmatpush1.bf16.xpose.msra.mxu0 0
        %1045 = vmatprep.mubr.bf16.mxu0 0
        %1046 = vmatmul.mubr.bf16.gmra.mrb[0].mxu0 %v1008
        %v1047 = vpop.f32.mrb[0].mxu0
        %v1048 = vadd.f32 0.0, %v1047
        %v1049 = vpop.f32.mrb[0].mxu0
        %v1050 = vpop.f32.mrb[0].mxu0
        %v1051 = vadd.f32 0.0, %v1050
        %v1052 = vpop.f32.mrb[0].mxu0
        %1053 = vdwg.mxu0
        %v1054 = vmul.f32 %v1048, 0.35355338
        %v1055 = vmul.f32 %v1051, 0.35355338
        %v1056 = vsel %vm686, %v1054, -1e+30
        %v1057 = vsel %vm687, %v1055, -1e+30
        %v1058 = vsel %vm690, %v1056, -inf
        %1059 = vmax.xlane.f32.xlu0 %v1058
        %v1060 = vpop.xlane.xlu0 %1059
        %v1061 = vsel %vm690, %v1057, -inf
        %1062 = vmax.xlane.f32.xlu0 %v1061
        %v1063 = vpop.xlane.xlu0 %1062
        %vm1064 = vcmp.le.f32.partialorder %v1060, -5e+29
        %vm1065 = vcmp.le.f32.partialorder %v1063, -5e+29
        %v1066 = vsel %vm1064, 1, 0
        %v1067 = vsel %vm1065, 1, 0
        %vm1068 = vcmp.eq.s32.totalorder %v1066, 1
        %vm1069 = vcmp.eq.s32.totalorder %v1067, 1
        %v1070 = vsel %vm1068, 0.0, %v1056
        %v1071 = vsel %vm1069, 0.0, %v1057
        %v1072 = vsel %vm1064, 0.0, %v1060
        %v1073 = vsel %vm1065, 0.0, %v1063
        %v1074 = vsub.f32 %v1070, %v1072
        %v1075 = vsub.f32 %v1071, %v1073
        %v1076 = vmul.f32 %v1074, 1.442695
        %v1077 = vpow.pop %v1076
        %v1078 = vmul.f32 %v1075, 1.442695
        %v1079 = vpow.pop %v1078
        %v1080 = vsel %vm690, %v1077, 0.0
        %1081 = vadd.xlane.f32.xlu0 %v1080
        %v1082 = vpop.xlane.xlu0 %1081
        %v1083 = vsel %vm690, %v1079, 0.0
        %1084 = vadd.xlane.f32.xlu0 %v1083
        %v1085 = vpop.xlane.xlu0 %1084
        %v1086 = vrcp.pop %v1082
        %v1087 = vrcp.pop %v1085
        %v1088 = vmul.f32 %v1077, %v1086
        %v1089 = vmul.f32 %v1079, %v1087
        %s1090 = scalar_lea.vmem %s465, 32 [#allocation2]
        %v1091 = vld [vmem:[%s1090] sm:$0xff]
        %v1092 = vld [vmem:[%s1090 + $0x8] sm:$0xff]
        %v1093 = vsel %vm686, %v1091, -1e+30
        %v1094 = vsel %vm687, %v1092, -1e+30
        %v1095 = vsel %vm690, %v1093, -inf
        %1096 = vmax.xlane.f32.xlu0 %v1095
        %v1097 = vpop.xlane.xlu0 %1096
        %v1098 = vsel %vm690, %v1094, -inf
        %1099 = vmax.xlane.f32.xlu0 %v1098
        %v1100 = vpop.xlane.xlu0 %1099
        %vm1101 = vcmp.le.f32.partialorder %v1097, -5e+29
        %vm1102 = vcmp.le.f32.partialorder %v1100, -5e+29
        %v1103 = vsel %vm1101, 1, 0
        %v1104 = vsel %vm1102, 1, 0
        %vm1105 = vcmp.eq.s32.totalorder %v1103, 1
        %vm1106 = vcmp.eq.s32.totalorder %v1104, 1
        %v1107 = vsel %vm1105, 0.0, %v1093
        %v1108 = vsel %vm1106, 0.0, %v1094
        %v1109 = vsel %vm1101, 0.0, %v1097
        %v1110 = vsel %vm1102, 0.0, %v1100
        %v1111 = vsub.f32 %v1107, %v1109
        %v1112 = vsub.f32 %v1108, %v1110
        %v1113 = vmul.f32 %v1111, 1.442695
        %v1114 = vpow.pop %v1113
        %v1115 = vmul.f32 %v1112, 1.442695
        %v1116 = vpow.pop %v1115
        %v1117 = vsel %vm690, %v1114, 0.0
        %1118 = vadd.xlane.f32.xlu0 %v1117
        %v1119 = vpop.xlane.xlu0 %1118
        %v1120 = vsel %vm690, %v1116, 0.0
        %1121 = vadd.xlane.f32.xlu0 %v1120
        %v1122 = vpop.xlane.xlu0 %1121
        %v1123 = vrcp.pop %v1119
        %v1124 = vrcp.pop %v1122
        %v1125 = vmul.f32 %v1114, %v1123
        %v1126 = vmul.f32 %v1116, %v1124
        %v1127 = vadd.f32 %v1088, %v1125
        %v1128 = vadd.f32 %v1089, %v1126
        %v1129 = vsel %vm690, %v1127, 0.0
        %1130 = vadd.xlane.f32.xlu0 %v1129
        %v1131 = vpop.xlane.xlu0 %1130
        %v1132 = vsel %vm690, %v1128, 0.0
        %1133 = vadd.xlane.f32.xlu0 %v1132
        %v1134 = vpop.xlane.xlu0 %1133
        %v1135 = vrcp.pop %v1131
        %v1136 = vmul.f32 %v1127, %v1135
        %v1137 = vrcp.pop %v1134
        %v1138 = vmul.f32 %v1128, %v1137
        %v1139 = vpack.c.bf16 %v1138, %v1136
        %1140 = vrot.lane.b32.xlu0 %v632, 48
        %v1141 = vpop.permute.xlu0 %1140
        %v1144 = vsel %vm690, %v1139, 0
        %1146 = vmatprep.subr.bf16.mxu0 0
        %1147 = vmatpush1.bf16.msra.mxu0 %v1141
        %1148 = vmatprep.subr.bf16.mxu0 0
        %1149 = vmatpush1.bf16.msra.mxu0 0
        %1150 = vmatprep.subr.bf16.mxu0 0
        %1151 = vmatpush1.bf16.msra.mxu0 0
        %1152 = vmatprep.subr.bf16.mxu0 0
        %1153 = vmatpush1.bf16.msra.mxu0 0
        %1154 = vmatprep.subr.bf16.mxu0 0
        %1155 = vmatpush1.bf16.msra.mxu0 0
        %1156 = vmatprep.subr.bf16.mxu0 0
        %1157 = vmatpush1.bf16.msra.mxu0 0
        %1158 = vmatprep.subr.bf16.mxu0 0
        %1159 = vmatpush1.bf16.msra.mxu0 0
        %1160 = vmatprep.subr.bf16.mxu0 0
        %1161 = vmatpush1.bf16.msra.mxu0 0
        %1162 = vmatprep.subr.bf16.mxu0 0
        %1163 = vmatpush1.bf16.msra.mxu0 0
        %1164 = vmatprep.subr.bf16.mxu0 0
        %1165 = vmatpush1.bf16.msra.mxu0 0
        %1166 = vmatprep.subr.bf16.mxu0 0
        %1167 = vmatpush1.bf16.msra.mxu0 0
        %1168 = vmatprep.subr.bf16.mxu0 0
        %1169 = vmatpush1.bf16.msra.mxu0 0
        %1170 = vmatprep.subr.bf16.mxu0 0
        %1171 = vmatpush1.bf16.msra.mxu0 0
        %1172 = vmatprep.subr.bf16.mxu0 0
        %1173 = vmatpush1.bf16.msra.mxu0 0
        %1174 = vmatprep.subr.bf16.mxu0 0
        %1175 = vmatpush1.bf16.msra.mxu0 0
        %1176 = vmatprep.subr.bf16.mxu0 0
        %1177 = vmatpush1.bf16.msra.mxu0 0
        %1178 = vmatprep.mubr.bf16.mxu0 0
        %1179 = vmatmul.mubr.bf16.gmra.mrb[0].mxu0 %v1144
        %v1180 = vpop.f32.mrb[0].mxu0
        %v1181 = vadd.f32 0.0, %v1180
        %v1182 = vpop.f32.mrb[0].mxu0
        %v1183 = vpop.f32.mrb[0].mxu0
        %v1184 = vadd.f32 0.0, %v1183
        %v1185 = vpop.f32.mrb[0].mxu0
        %1186 = vdwg.mxu0
        %1187 = vrot.lane.b32.xlu0 %v632, 104
        %v1188 = vpop.permute.xlu0 %1187
        %1189 = vrot.lane.b32.xlu0 %v632, 72
        %v1190 = vpop.permute.xlu0 %1189
        %v1192 = vsel %vm636, %v1188, 0
        %v1195 = vsel %vm636, %v1190, 0
        %1197 = vmatprep.subr.bf16.mxu0 0
        %1198 = vmatpush1.bf16.xpose.msra.mxu0 %v1195
        %1199 = vmatprep.subr.bf16.mxu0 0
        %1200 = vmatpush1.bf16.xpose.msra.mxu0 0
        %1201 = vmatprep.subr.bf16.mxu0 0
        %1202 = vmatpush1.bf16.xpose.msra.mxu0 0
        %1203 = vmatprep.subr.bf16.mxu0 0
        %1204 = vmatpush1.bf16.xpose.msra.mxu0 0
        %1205 = vmatprep.subr.bf16.mxu0 0
        %1206 = vmatpush1.bf16.xpose.msra.mxu0 0
        %1207 = vmatprep.subr.bf16.mxu0 0
        %1208 = vmatpush1.bf16.xpose.msra.mxu0 0
        %1209 = vmatprep.subr.bf16.mxu0 0
        %1210 = vmatpush1.bf16.xpose.msra.mxu0 0
        %1211 = vmatprep.subr.bf16.mxu0 0
        %1212 = vmatpush1.bf16.xpose.msra.mxu0 0
        %1213 = vmatprep.subr.bf16.mxu0 0
        %1214 = vmatpush1.bf16.xpose.msra.mxu0 0
        %1215 = vmatprep.subr.bf16.mxu0 0
        %1216 = vmatpush1.bf16.xpose.msra.mxu0 0
        %1217 = vmatprep.subr.bf16.mxu0 0
        %1218 = vmatpush1.bf16.xpose.msra.mxu0 0
        %1219 = vmatprep.subr.bf16.mxu0 0
        %1220 = vmatpush1.bf16.xpose.msra.mxu0 0
        %1221 = vmatprep.subr.bf16.mxu0 0
        %1222 = vmatpush1.bf16.xpose.msra.mxu0 0
        %1223 = vmatprep.subr.bf16.mxu0 0
        %1224 = vmatpush1.bf16.xpose.msra.mxu0 0
        %1225 = vmatprep.subr.bf16.mxu0 0
        %1226 = vmatpush1.bf16.xpose.msra.mxu0 0
        %1227 = vmatprep.subr.bf16.mxu0 0
        %1228 = vmatpush1.bf16.xpose.msra.mxu0 0
        %1229 = vmatprep.mubr.bf16.mxu0 0
        %1230 = vmatmul.mubr.bf16.gmra.mrb[0].mxu0 %v1192
        %v1231 = vpop.f32.mrb[0].mxu0
        %v1232 = vadd.f32 0.0, %v1231
        %v1233 = vpop.f32.mrb[0].mxu0
        %v1234 = vpop.f32.mrb[0].mxu0
        %v1235 = vadd.f32 0.0, %v1234
        %v1236 = vpop.f32.mrb[0].mxu0
        %1237 = vdwg.mxu0
        %v1238 = vmul.f32 %v1232, 0.35355338
        %v1239 = vmul.f32 %v1235, 0.35355338
        %v1240 = vsel %vm686, %v1238, -1e+30
        %v1241 = vsel %vm687, %v1239, -1e+30
        %v1242 = vsel %vm690, %v1240, -inf
        %1243 = vmax.xlane.f32.xlu0 %v1242
        %v1244 = vpop.xlane.xlu0 %1243
        %v1245 = vsel %vm690, %v1241, -inf
        %1246 = vmax.xlane.f32.xlu0 %v1245
        %v1247 = vpop.xlane.xlu0 %1246
        %vm1248 = vcmp.le.f32.partialorder %v1244, -5e+29
        %vm1249 = vcmp.le.f32.partialorder %v1247, -5e+29
        %v1250 = vsel %vm1248, 1, 0
        %v1251 = vsel %vm1249, 1, 0
        %vm1252 = vcmp.eq.s32.totalorder %v1250, 1
        %vm1253 = vcmp.eq.s32.totalorder %v1251, 1
        %v1254 = vsel %vm1252, 0.0, %v1240
        %v1255 = vsel %vm1253, 0.0, %v1241
        %v1256 = vsel %vm1248, 0.0, %v1244
        %v1257 = vsel %vm1249, 0.0, %v1247
        %v1258 = vsub.f32 %v1254, %v1256
        %v1259 = vsub.f32 %v1255, %v1257
        %v1260 = vmul.f32 %v1258, 1.442695
        %v1261 = vpow.pop %v1260
        %v1262 = vmul.f32 %v1259, 1.442695
        %v1263 = vpow.pop %v1262
        %v1264 = vsel %vm690, %v1261, 0.0
        %1265 = vadd.xlane.f32.xlu0 %v1264
        %v1266 = vpop.xlane.xlu0 %1265
        %v1267 = vsel %vm690, %v1263, 0.0
        %1268 = vadd.xlane.f32.xlu0 %v1267
        %v1269 = vpop.xlane.xlu0 %1268
        %v1270 = vrcp.pop %v1266
        %v1271 = vrcp.pop %v1269
        %v1272 = vmul.f32 %v1261, %v1270
        %v1273 = vmul.f32 %v1263, %v1271
        %s1274 = scalar_lea.vmem %s465, 48 [#allocation2]
        %v1275 = vld [vmem:[%s1274] sm:$0xff]
        %v1276 = vld [vmem:[%s1274 + $0x8] sm:$0xff]
        %v1277 = vsel %vm686, %v1275, -1e+30
        %v1278 = vsel %vm687, %v1276, -1e+30
        %v1279 = vsel %vm690, %v1277, -inf
        %1280 = vmax.xlane.f32.xlu0 %v1279
        %v1281 = vpop.xlane.xlu0 %1280
        %v1282 = vsel %vm690, %v1278, -inf
        %1283 = vmax.xlane.f32.xlu0 %v1282
        %v1284 = vpop.xlane.xlu0 %1283
        %vm1285 = vcmp.le.f32.partialorder %v1281, -5e+29
        %vm1286 = vcmp.le.f32.partialorder %v1284, -5e+29
        %v1287 = vsel %vm1285, 1, 0
        %v1288 = vsel %vm1286, 1, 0
        %vm1289 = vcmp.eq.s32.totalorder %v1287, 1
        %vm1290 = vcmp.eq.s32.totalorder %v1288, 1
        %v1291 = vsel %vm1289, 0.0, %v1277
        %v1292 = vsel %vm1290, 0.0, %v1278
        %v1293 = vsel %vm1285, 0.0, %v1281
        %v1294 = vsel %vm1286, 0.0, %v1284
        %v1295 = vsub.f32 %v1291, %v1293
        %v1296 = vsub.f32 %v1292, %v1294
        %v1297 = vmul.f32 %v1295, 1.442695
        %v1298 = vpow.pop %v1297
        %v1299 = vmul.f32 %v1296, 1.442695
        %v1300 = vpow.pop %v1299
        %v1301 = vsel %vm690, %v1298, 0.0
        %1302 = vadd.xlane.f32.xlu0 %v1301
        %v1303 = vpop.xlane.xlu0 %1302
        %v1304 = vsel %vm690, %v1300, 0.0
        %1305 = vadd.xlane.f32.xlu0 %v1304
        %v1306 = vpop.xlane.xlu0 %1305
        %v1307 = vrcp.pop %v1303
        %v1308 = vrcp.pop %v1306
        %v1309 = vmul.f32 %v1298, %v1307
        %v1310 = vmul.f32 %v1300, %v1308
        %v1311 = vadd.f32 %v1272, %v1309
        %v1312 = vadd.f32 %v1273, %v1310
        %v1313 = vsel %vm690, %v1311, 0.0
        %1314 = vadd.xlane.f32.xlu0 %v1313
        %v1315 = vpop.xlane.xlu0 %1314
        %v1316 = vsel %vm690, %v1312, 0.0
        %1317 = vadd.xlane.f32.xlu0 %v1316
        %v1318 = vpop.xlane.xlu0 %1317
        %v1319 = vrcp.pop %v1315
        %v1320 = vmul.f32 %v1311, %v1319
        %v1321 = vrcp.pop %v1318
        %v1322 = vmul.f32 %v1312, %v1321
        %v1323 = vpack.c.bf16 %v1322, %v1320
        %1324 = vrot.lane.b32.xlu0 %v632, 40
        %v1325 = vpop.permute.xlu0 %1324
        %v1328 = vsel %vm690, %v1323, 0
        %1330 = vmatprep.subr.bf16.mxu0 0
        %1331 = vmatpush1.bf16.msra.mxu0 %v1325
        %1332 = vmatprep.subr.bf16.mxu0 0
        %1333 = vmatpush1.bf16.msra.mxu0 0
        %1334 = vmatprep.subr.bf16.mxu0 0
        %1335 = vmatpush1.bf16.msra.mxu0 0
        %1336 = vmatprep.subr.bf16.mxu0 0
        %1337 = vmatpush1.bf16.msra.mxu0 0
        %1338 = vmatprep.subr.bf16.mxu0 0
        %1339 = vmatpush1.bf16.msra.mxu0 0
        %1340 = vmatprep.subr.bf16.mxu0 0
        %1341 = vmatpush1.bf16.msra.mxu0 0
        %1342 = vmatprep.subr.bf16.mxu0 0
        %1343 = vmatpush1.bf16.msra.mxu0 0
        %1344 = vmatprep.subr.bf16.mxu0 0
        %1345 = vmatpush1.bf16.msra.mxu0 0
        %1346 = vmatprep.subr.bf16.mxu0 0
        %1347 = vmatpush1.bf16.msra.mxu0 0
        %1348 = vmatprep.subr.bf16.mxu0 0
        %1349 = vmatpush1.bf16.msra.mxu0 0
        %1350 = vmatprep.subr.bf16.mxu0 0
        %1351 = vmatpush1.bf16.msra.mxu0 0
        %1352 = vmatprep.subr.bf16.mxu0 0
        %1353 = vmatpush1.bf16.msra.mxu0 0
        %1354 = vmatprep.subr.bf16.mxu0 0
        %1355 = vmatpush1.bf16.msra.mxu0 0
        %1356 = vmatprep.subr.bf16.mxu0 0
        %1357 = vmatpush1.bf16.msra.mxu0 0
        %1358 = vmatprep.subr.bf16.mxu0 0
        %1359 = vmatpush1.bf16.msra.mxu0 0
        %1360 = vmatprep.subr.bf16.mxu0 0
        %1361 = vmatpush1.bf16.msra.mxu0 0
        %1362 = vmatprep.mubr.bf16.mxu0 0
        %1363 = vmatmul.mubr.bf16.gmra.mrb[0].mxu0 %v1328
        %v1364 = vpop.f32.mrb[0].mxu0
        %v1365 = vadd.f32 0.0, %v1364
        %v1366 = vpop.f32.mrb[0].mxu0
        %v1367 = vpop.f32.mrb[0].mxu0
        %v1368 = vadd.f32 0.0, %v1367
        %v1369 = vpop.f32.mrb[0].mxu0
        %1370 = vdwg.mxu0
        %1373 = vrot.lane.b32.xlu0 %v997, 8
        %v1374 = vpop.permute.xlu0 %1373
        %1375 = vrot.lane.b32.xlu0 %v1000, 8
        %v1376 = vpop.permute.xlu0 %1375
        %1381 = vrot.lane.b32.xlu0 %v1181, 16
        %v1382 = vpop.permute.xlu0 %1381
        %1383 = vrot.lane.b32.xlu0 %v1184, 16
        %v1384 = vpop.permute.xlu0 %1383
        %1389 = vrot.lane.b32.xlu0 %v1365, 24
        %v1390 = vpop.permute.xlu0 %1389
        %1391 = vrot.lane.b32.xlu0 %v1368, 24
        %v1392 = vpop.permute.xlu0 %1391
        %v1395 = vsel %vm636, %v813, %v1374
        %v1396 = vsel %vm636, %v816, %v1376
        %v1397 = vsel %vm690, %v1395, %v1382
        %v1398 = vsel %vm690, %v1396, %v1384
        %vm1399 = vcmask 195584
        %v1400 = vsel %vm1399, %v1397, %v1390
        %v1401 = vsel %vm1399, %v1398, %v1392
        %v1402 = vpack.c.bf16 %v1401, %v1400
        %v1403 = vld [vmem:[#allocation7] sm:$0xf]
        %v1404 = vld [vmem:[#allocation7 + $0x4] sm:$0xf]
        %v1405 = vld [vmem:[#allocation7 + $0x8] sm:$0xf]
        %v1406 = vld [vmem:[#allocation7 + $0xc] sm:$0xf]
        %v1407 = vld [vmem:[%s7] sm:$0x1]
        %v1409 = vlaneseq
        %v1410 = vshrl.u32 %v1409, 7
        %v1411 = vsub.s32 0, %v1410
        %v1412 = vrot.slane %v1407, %v1411
        %v1418 = vunpack.c.l.b16 %v1403
        %v1419 = vunpack.c.l.b16 %v1404
        %v1420 = vunpack.c.l.b16 %v1405
        %v1421 = vunpack.c.l.b16 %v1406
        %v1422 = vpack.c.b16 %v1419, %v1418
        %v1423 = vpack.c.b16 %v1421, %v1420
        %v1427 = vsel %vm587, %v1402, 0
        %1429 = vmatprep.subr.bf16.mxu0 0
        %1430 = vmatpush1.bf16.msra.mxu0 %v1422
        %1431 = vmatprep.subr.bf16.mxu0 0
        %1432 = vmatpush1.bf16.msra.mxu0 %v1423
        %1433 = vmatprep.subr.bf16.mxu0 0
        %1434 = vmatpush1.bf16.msra.mxu0 0
        %1435 = vmatprep.subr.bf16.mxu0 0
        %1436 = vmatpush1.bf16.msra.mxu0 0
        %1437 = vmatprep.subr.bf16.mxu0 0
        %1438 = vmatpush1.bf16.msra.mxu0 0
        %1439 = vmatprep.subr.bf16.mxu0 0
        %1440 = vmatpush1.bf16.msra.mxu0 0
        %1441 = vmatprep.subr.bf16.mxu0 0
        %1442 = vmatpush1.bf16.msra.mxu0 0
        %1443 = vmatprep.subr.bf16.mxu0 0
        %1444 = vmatpush1.bf16.msra.mxu0 0
        %1445 = vmatprep.subr.bf16.mxu0 0
        %1446 = vmatpush1.bf16.msra.mxu0 0
        %1447 = vmatprep.subr.bf16.mxu0 0
        %1448 = vmatpush1.bf16.msra.mxu0 0
        %1449 = vmatprep.subr.bf16.mxu0 0
        %1450 = vmatpush1.bf16.msra.mxu0 0
        %1451 = vmatprep.subr.bf16.mxu0 0
        %1452 = vmatpush1.bf16.msra.mxu0 0
        %1453 = vmatprep.subr.bf16.mxu0 0
        %1454 = vmatpush1.bf16.msra.mxu0 0
        %1455 = vmatprep.subr.bf16.mxu0 0
        %1456 = vmatpush1.bf16.msra.mxu0 0
        %1457 = vmatprep.subr.bf16.mxu0 0
        %1458 = vmatpush1.bf16.msra.mxu0 0
        %1459 = vmatprep.subr.bf16.mxu0 0
        %1460 = vmatpush1.bf16.msra.mxu0 0
        %1461 = vmatprep.mubr.bf16.mxu0 0
        %1462 = vmatmul.mubr.bf16.gmra.mrb[0].mxu0 %v1427
        %v1463 = vpop.f32.mrb[0].mxu0
        %v1464 = vadd.f32 %v1412, %v1463
        %v1465 = vpop.f32.mrb[0].mxu0
        %v1466 = vpop.f32.mrb[0].mxu0
        %v1467 = vadd.f32 %v1412, %v1466
        %v1468 = vpop.f32.mrb[0].mxu0
        %1469 = vdwg.mxu0
        %v1470 = vadd.f32 %v561, %v1464
        %v1471 = vadd.f32 %v562, %v1467
        %v1472 = vld [vmem:[%s8] sm:$0x1]
        %v1473 = vld [vmem:[%s9] sm:$0x1]
        %v1474 = vsel %vm587, %v1470, 0.0
        %1475 = vadd.xlane.f32.xlu0 %v1474
        %v1476 = vpop.xlane.xlu0 %1475
        %v1477 = vsel %vm587, %v1471, 0.0
        %1478 = vadd.xlane.f32.xlu0 %v1477
        %v1479 = vpop.xlane.xlu0 %1478
        %v1480 = vrcp.pop 32.0
        %v1481 = vmul.f32 %v1476, %v1480
        %v1482 = vmul.f32 %v1479, %v1480
        %v1483 = vsub.f32 %v1470, %v1481
        %v1484 = vsub.f32 %v1471, %v1482
        %v1485 = vmul.f32 %v1483, %v1483
        %v1486 = vmul.f32 %v1484, %v1484
        %v1487 = vsel %vm587, %v1485, 0.0
        %1488 = vadd.xlane.f32.xlu0 %v1487
        %v1489 = vpop.xlane.xlu0 %1488
        %v1490 = vsel %vm587, %v1486, 0.0
        %1491 = vadd.xlane.f32.xlu0 %v1490
        %v1492 = vpop.xlane.xlu0 %1491
        %v1493 = vmul.f32 %v1489, %v1480
        %v1494 = vmul.f32 %v1492, %v1480
        %v1495 = vadd.f32 %v1493, 1e-05
        %v1496 = vadd.f32 %v1494, 1e-05
        %v1497 = vrsqrt.pop %v1495
        %v1498 = vrsqrt.pop %v1496
        %v1499 = vmul.f32 %v1483, %v1497
        %v1500 = vmul.f32 %v1484, %v1498
        %v1502 = vlaneseq
        %v1503 = vshrl.u32 %v1502, 7
        %v1504 = vsub.s32 0, %v1503
        %v1505 = vrot.slane %v1472, %v1504
        %v1507 = vmul.f32 %v1499, %v1505
        %v1508 = vmul.f32 %v1500, %v1505
        %v1510 = vlaneseq
        %v1511 = vshrl.u32 %v1510, 7
        %v1512 = vsub.s32 0, %v1511
        %v1513 = vrot.slane %v1473, %v1512
        %v1515 = vadd.f32 %v1507, %v1513
        %v1516 = vadd.f32 %v1508, %v1513
        %v1517 = vpack.c.bf16 %v1516, %v1515
        %s1518 = scalar_lea.vmem [#allocation5], 16
        %v1519 = vld [vmem:[%s1518] sm:$0xf]
        %v1520 = vld [vmem:[%s1518 + $0x4] sm:$0xf]
        %v1521 = vld [vmem:[%s1518 + $0x8] sm:$0xf]
        %v1522 = vld [vmem:[%s1518 + $0xc] sm:$0xf]
        %s1523 = scalar_lea.vmem %s5, 1
        %v1524 = vld [vmem:[%s1523] sm:$0x1]
        %v1526 = vlaneseq
        %v1527 = vshrl.u32 %v1526, 7
        %v1528 = vsub.s32 0, %v1527
        %v1529 = vrot.slane %v1524, %v1528
        %v1535 = vunpack.c.l.b16 %v1519
        %v1536 = vunpack.c.l.b16 %v1520
        %v1537 = vunpack.c.l.b16 %v1521
        %v1538 = vunpack.c.l.b16 %v1522
        %v1539 = vpack.c.b16 %v1536, %v1535
        %v1540 = vpack.c.b16 %v1538, %v1537
        %v1544 = vsel %vm587, %v1517, 0
        %1546 = vmatprep.subr.bf16.mxu0 0
        %1547 = vmatpush1.bf16.msra.mxu0 %v1539
        %1548 = vmatprep.subr.bf16.mxu0 0
        %1549 = vmatpush1.bf16.msra.mxu0 %v1540
        %1550 = vmatprep.subr.bf16.mxu0 0
        %1551 = vmatpush1.bf16.msra.mxu0 0
        %1552 = vmatprep.subr.bf16.mxu0 0
        %1553 = vmatpush1.bf16.msra.mxu0 0
        %1554 = vmatprep.subr.bf16.mxu0 0
        %1555 = vmatpush1.bf16.msra.mxu0 0
        %1556 = vmatprep.subr.bf16.mxu0 0
        %1557 = vmatpush1.bf16.msra.mxu0 0
        %1558 = vmatprep.subr.bf16.mxu0 0
        %1559 = vmatpush1.bf16.msra.mxu0 0
        %1560 = vmatprep.subr.bf16.mxu0 0
        %1561 = vmatpush1.bf16.msra.mxu0 0
        %1562 = vmatprep.subr.bf16.mxu0 0
        %1563 = vmatpush1.bf16.msra.mxu0 0
        %1564 = vmatprep.subr.bf16.mxu0 0
        %1565 = vmatpush1.bf16.msra.mxu0 0
        %1566 = vmatprep.subr.bf16.mxu0 0
        %1567 = vmatpush1.bf16.msra.mxu0 0
        %1568 = vmatprep.subr.bf16.mxu0 0
        %1569 = vmatpush1.bf16.msra.mxu0 0
        %1570 = vmatprep.subr.bf16.mxu0 0
        %1571 = vmatpush1.bf16.msra.mxu0 0
        %1572 = vmatprep.subr.bf16.mxu0 0
        %1573 = vmatpush1.bf16.msra.mxu0 0
        %1574 = vmatprep.subr.bf16.mxu0 0
        %1575 = vmatpush1.bf16.msra.mxu0 0
        %1576 = vmatprep.subr.bf16.mxu0 0
        %1577 = vmatpush1.bf16.msra.mxu0 0
        %1578 = vmatprep.mubr.bf16.mxu0 0
        %1579 = vmatmul.mubr.bf16.gmra.mrb[0].mxu0 %v1544
        %v1580 = vpop.f32.mrb[0].mxu0
        %v1581 = vadd.f32 %v1529, %v1580
        %v1582 = vpop.f32.mrb[0].mxu0
        %v1583 = vpop.f32.mrb[0].mxu0
        %v1584 = vadd.f32 %v1529, %v1583
        %v1585 = vpop.f32.mrb[0].mxu0
        %1586 = vdwg.mxu0
        %v1587 = vpack.c.bf16 %v1584, %v1581
        %1589 = vrot.lane.b32.xlu0 %v1587, 96
        %v1590 = vpop.permute.xlu0 %1589
        %v1592 = vsel %vm636, %v1587, 0
        %v1595 = vsel %vm636, %v1590, 0
        %1597 = vmatprep.subr.bf16.mxu0 0
        %1598 = vmatpush1.bf16.xpose.msra.mxu0 %v1595
        %1599 = vmatprep.subr.bf16.mxu0 0
        %1600 = vmatpush1.bf16.xpose.msra.mxu0 0
        %1601 = vmatprep.subr.bf16.mxu0 0
        %1602 = vmatpush1.bf16.xpose.msra.mxu0 0
        %1603 = vmatprep.subr.bf16.mxu0 0
        %1604 = vmatpush1.bf16.xpose.msra.mxu0 0
        %1605 = vmatprep.subr.bf16.mxu0 0
        %1606 = vmatpush1.bf16.xpose.msra.mxu0 0
        %1607 = vmatprep.subr.bf16.mxu0 0
        %1608 = vmatpush1.bf16.xpose.msra.mxu0 0
        %1609 = vmatprep.subr.bf16.mxu0 0
        %1610 = vmatpush1.bf16.xpose.msra.mxu0 0
        %1611 = vmatprep.subr.bf16.mxu0 0
        %1612 = vmatpush1.bf16.xpose.msra.mxu0 0
        %1613 = vmatprep.subr.bf16.mxu0 0
        %1614 = vmatpush1.bf16.xpose.msra.mxu0 0
        %1615 = vmatprep.subr.bf16.mxu0 0
        %1616 = vmatpush1.bf16.xpose.msra.mxu0 0
        %1617 = vmatprep.subr.bf16.mxu0 0
        %1618 = vmatpush1.bf16.xpose.msra.mxu0 0
        %1619 = vmatprep.subr.bf16.mxu0 0
        %1620 = vmatpush1.bf16.xpose.msra.mxu0 0
        %1621 = vmatprep.subr.bf16.mxu0 0
        %1622 = vmatpush1.bf16.xpose.msra.mxu0 0
        %1623 = vmatprep.subr.bf16.mxu0 0
        %1624 = vmatpush1.bf16.xpose.msra.mxu0 0
        %1625 = vmatprep.subr.bf16.mxu0 0
        %1626 = vmatpush1.bf16.xpose.msra.mxu0 0
        %1627 = vmatprep.subr.bf16.mxu0 0
        %1628 = vmatpush1.bf16.xpose.msra.mxu0 0
        %1629 = vmatprep.mubr.bf16.mxu0 0
        %1630 = vmatmul.mubr.bf16.gmra.mrb[0].mxu0 %v1592
        %v1631 = vpop.f32.mrb[0].mxu0
        %v1632 = vadd.f32 0.0, %v1631
        %v1633 = vpop.f32.mrb[0].mxu0
        %v1634 = vpop.f32.mrb[0].mxu0
        %v1635 = vadd.f32 0.0, %v1634
        %v1636 = vpop.f32.mrb[0].mxu0
        %1637 = vdwg.mxu0
        %v1638 = vmul.f32 %v1632, 0.35355338
        %v1639 = vmul.f32 %v1635, 0.35355338
        %v1640 = vsel %vm686, %v1638, -1e+30
        %v1641 = vsel %vm687, %v1639, -1e+30
        %v1642 = vsel %vm690, %v1640, -inf
        %1643 = vmax.xlane.f32.xlu0 %v1642
        %v1644 = vpop.xlane.xlu0 %1643
        %v1645 = vsel %vm690, %v1641, -inf
        %1646 = vmax.xlane.f32.xlu0 %v1645
        %v1647 = vpop.xlane.xlu0 %1646
        %vm1648 = vcmp.le.f32.partialorder %v1644, -5e+29
        %vm1649 = vcmp.le.f32.partialorder %v1647, -5e+29
        %v1650 = vsel %vm1648, 1, 0
        %v1651 = vsel %vm1649, 1, 0
        %vm1652 = vcmp.eq.s32.totalorder %v1650, 1
        %vm1653 = vcmp.eq.s32.totalorder %v1651, 1
        %v1654 = vsel %vm1652, 0.0, %v1640
        %v1655 = vsel %vm1653, 0.0, %v1641
        %v1656 = vsel %vm1648, 0.0, %v1644
        %v1657 = vsel %vm1649, 0.0, %v1647
        %v1658 = vsub.f32 %v1654, %v1656
        %v1659 = vsub.f32 %v1655, %v1657
        %v1660 = vmul.f32 %v1658, 1.442695
        %v1661 = vpow.pop %v1660
        %v1662 = vmul.f32 %v1659, 1.442695
        %v1663 = vpow.pop %v1662
        %v1664 = vsel %vm690, %v1661, 0.0
        %1665 = vadd.xlane.f32.xlu0 %v1664
        %v1666 = vpop.xlane.xlu0 %1665
        %v1667 = vsel %vm690, %v1663, 0.0
        %1668 = vadd.xlane.f32.xlu0 %v1667
        %v1669 = vpop.xlane.xlu0 %1668
        %v1670 = vrcp.pop %v1666
        %v1671 = vrcp.pop %v1669
        %v1672 = vmul.f32 %v1661, %v1670
        %v1673 = vmul.f32 %v1663, %v1671
        %s1674 = scalar_lea.vmem %s465, 64 [#allocation2]
        %v1675 = vld [vmem:[%s1674] sm:$0xff]
        %v1676 = vld [vmem:[%s1674 + $0x8] sm:$0xff]
        %v1677 = vsel %vm686, %v1675, -1e+30
        %v1678 = vsel %vm687, %v1676, -1e+30
        %v1679 = vsel %vm690, %v1677, -inf
        %1680 = vmax.xlane.f32.xlu0 %v1679
        %v1681 = vpop.xlane.xlu0 %1680
        %v1682 = vsel %vm690, %v1678, -inf
        %1683 = vmax.xlane.f32.xlu0 %v1682
        %v1684 = vpop.xlane.xlu0 %1683
        %vm1685 = vcmp.le.f32.partialorder %v1681, -5e+29
        %vm1686 = vcmp.le.f32.partialorder %v1684, -5e+29
        %v1687 = vsel %vm1685, 1, 0
        %v1688 = vsel %vm1686, 1, 0
        %vm1689 = vcmp.eq.s32.totalorder %v1687, 1
        %vm1690 = vcmp.eq.s32.totalorder %v1688, 1
        %v1691 = vsel %vm1689, 0.0, %v1677
        %v1692 = vsel %vm1690, 0.0, %v1678
        %v1693 = vsel %vm1685, 0.0, %v1681
        %v1694 = vsel %vm1686, 0.0, %v1684
        %v1695 = vsub.f32 %v1691, %v1693
        %v1696 = vsub.f32 %v1692, %v1694
        %v1697 = vmul.f32 %v1695, 1.442695
        %v1698 = vpow.pop %v1697
        %v1699 = vmul.f32 %v1696, 1.442695
        %v1700 = vpow.pop %v1699
        %v1701 = vsel %vm690, %v1698, 0.0
        %1702 = vadd.xlane.f32.xlu0 %v1701
        %v1703 = vpop.xlane.xlu0 %1702
        %v1704 = vsel %vm690, %v1700, 0.0
        %1705 = vadd.xlane.f32.xlu0 %v1704
        %v1706 = vpop.xlane.xlu0 %1705
        %v1707 = vrcp.pop %v1703
        %v1708 = vrcp.pop %v1706
        %v1709 = vmul.f32 %v1698, %v1707
        %v1710 = vmul.f32 %v1700, %v1708
        %v1711 = vadd.f32 %v1672, %v1709
        %v1712 = vadd.f32 %v1673, %v1710
        %v1713 = vsel %vm690, %v1711, 0.0
        %1714 = vadd.xlane.f32.xlu0 %v1713
        %v1715 = vpop.xlane.xlu0 %1714
        %v1716 = vsel %vm690, %v1712, 0.0
        %1717 = vadd.xlane.f32.xlu0 %v1716
        %v1718 = vpop.xlane.xlu0 %1717
        %v1719 = vrcp.pop %v1715
        %v1720 = vmul.f32 %v1711, %v1719
        %v1721 = vrcp.pop %v1718
        %v1722 = vmul.f32 %v1712, %v1721
        %v1723 = vpack.c.bf16 %v1722, %v1720
        %1724 = vrot.lane.b32.xlu0 %v1587, 64
        %v1725 = vpop.permute.xlu0 %1724
        %v1728 = vsel %vm690, %v1723, 0
        %1730 = vmatprep.subr.bf16.mxu0 0
        %1731 = vmatpush1.bf16.msra.mxu0 %v1725
        %1732 = vmatprep.subr.bf16.mxu0 0
        %1733 = vmatpush1.bf16.msra.mxu0 0
        %1734 = vmatprep.subr.bf16.mxu0 0
        %1735 = vmatpush1.bf16.msra.mxu0 0
        %1736 = vmatprep.subr.bf16.mxu0 0
        %1737 = vmatpush1.bf16.msra.mxu0 0
        %1738 = vmatprep.subr.bf16.mxu0 0
        %1739 = vmatpush1.bf16.msra.mxu0 0
        %1740 = vmatprep.subr.bf16.mxu0 0
        %1741 = vmatpush1.bf16.msra.mxu0 0
        %1742 = vmatprep.subr.bf16.mxu0 0
        %1743 = vmatpush1.bf16.msra.mxu0 0
        %1744 = vmatprep.subr.bf16.mxu0 0
        %1745 = vmatpush1.bf16.msra.mxu0 0
        %1746 = vmatprep.subr.bf16.mxu0 0
        %1747 = vmatpush1.bf16.msra.mxu0 0
        %1748 = vmatprep.subr.bf16.mxu0 0
        %1749 = vmatpush1.bf16.msra.mxu0 0
        %1750 = vmatprep.subr.bf16.mxu0 0
        %1751 = vmatpush1.bf16.msra.mxu0 0
        %1752 = vmatprep.subr.bf16.mxu0 0
        %1753 = vmatpush1.bf16.msra.mxu0 0
        %1754 = vmatprep.subr.bf16.mxu0 0
        %1755 = vmatpush1.bf16.msra.mxu0 0
        %1756 = vmatprep.subr.bf16.mxu0 0
        %1757 = vmatpush1.bf16.msra.mxu0 0
        %1758 = vmatprep.subr.bf16.mxu0 0
        %1759 = vmatpush1.bf16.msra.mxu0 0
        %1760 = vmatprep.subr.bf16.mxu0 0
        %1761 = vmatpush1.bf16.msra.mxu0 0
        %1762 = vmatprep.mubr.bf16.mxu0 0
        %1763 = vmatmul.mubr.bf16.gmra.mrb[0].mxu0 %v1728
        %v1764 = vpop.f32.mrb[0].mxu0
        %v1765 = vadd.f32 0.0, %v1764
        %v1766 = vpop.f32.mrb[0].mxu0
        %v1767 = vpop.f32.mrb[0].mxu0
        %v1768 = vadd.f32 0.0, %v1767
        %v1769 = vpop.f32.mrb[0].mxu0
        %1770 = vdwg.mxu0
        %1771 = vrot.lane.b32.xlu0 %v1587, 120
        %v1772 = vpop.permute.xlu0 %1771
        %1773 = vrot.lane.b32.xlu0 %v1587, 88
        %v1774 = vpop.permute.xlu0 %1773
        %v1776 = vsel %vm636, %v1772, 0
        %v1779 = vsel %vm636, %v1774, 0
        %1781 = vmatprep.subr.bf16.mxu0 0
        %1782 = vmatpush1.bf16.xpose.msra.mxu0 %v1779
        %1783 = vmatprep.subr.bf16.mxu0 0
        %1784 = vmatpush1.bf16.xpose.msra.mxu0 0
        %1785 = vmatprep.subr.bf16.mxu0 0
        %1786 = vmatpush1.bf16.xpose.msra.mxu0 0
        %1787 = vmatprep.subr.bf16.mxu0 0
        %1788 = vmatpush1.bf16.xpose.msra.mxu0 0
        %1789 = vmatprep.subr.bf16.mxu0 0
        %1790 = vmatpush1.bf16.xpose.msra.mxu0 0
        %1791 = vmatprep.subr.bf16.mxu0 0
        %1792 = vmatpush1.bf16.xpose.msra.mxu0 0
        %1793 = vmatprep.subr.bf16.mxu0 0
        %1794 = vmatpush1.bf16.xpose.msra.mxu0 0
        %1795 = vmatprep.subr.bf16.mxu0 0
        %1796 = vmatpush1.bf16.xpose.msra.mxu0 0
        %1797 = vmatprep.subr.bf16.mxu0 0
        %1798 = vmatpush1.bf16.xpose.msra.mxu0 0
        %1799 = vmatprep.subr.bf16.mxu0 0
        %1800 = vmatpush1.bf16.xpose.msra.mxu0 0
        %1801 = vmatprep.subr.bf16.mxu0 0
        %1802 = vmatpush1.bf16.xpose.msra.mxu0 0
        %1803 = vmatprep.subr.bf16.mxu0 0
        %1804 = vmatpush1.bf16.xpose.msra.mxu0 0
        %1805 = vmatprep.subr.bf16.mxu0 0
        %1806 = vmatpush1.bf16.xpose.msra.mxu0 0
        %1807 = vmatprep.subr.bf16.mxu0 0
        %1808 = vmatpush1.bf16.xpose.msra.mxu0 0
        %1809 = vmatprep.subr.bf16.mxu0 0
        %1810 = vmatpush1.bf16.xpose.msra.mxu0 0
        %1811 = vmatprep.subr.bf16.mxu0 0
        %1812 = vmatpush1.bf16.xpose.msra.mxu0 0
        %1813 = vmatprep.mubr.bf16.mxu0 0
        %1814 = vmatmul.mubr.bf16.gmra.mrb[0].mxu0 %v1776
        %v1815 = vpop.f32.mrb[0].mxu0
        %v1816 = vadd.f32 0.0, %v1815
        %v1817 = vpop.f32.mrb[0].mxu0
        %v1818 = vpop.f32.mrb[0].mxu0
        %v1819 = vadd.f32 0.0, %v1818
        %v1820 = vpop.f32.mrb[0].mxu0
        %1821 = vdwg.mxu0
        %v1822 = vmul.f32 %v1816, 0.35355338
        %v1823 = vmul.f32 %v1819, 0.35355338
        %v1824 = vsel %vm686, %v1822, -1e+30
        %v1825 = vsel %vm687, %v1823, -1e+30
        %v1826 = vsel %vm690, %v1824, -inf
        %1827 = vmax.xlane.f32.xlu0 %v1826
        %v1828 = vpop.xlane.xlu0 %1827
        %v1829 = vsel %vm690, %v1825, -inf
        %1830 = vmax.xlane.f32.xlu0 %v1829
        %v1831 = vpop.xlane.xlu0 %1830
        %vm1832 = vcmp.le.f32.partialorder %v1828, -5e+29
        %vm1833 = vcmp.le.f32.partialorder %v1831, -5e+29
        %v1834 = vsel %vm1832, 1, 0
        %v1835 = vsel %vm1833, 1, 0
        %vm1836 = vcmp.eq.s32.totalorder %v1834, 1
        %vm1837 = vcmp.eq.s32.totalorder %v1835, 1
        %v1838 = vsel %vm1836, 0.0, %v1824
        %v1839 = vsel %vm1837, 0.0, %v1825
        %v1840 = vsel %vm1832, 0.0, %v1828
        %v1841 = vsel %vm1833, 0.0, %v1831
        %v1842 = vsub.f32 %v1838, %v1840
        %v1843 = vsub.f32 %v1839, %v1841
        %v1844 = vmul.f32 %v1842, 1.442695
        %v1845 = vpow.pop %v1844
        %v1846 = vmul.f32 %v1843, 1.442695
        %v1847 = vpow.pop %v1846
        %v1848 = vsel %vm690, %v1845, 0.0
        %1849 = vadd.xlane.f32.xlu0 %v1848
        %v1850 = vpop.xlane.xlu0 %1849
        %v1851 = vsel %vm690, %v1847, 0.0
        %1852 = vadd.xlane.f32.xlu0 %v1851
        %v1853 = vpop.xlane.xlu0 %1852
        %v1854 = vrcp.pop %v1850
        %v1855 = vrcp.pop %v1853
        %v1856 = vmul.f32 %v1845, %v1854
        %v1857 = vmul.f32 %v1847, %v1855
        %s1858 = scalar_lea.vmem %s465, 80 [#allocation2]
        %v1859 = vld [vmem:[%s1858] sm:$0xff]
        %v1860 = vld [vmem:[%s1858 + $0x8] sm:$0xff]
        %v1861 = vsel %vm686, %v1859, -1e+30
        %v1862 = vsel %vm687, %v1860, -1e+30
        %v1863 = vsel %vm690, %v1861, -inf
        %1864 = vmax.xlane.f32.xlu0 %v1863
        %v1865 = vpop.xlane.xlu0 %1864
        %v1866 = vsel %vm690, %v1862, -inf
        %1867 = vmax.xlane.f32.xlu0 %v1866
        %v1868 = vpop.xlane.xlu0 %1867
        %vm1869 = vcmp.le.f32.partialorder %v1865, -5e+29
        %vm1870 = vcmp.le.f32.partialorder %v1868, -5e+29
        %v1871 = vsel %vm1869, 1, 0
        %v1872 = vsel %vm1870, 1, 0
        %vm1873 = vcmp.eq.s32.totalorder %v1871, 1
        %vm1874 = vcmp.eq.s32.totalorder %v1872, 1
        %v1875 = vsel %vm1873, 0.0, %v1861
        %v1876 = vsel %vm1874, 0.0, %v1862
        %v1877 = vsel %vm1869, 0.0, %v1865
        %v1878 = vsel %vm1870, 0.0, %v1868
        %v1879 = vsub.f32 %v1875, %v1877
        %v1880 = vsub.f32 %v1876, %v1878
        %v1881 = vmul.f32 %v1879, 1.442695
        %v1882 = vpow.pop %v1881
        %v1883 = vmul.f32 %v1880, 1.442695
        %v1884 = vpow.pop %v1883
        %v1885 = vsel %vm690, %v1882, 0.0
        %1886 = vadd.xlane.f32.xlu0 %v1885
        %v1887 = vpop.xlane.xlu0 %1886
        %v1888 = vsel %vm690, %v1884, 0.0
        %1889 = vadd.xlane.f32.xlu0 %v1888
        %v1890 = vpop.xlane.xlu0 %1889
        %v1891 = vrcp.pop %v1887
        %v1892 = vrcp.pop %v1890
        %v1893 = vmul.f32 %v1882, %v1891
        %v1894 = vmul.f32 %v1884, %v1892
        %v1895 = vadd.f32 %v1856, %v1893
        %v1896 = vadd.f32 %v1857, %v1894
        %v1897 = vsel %vm690, %v1895, 0.0
        %1898 = vadd.xlane.f32.xlu0 %v1897
        %v1899 = vpop.xlane.xlu0 %1898
        %v1900 = vsel %vm690, %v1896, 0.0
        %1901 = vadd.xlane.f32.xlu0 %v1900
        %v1902 = vpop.xlane.xlu0 %1901
        %v1903 = vrcp.pop %v1899
        %v1904 = vmul.f32 %v1895, %v1903
        %v1905 = vrcp.pop %v1902
        %v1906 = vmul.f32 %v1896, %v1905
        %v1907 = vpack.c.bf16 %v1906, %v1904
        %1908 = vrot.lane.b32.xlu0 %v1587, 56
        %v1909 = vpop.permute.xlu0 %1908
        %v1912 = vsel %vm690, %v1907, 0
        %1914 = vmatprep.subr.bf16.mxu0 0
        %1915 = vmatpush1.bf16.msra.mxu0 %v1909
        %1916 = vmatprep.subr.bf16.mxu0 0
        %1917 = vmatpush1.bf16.msra.mxu0 0
        %1918 = vmatprep.subr.bf16.mxu0 0
        %1919 = vmatpush1.bf16.msra.mxu0 0
        %1920 = vmatprep.subr.bf16.mxu0 0
        %1921 = vmatpush1.bf16.msra.mxu0 0
        %1922 = vmatprep.subr.bf16.mxu0 0
        %1923 = vmatpush1.bf16.msra.mxu0 0
        %1924 = vmatprep.subr.bf16.mxu0 0
        %1925 = vmatpush1.bf16.msra.mxu0 0
        %1926 = vmatprep.subr.bf16.mxu0 0
        %1927 = vmatpush1.bf16.msra.mxu0 0
        %1928 = vmatprep.subr.bf16.mxu0 0
        %1929 = vmatpush1.bf16.msra.mxu0 0
        %1930 = vmatprep.subr.bf16.mxu0 0
        %1931 = vmatpush1.bf16.msra.mxu0 0
        %1932 = vmatprep.subr.bf16.mxu0 0
        %1933 = vmatpush1.bf16.msra.mxu0 0
        %1934 = vmatprep.subr.bf16.mxu0 0
        %1935 = vmatpush1.bf16.msra.mxu0 0
        %1936 = vmatprep.subr.bf16.mxu0 0
        %1937 = vmatpush1.bf16.msra.mxu0 0
        %1938 = vmatprep.subr.bf16.mxu0 0
        %1939 = vmatpush1.bf16.msra.mxu0 0
        %1940 = vmatprep.subr.bf16.mxu0 0
        %1941 = vmatpush1.bf16.msra.mxu0 0
        %1942 = vmatprep.subr.bf16.mxu0 0
        %1943 = vmatpush1.bf16.msra.mxu0 0
        %1944 = vmatprep.subr.bf16.mxu0 0
        %1945 = vmatpush1.bf16.msra.mxu0 0
        %1946 = vmatprep.mubr.bf16.mxu0 0
        %1947 = vmatmul.mubr.bf16.gmra.mrb[0].mxu0 %v1912
        %v1948 = vpop.f32.mrb[0].mxu0
        %v1949 = vadd.f32 0.0, %v1948
        %v1950 = vpop.f32.mrb[0].mxu0
        %v1951 = vpop.f32.mrb[0].mxu0
        %v1952 = vadd.f32 0.0, %v1951
        %v1953 = vpop.f32.mrb[0].mxu0
        %1954 = vdwg.mxu0
        %1955 = vrot.lane.b32.xlu0 %v1587, 112
        %v1956 = vpop.permute.xlu0 %1955
        %1957 = vrot.lane.b32.xlu0 %v1587, 80
        %v1958 = vpop.permute.xlu0 %1957
        %v1960 = vsel %vm636, %v1956, 0
        %v1963 = vsel %vm636, %v1958, 0
        %1965 = vmatprep.subr.bf16.mxu0 0
        %1966 = vmatpush1.bf16.xpose.msra.mxu0 %v1963
        %1967 = vmatprep.subr.bf16.mxu0 0
        %1968 = vmatpush1.bf16.xpose.msra.mxu0 0
        %1969 = vmatprep.subr.bf16.mxu0 0
        %1970 = vmatpush1.bf16.xpose.msra.mxu0 0
        %1971 = vmatprep.subr.bf16.mxu0 0
        %1972 = vmatpush1.bf16.xpose.msra.mxu0 0
        %1973 = vmatprep.subr.bf16.mxu0 0
        %1974 = vmatpush1.bf16.xpose.msra.mxu0 0
        %1975 = vmatprep.subr.bf16.mxu0 0
        %1976 = vmatpush1.bf16.xpose.msra.mxu0 0
        %1977 = vmatprep.subr.bf16.mxu0 0
        %1978 = vmatpush1.bf16.xpose.msra.mxu0 0
        %1979 = vmatprep.subr.bf16.mxu0 0
        %1980 = vmatpush1.bf16.xpose.msra.mxu0 0
        %1981 = vmatprep.subr.bf16.mxu0 0
        %1982 = vmatpush1.bf16.xpose.msra.mxu0 0
        %1983 = vmatprep.subr.bf16.mxu0 0
        %1984 = vmatpush1.bf16.xpose.msra.mxu0 0
        %1985 = vmatprep.subr.bf16.mxu0 0
        %1986 = vmatpush1.bf16.xpose.msra.mxu0 0
        %1987 = vmatprep.subr.bf16.mxu0 0
        %1988 = vmatpush1.bf16.xpose.msra.mxu0 0
        %1989 = vmatprep.subr.bf16.mxu0 0
        %1990 = vmatpush1.bf16.xpose.msra.mxu0 0
        %1991 = vmatprep.subr.bf16.mxu0 0
        %1992 = vmatpush1.bf16.xpose.msra.mxu0 0
        %1993 = vmatprep.subr.bf16.mxu0 0
        %1994 = vmatpush1.bf16.xpose.msra.mxu0 0
        %1995 = vmatprep.subr.bf16.mxu0 0
        %1996 = vmatpush1.bf16.xpose.msra.mxu0 0
        %1997 = vmatprep.mubr.bf16.mxu0 0
        %1998 = vmatmul.mubr.bf16.gmra.mrb[0].mxu0 %v1960
        %v1999 = vpop.f32.mrb[0].mxu0
        %v2000 = vadd.f32 0.0, %v1999
        %v2001 = vpop.f32.mrb[0].mxu0
        %v2002 = vpop.f32.mrb[0].mxu0
        %v2003 = vadd.f32 0.0, %v2002
        %v2004 = vpop.f32.mrb[0].mxu0
        %2005 = vdwg.mxu0
        %v2006 = vmul.f32 %v2000, 0.35355338
        %v2007 = vmul.f32 %v2003, 0.35355338
        %v2008 = vsel %vm686, %v2006, -1e+30
        %v2009 = vsel %vm687, %v2007, -1e+30
        %v2010 = vsel %vm690, %v2008, -inf
        %2011 = vmax.xlane.f32.xlu0 %v2010
        %v2012 = vpop.xlane.xlu0 %2011
        %v2013 = vsel %vm690, %v2009, -inf
        %2014 = vmax.xlane.f32.xlu0 %v2013
        %v2015 = vpop.xlane.xlu0 %2014
        %vm2016 = vcmp.le.f32.partialorder %v2012, -5e+29
        %vm2017 = vcmp.le.f32.partialorder %v2015, -5e+29
        %v2018 = vsel %vm2016, 1, 0
        %v2019 = vsel %vm2017, 1, 0
        %vm2020 = vcmp.eq.s32.totalorder %v2018, 1
        %vm2021 = vcmp.eq.s32.totalorder %v2019, 1
        %v2022 = vsel %vm2020, 0.0, %v2008
        %v2023 = vsel %vm2021, 0.0, %v2009
        %v2024 = vsel %vm2016, 0.0, %v2012
        %v2025 = vsel %vm2017, 0.0, %v2015
        %v2026 = vsub.f32 %v2022, %v2024
        %v2027 = vsub.f32 %v2023, %v2025
        %v2028 = vmul.f32 %v2026, 1.442695
        %v2029 = vpow.pop %v2028
        %v2030 = vmul.f32 %v2027, 1.442695
        %v2031 = vpow.pop %v2030
        %v2032 = vsel %vm690, %v2029, 0.0
        %2033 = vadd.xlane.f32.xlu0 %v2032
        %v2034 = vpop.xlane.xlu0 %2033
        %v2035 = vsel %vm690, %v2031, 0.0
        %2036 = vadd.xlane.f32.xlu0 %v2035
        %v2037 = vpop.xlane.xlu0 %2036
        %v2038 = vrcp.pop %v2034
        %v2039 = vrcp.pop %v2037
        %v2040 = vmul.f32 %v2029, %v2038
        %v2041 = vmul.f32 %v2031, %v2039
        %s2042 = scalar_lea.vmem %s465, 96 [#allocation2]
        %v2043 = vld [vmem:[%s2042] sm:$0xff]
        %v2044 = vld [vmem:[%s2042 + $0x8] sm:$0xff]
        %v2045 = vsel %vm686, %v2043, -1e+30
        %v2046 = vsel %vm687, %v2044, -1e+30
        %v2047 = vsel %vm690, %v2045, -inf
        %2048 = vmax.xlane.f32.xlu0 %v2047
        %v2049 = vpop.xlane.xlu0 %2048
        %v2050 = vsel %vm690, %v2046, -inf
        %2051 = vmax.xlane.f32.xlu0 %v2050
        %v2052 = vpop.xlane.xlu0 %2051
        %vm2053 = vcmp.le.f32.partialorder %v2049, -5e+29
        %vm2054 = vcmp.le.f32.partialorder %v2052, -5e+29
        %v2055 = vsel %vm2053, 1, 0
        %v2056 = vsel %vm2054, 1, 0
        %vm2057 = vcmp.eq.s32.totalorder %v2055, 1
        %vm2058 = vcmp.eq.s32.totalorder %v2056, 1
        %v2059 = vsel %vm2057, 0.0, %v2045
        %v2060 = vsel %vm2058, 0.0, %v2046
        %v2061 = vsel %vm2053, 0.0, %v2049
        %v2062 = vsel %vm2054, 0.0, %v2052
        %v2063 = vsub.f32 %v2059, %v2061
        %v2064 = vsub.f32 %v2060, %v2062
        %v2065 = vmul.f32 %v2063, 1.442695
        %v2066 = vpow.pop %v2065
        %v2067 = vmul.f32 %v2064, 1.442695
        %v2068 = vpow.pop %v2067
        %v2069 = vsel %vm690, %v2066, 0.0
        %2070 = vadd.xlane.f32.xlu0 %v2069
        %v2071 = vpop.xlane.xlu0 %2070
        %v2072 = vsel %vm690, %v2068, 0.0
        %2073 = vadd.xlane.f32.xlu0 %v2072
        %v2074 = vpop.xlane.xlu0 %2073
        %v2075 = vrcp.pop %v2071
        %v2076 = vrcp.pop %v2074
        %v2077 = vmul.f32 %v2066, %v2075
        %v2078 = vmul.f32 %v2068, %v2076
        %v2079 = vadd.f32 %v2040, %v2077
        %v2080 = vadd.f32 %v2041, %v2078
        %v2081 = vsel %vm690, %v2079, 0.0
        %2082 = vadd.xlane.f32.xlu0 %v2081
        %v2083 = vpop.xlane.xlu0 %2082
        %v2084 = vsel %vm690, %v2080, 0.0
        %2085 = vadd.xlane.f32.xlu0 %v2084
        %v2086 = vpop.xlane.xlu0 %2085
        %v2087 = vrcp.pop %v2083
        %v2088 = vmul.f32 %v2079, %v2087
        %v2089 = vrcp.pop %v2086
        %v2090 = vmul.f32 %v2080, %v2089
        %v2091 = vpack.c.bf16 %v2090, %v2088
        %2092 = vrot.lane.b32.xlu0 %v1587, 48
        %v2093 = vpop.permute.xlu0 %2092
        %v2096 = vsel %vm690, %v2091, 0
        %2098 = vmatprep.subr.bf16.mxu0 0
        %2099 = vmatpush1.bf16.msra.mxu0 %v2093
        %2100 = vmatprep.subr.bf16.mxu0 0
        %2101 = vmatpush1.bf16.msra.mxu0 0
        %2102 = vmatprep.subr.bf16.mxu0 0
        %2103 = vmatpush1.bf16.msra.mxu0 0
        %2104 = vmatprep.subr.bf16.mxu0 0
        %2105 = vmatpush1.bf16.msra.mxu0 0
        %2106 = vmatprep.subr.bf16.mxu0 0
        %2107 = vmatpush1.bf16.msra.mxu0 0
        %2108 = vmatprep.subr.bf16.mxu0 0
        %2109 = vmatpush1.bf16.msra.mxu0 0
        %2110 = vmatprep.subr.bf16.mxu0 0
        %2111 = vmatpush1.bf16.msra.mxu0 0
        %2112 = vmatprep.subr.bf16.mxu0 0
        %2113 = vmatpush1.bf16.msra.mxu0 0
        %2114 = vmatprep.subr.bf16.mxu0 0
        %2115 = vmatpush1.bf16.msra.mxu0 0
        %2116 = vmatprep.subr.bf16.mxu0 0
        %2117 = vmatpush1.bf16.msra.mxu0 0
        %2118 = vmatprep.subr.bf16.mxu0 0
        %2119 = vmatpush1.bf16.msra.mxu0 0
        %2120 = vmatprep.subr.bf16.mxu0 0
        %2121 = vmatpush1.bf16.msra.mxu0 0
        %2122 = vmatprep.subr.bf16.mxu0 0
        %2123 = vmatpush1.bf16.msra.mxu0 0
        %2124 = vmatprep.subr.bf16.mxu0 0
        %2125 = vmatpush1.bf16.msra.mxu0 0
        %2126 = vmatprep.subr.bf16.mxu0 0
        %2127 = vmatpush1.bf16.msra.mxu0 0
        %2128 = vmatprep.subr.bf16.mxu0 0
        %2129 = vmatpush1.bf16.msra.mxu0 0
        %2130 = vmatprep.mubr.bf16.mxu0 0
        %2131 = vmatmul.mubr.bf16.gmra.mrb[0].mxu0 %v2096
        %v2132 = vpop.f32.mrb[0].mxu0
        %v2133 = vadd.f32 0.0, %v2132
        %v2134 = vpop.f32.mrb[0].mxu0
        %v2135 = vpop.f32.mrb[0].mxu0
        %v2136 = vadd.f32 0.0, %v2135
        %v2137 = vpop.f32.mrb[0].mxu0
        %2138 = vdwg.mxu0
        %2139 = vrot.lane.b32.xlu0 %v1587, 104
        %v2140 = vpop.permute.xlu0 %2139
        %2141 = vrot.lane.b32.xlu0 %v1587, 72
        %v2142 = vpop.permute.xlu0 %2141
        %v2144 = vsel %vm636, %v2140, 0
        %v2147 = vsel %vm636, %v2142, 0
        %2149 = vmatprep.subr.bf16.mxu0 0
        %2150 = vmatpush1.bf16.xpose.msra.mxu0 %v2147
        %2151 = vmatprep.subr.bf16.mxu0 0
        %2152 = vmatpush1.bf16.xpose.msra.mxu0 0
        %2153 = vmatprep.subr.bf16.mxu0 0
        %2154 = vmatpush1.bf16.xpose.msra.mxu0 0
        %2155 = vmatprep.subr.bf16.mxu0 0
        %2156 = vmatpush1.bf16.xpose.msra.mxu0 0
        %2157 = vmatprep.subr.bf16.mxu0 0
        %2158 = vmatpush1.bf16.xpose.msra.mxu0 0
        %2159 = vmatprep.subr.bf16.mxu0 0
        %2160 = vmatpush1.bf16.xpose.msra.mxu0 0
        %2161 = vmatprep.subr.bf16.mxu0 0
        %2162 = vmatpush1.bf16.xpose.msra.mxu0 0
        %2163 = vmatprep.subr.bf16.mxu0 0
        %2164 = vmatpush1.bf16.xpose.msra.mxu0 0
        %2165 = vmatprep.subr.bf16.mxu0 0
        %2166 = vmatpush1.bf16.xpose.msra.mxu0 0
        %2167 = vmatprep.subr.bf16.mxu0 0
        %2168 = vmatpush1.bf16.xpose.msra.mxu0 0
        %2169 = vmatprep.subr.bf16.mxu0 0
        %2170 = vmatpush1.bf16.xpose.msra.mxu0 0
        %2171 = vmatprep.subr.bf16.mxu0 0
        %2172 = vmatpush1.bf16.xpose.msra.mxu0 0
        %2173 = vmatprep.subr.bf16.mxu0 0
        %2174 = vmatpush1.bf16.xpose.msra.mxu0 0
        %2175 = vmatprep.subr.bf16.mxu0 0
        %2176 = vmatpush1.bf16.xpose.msra.mxu0 0
        %2177 = vmatprep.subr.bf16.mxu0 0
        %2178 = vmatpush1.bf16.xpose.msra.mxu0 0
        %2179 = vmatprep.subr.bf16.mxu0 0
        %2180 = vmatpush1.bf16.xpose.msra.mxu0 0
        %2181 = vmatprep.mubr.bf16.mxu0 0
        %2182 = vmatmul.mubr.bf16.gmra.mrb[0].mxu0 %v2144
        %v2183 = vpop.f32.mrb[0].mxu0
        %v2184 = vadd.f32 0.0, %v2183
        %v2185 = vpop.f32.mrb[0].mxu0
        %v2186 = vpop.f32.mrb[0].mxu0
        %v2187 = vadd.f32 0.0, %v2186
        %v2188 = vpop.f32.mrb[0].mxu0
        %2189 = vdwg.mxu0
        %v2190 = vmul.f32 %v2184, 0.35355338
        %v2191 = vmul.f32 %v2187, 0.35355338
        %v2192 = vsel %vm686, %v2190, -1e+30
        %v2193 = vsel %vm687, %v2191, -1e+30
        %v2194 = vsel %vm690, %v2192, -inf
        %2195 = vmax.xlane.f32.xlu0 %v2194
        %v2196 = vpop.xlane.xlu0 %2195
        %v2197 = vsel %vm690, %v2193, -inf
        %2198 = vmax.xlane.f32.xlu0 %v2197
        %v2199 = vpop.xlane.xlu0 %2198
        %vm2200 = vcmp.le.f32.partialorder %v2196, -5e+29
        %vm2201 = vcmp.le.f32.partialorder %v2199, -5e+29
        %v2202 = vsel %vm2200, 1, 0
        %v2203 = vsel %vm2201, 1, 0
        %vm2204 = vcmp.eq.s32.totalorder %v2202, 1
        %vm2205 = vcmp.eq.s32.totalorder %v2203, 1
        %v2206 = vsel %vm2204, 0.0, %v2192
        %v2207 = vsel %vm2205, 0.0, %v2193
        %v2208 = vsel %vm2200, 0.0, %v2196
        %v2209 = vsel %vm2201, 0.0, %v2199
        %v2210 = vsub.f32 %v2206, %v2208
        %v2211 = vsub.f32 %v2207, %v2209
        %v2212 = vmul.f32 %v2210, 1.442695
        %v2213 = vpow.pop %v2212
        %v2214 = vmul.f32 %v2211, 1.442695
        %v2215 = vpow.pop %v2214
        %v2216 = vsel %vm690, %v2213, 0.0
        %2217 = vadd.xlane.f32.xlu0 %v2216
        %v2218 = vpop.xlane.xlu0 %2217
        %v2219 = vsel %vm690, %v2215, 0.0
        %2220 = vadd.xlane.f32.xlu0 %v2219
        %v2221 = vpop.xlane.xlu0 %2220
        %v2222 = vrcp.pop %v2218
        %v2223 = vrcp.pop %v2221
        %v2224 = vmul.f32 %v2213, %v2222
        %v2225 = vmul.f32 %v2215, %v2223
        %s2226 = scalar_lea.vmem %s465, 112 [#allocation2]
        %v2227 = vld [vmem:[%s2226] sm:$0xff]
        %v2228 = vld [vmem:[%s2226 + $0x8] sm:$0xff]
        %v2229 = vsel %vm686, %v2227, -1e+30
        %v2230 = vsel %vm687, %v2228, -1e+30
        %v2231 = vsel %vm690, %v2229, -inf
        %2232 = vmax.xlane.f32.xlu0 %v2231
        %v2233 = vpop.xlane.xlu0 %2232
        %v2234 = vsel %vm690, %v2230, -inf
        %2235 = vmax.xlane.f32.xlu0 %v2234
        %v2236 = vpop.xlane.xlu0 %2235
        %vm2237 = vcmp.le.f32.partialorder %v2233, -5e+29
        %vm2238 = vcmp.le.f32.partialorder %v2236, -5e+29
        %v2239 = vsel %vm2237, 1, 0
        %v2240 = vsel %vm2238, 1, 0
        %vm2241 = vcmp.eq.s32.totalorder %v2239, 1
        %vm2242 = vcmp.eq.s32.totalorder %v2240, 1
        %v2243 = vsel %vm2241, 0.0, %v2229
        %v2244 = vsel %vm2242, 0.0, %v2230
        %v2245 = vsel %vm2237, 0.0, %v2233
        %v2246 = vsel %vm2238, 0.0, %v2236
        %v2247 = vsub.f32 %v2243, %v2245
        %v2248 = vsub.f32 %v2244, %v2246
        %v2249 = vmul.f32 %v2247, 1.442695
        %v2250 = vpow.pop %v2249
        %v2251 = vmul.f32 %v2248, 1.442695
        %v2252 = vpow.pop %v2251
        %v2253 = vsel %vm690, %v2250, 0.0
        %2254 = vadd.xlane.f32.xlu0 %v2253
        %v2255 = vpop.xlane.xlu0 %2254
        %v2256 = vsel %vm690, %v2252, 0.0
        %2257 = vadd.xlane.f32.xlu0 %v2256
        %v2258 = vpop.xlane.xlu0 %2257
        %v2259 = vrcp.pop %v2255
        %v2260 = vrcp.pop %v2258
        %v2261 = vmul.f32 %v2250, %v2259
        %v2262 = vmul.f32 %v2252, %v2260
        %v2263 = vadd.f32 %v2224, %v2261
        %v2264 = vadd.f32 %v2225, %v2262
        %v2265 = vsel %vm690, %v2263, 0.0
        %2266 = vadd.xlane.f32.xlu0 %v2265
        %v2267 = vpop.xlane.xlu0 %2266
        %v2268 = vsel %vm690, %v2264, 0.0
        %2269 = vadd.xlane.f32.xlu0 %v2268
        %v2270 = vpop.xlane.xlu0 %2269
        %v2271 = vrcp.pop %v2267
        %v2272 = vmul.f32 %v2263, %v2271
        %v2273 = vrcp.pop %v2270
        %v2274 = vmul.f32 %v2264, %v2273
        %v2275 = vpack.c.bf16 %v2274, %v2272
        %2276 = vrot.lane.b32.xlu0 %v1587, 40
        %v2277 = vpop.permute.xlu0 %2276
        %v2280 = vsel %vm690, %v2275, 0
        %2282 = vmatprep.subr.bf16.mxu0 0
        %2283 = vmatpush1.bf16.msra.mxu0 %v2277
        %2284 = vmatprep.subr.bf16.mxu0 0
        %2285 = vmatpush1.bf16.msra.mxu0 0
        %2286 = vmatprep.subr.bf16.mxu0 0
        %2287 = vmatpush1.bf16.msra.mxu0 0
        %2288 = vmatprep.subr.bf16.mxu0 0
        %2289 = vmatpush1.bf16.msra.mxu0 0
        %2290 = vmatprep.subr.bf16.mxu0 0
        %2291 = vmatpush1.bf16.msra.mxu0 0
        %2292 = vmatprep.subr.bf16.mxu0 0
        %2293 = vmatpush1.bf16.msra.mxu0 0
        %2294 = vmatprep.subr.bf16.mxu0 0
        %2295 = vmatpush1.bf16.msra.mxu0 0
        %2296 = vmatprep.subr.bf16.mxu0 0
        %2297 = vmatpush1.bf16.msra.mxu0 0
        %2298 = vmatprep.subr.bf16.mxu0 0
        %2299 = vmatpush1.bf16.msra.mxu0 0
        %2300 = vmatprep.subr.bf16.mxu0 0
        %2301 = vmatpush1.bf16.msra.mxu0 0
        %2302 = vmatprep.subr.bf16.mxu0 0
        %2303 = vmatpush1.bf16.msra.mxu0 0
        %2304 = vmatprep.subr.bf16.mxu0 0
        %2305 = vmatpush1.bf16.msra.mxu0 0
        %2306 = vmatprep.subr.bf16.mxu0 0
        %2307 = vmatpush1.bf16.msra.mxu0 0
        %2308 = vmatprep.subr.bf16.mxu0 0
        %2309 = vmatpush1.bf16.msra.mxu0 0
        %2310 = vmatprep.subr.bf16.mxu0 0
        %2311 = vmatpush1.bf16.msra.mxu0 0
        %2312 = vmatprep.subr.bf16.mxu0 0
        %2313 = vmatpush1.bf16.msra.mxu0 0
        %2314 = vmatprep.mubr.bf16.mxu0 0
        %2315 = vmatmul.mubr.bf16.gmra.mrb[0].mxu0 %v2280
        %v2316 = vpop.f32.mrb[0].mxu0
        %v2317 = vadd.f32 0.0, %v2316
        %v2318 = vpop.f32.mrb[0].mxu0
        %v2319 = vpop.f32.mrb[0].mxu0
        %v2320 = vadd.f32 0.0, %v2319
        %v2321 = vpop.f32.mrb[0].mxu0
        %2322 = vdwg.mxu0
        %2325 = vrot.lane.b32.xlu0 %v1949, 8
        %v2326 = vpop.permute.xlu0 %2325
        %2327 = vrot.lane.b32.xlu0 %v1952, 8
        %v2328 = vpop.permute.xlu0 %2327
        %2333 = vrot.lane.b32.xlu0 %v2133, 16
        %v2334 = vpop.permute.xlu0 %2333
        %2335 = vrot.lane.b32.xlu0 %v2136, 16
        %v2336 = vpop.permute.xlu0 %2335
        %2341 = vrot.lane.b32.xlu0 %v2317, 24
        %v2342 = vpop.permute.xlu0 %2341
        %2343 = vrot.lane.b32.xlu0 %v2320, 24
        %v2344 = vpop.permute.xlu0 %2343
        %v2347 = vsel %vm636, %v1765, %v2326
        %v2348 = vsel %vm636, %v1768, %v2328
        %v2349 = vsel %vm690, %v2347, %v2334
        %v2350 = vsel %vm690, %v2348, %v2336
        %v2351 = vsel %vm1399, %v2349, %v2342
        %v2352 = vsel %vm1399, %v2350, %v2344
        %v2353 = vpack.c.bf16 %v2352, %v2351
        %s2354 = scalar_lea.vmem [#allocation7], 16
        %v2355 = vld [vmem:[%s2354] sm:$0xf]
        %v2356 = vld [vmem:[%s2354 + $0x4] sm:$0xf]
        %v2357 = vld [vmem:[%s2354 + $0x8] sm:$0xf]
        %v2358 = vld [vmem:[%s2354 + $0xc] sm:$0xf]
        %s2359 = scalar_lea.vmem %s7, 1
        %v2360 = vld [vmem:[%s2359] sm:$0x1]
        %v2362 = vlaneseq
        %v2363 = vshrl.u32 %v2362, 7
        %v2364 = vsub.s32 0, %v2363
        %v2365 = vrot.slane %v2360, %v2364
        %v2371 = vunpack.c.l.b16 %v2355
        %v2372 = vunpack.c.l.b16 %v2356
        %v2373 = vunpack.c.l.b16 %v2357
        %v2374 = vunpack.c.l.b16 %v2358
        %v2375 = vpack.c.b16 %v2372, %v2371
        %v2376 = vpack.c.b16 %v2374, %v2373
        %v2380 = vsel %vm587, %v2353, 0
        %2382 = vmatprep.subr.bf16.mxu0 0
        %2383 = vmatpush1.bf16.msra.mxu0 %v2375
        %2384 = vmatprep.subr.bf16.mxu0 0
        %2385 = vmatpush1.bf16.msra.mxu0 %v2376
        %2386 = vmatprep.subr.bf16.mxu0 0
        %2387 = vmatpush1.bf16.msra.mxu0 0
        %2388 = vmatprep.subr.bf16.mxu0 0
        %2389 = vmatpush1.bf16.msra.mxu0 0
        %2390 = vmatprep.subr.bf16.mxu0 0
        %2391 = vmatpush1.bf16.msra.mxu0 0
        %2392 = vmatprep.subr.bf16.mxu0 0
        %2393 = vmatpush1.bf16.msra.mxu0 0
        %2394 = vmatprep.subr.bf16.mxu0 0
        %2395 = vmatpush1.bf16.msra.mxu0 0
        %2396 = vmatprep.subr.bf16.mxu0 0
        %2397 = vmatpush1.bf16.msra.mxu0 0
        %2398 = vmatprep.subr.bf16.mxu0 0
        %2399 = vmatpush1.bf16.msra.mxu0 0
        %2400 = vmatprep.subr.bf16.mxu0 0
        %2401 = vmatpush1.bf16.msra.mxu0 0
        %2402 = vmatprep.subr.bf16.mxu0 0
        %2403 = vmatpush1.bf16.msra.mxu0 0
        %2404 = vmatprep.subr.bf16.mxu0 0
        %2405 = vmatpush1.bf16.msra.mxu0 0
        %2406 = vmatprep.subr.bf16.mxu0 0
        %2407 = vmatpush1.bf16.msra.mxu0 0
        %2408 = vmatprep.subr.bf16.mxu0 0
        %2409 = vmatpush1.bf16.msra.mxu0 0
        %2410 = vmatprep.subr.bf16.mxu0 0
        %2411 = vmatpush1.bf16.msra.mxu0 0
        %2412 = vmatprep.subr.bf16.mxu0 0
        %2413 = vmatpush1.bf16.msra.mxu0 0
        %2414 = vmatprep.mubr.bf16.mxu0 0
        %2415 = vmatmul.mubr.bf16.gmra.mrb[0].mxu0 %v2380
        %v2416 = vpop.f32.mrb[0].mxu0
        %v2417 = vadd.f32 %v2365, %v2416
        %v2418 = vpop.f32.mrb[0].mxu0
        %v2419 = vpop.f32.mrb[0].mxu0
        %v2420 = vadd.f32 %v2365, %v2419
        %v2421 = vpop.f32.mrb[0].mxu0
        %2422 = vdwg.mxu0
        %v2423 = vadd.f32 %v1515, %v2417
        %v2424 = vadd.f32 %v1516, %v2420
        %s2425 = scalar_lea.vmem %s8, 1
        %v2426 = vld [vmem:[%s2425] sm:$0x1]
        %s2427 = scalar_lea.vmem %s9, 1
        %v2428 = vld [vmem:[%s2427] sm:$0x1]
        %v2429 = vsel %vm587, %v2423, 0.0
        %2430 = vadd.xlane.f32.xlu0 %v2429
        %v2431 = vpop.xlane.xlu0 %2430
        %v2432 = vsel %vm587, %v2424, 0.0
        %2433 = vadd.xlane.f32.xlu0 %v2432
        %v2434 = vpop.xlane.xlu0 %2433
        %v2435 = vmul.f32 %v2431, %v1480
        %v2436 = vmul.f32 %v2434, %v1480
        %v2437 = vsub.f32 %v2423, %v2435
        %v2438 = vsub.f32 %v2424, %v2436
        %v2439 = vmul.f32 %v2437, %v2437
        %v2440 = vmul.f32 %v2438, %v2438
        %v2441 = vsel %vm587, %v2439, 0.0
        %2442 = vadd.xlane.f32.xlu0 %v2441
        %v2443 = vpop.xlane.xlu0 %2442
        %v2444 = vsel %vm587, %v2440, 0.0
        %2445 = vadd.xlane.f32.xlu0 %v2444
        %v2446 = vpop.xlane.xlu0 %2445
        %v2447 = vmul.f32 %v2443, %v1480
        %v2448 = vmul.f32 %v2446, %v1480
        %v2449 = vadd.f32 %v2447, 1e-05
        %v2450 = vadd.f32 %v2448, 1e-05
        %v2451 = vrsqrt.pop %v2449
        %v2452 = vrsqrt.pop %v2450
        %v2453 = vmul.f32 %v2437, %v2451
        %v2454 = vmul.f32 %v2438, %v2452
        %v2456 = vlaneseq
        %v2457 = vshrl.u32 %v2456, 7
        %v2458 = vsub.s32 0, %v2457
        %v2459 = vrot.slane %v2426, %v2458
        %v2461 = vmul.f32 %v2453, %v2459
        %v2462 = vmul.f32 %v2454, %v2459
        %v2464 = vlaneseq
        %v2465 = vshrl.u32 %v2464, 7
        %v2466 = vsub.s32 0, %v2465
        %v2467 = vrot.slane %v2428, %v2466
        %v2469 = vadd.f32 %v2461, %v2467
        %v2470 = vadd.f32 %v2462, %v2467
        %v2471 = vld [vmem:[%s10] sm:$0x1]
        %v2472 = vld [vmem:[%s11] sm:$0x1]
        %v2473 = vsel %vm587, %v2469, 0.0
        %2474 = vadd.xlane.f32.xlu0 %v2473
        %v2475 = vpop.xlane.xlu0 %2474
        %v2476 = vsel %vm587, %v2470, 0.0
        %2477 = vadd.xlane.f32.xlu0 %v2476
        %v2478 = vpop.xlane.xlu0 %2477
        %v2479 = vmul.f32 %v2475, %v1480
        %v2480 = vmul.f32 %v2478, %v1480
        %v2481 = vsub.f32 %v2469, %v2479
        %v2482 = vsub.f32 %v2470, %v2480
        %v2483 = vmul.f32 %v2481, %v2481
        %v2484 = vmul.f32 %v2482, %v2482
        %v2485 = vsel %vm587, %v2483, 0.0
        %2486 = vadd.xlane.f32.xlu0 %v2485
        %v2487 = vpop.xlane.xlu0 %2486
        %v2488 = vsel %vm587, %v2484, 0.0
        %2489 = vadd.xlane.f32.xlu0 %v2488
        %v2490 = vpop.xlane.xlu0 %2489
        %v2491 = vmul.f32 %v2487, %v1480
        %v2492 = vmul.f32 %v2490, %v1480
        %v2493 = vadd.f32 %v2491, 1e-05
        %v2494 = vadd.f32 %v2492, 1e-05
        %v2495 = vrsqrt.pop %v2493
        %v2496 = vrsqrt.pop %v2494
        %v2497 = vmul.f32 %v2481, %v2495
        %v2498 = vmul.f32 %v2482, %v2496
        %v2500 = vlaneseq
        %v2501 = vshrl.u32 %v2500, 7
        %v2502 = vsub.s32 0, %v2501
        %v2503 = vrot.slane %v2471, %v2502
        %v2505 = vmul.f32 %v2497, %v2503
        %v2506 = vmul.f32 %v2498, %v2503
        %v2508 = vlaneseq
        %v2509 = vshrl.u32 %v2508, 7
        %v2510 = vsub.s32 0, %v2509
        %v2511 = vrot.slane %v2472, %v2510
        %v2513 = vadd.f32 %v2505, %v2511
        %v2514 = vadd.f32 %v2506, %v2511
        %v2515 = vmul.f32 %v2513, %v552
        %v2516 = vmul.f32 %v2514, %v557
        %v2517 = vsel %vm587, %v2515, 0.0
        %v2518 = vsel %vm587, %v2516, 0.0
        %v2519 = vadd.f32 %v2517, %v2518
        %v2520 = vrot.slane %v2519, 4
        %v2521 = vadd.f32 %v2519, %v2520
        %v2522 = vrot.slane %v2521, 2
        %v2523 = vadd.f32 %v2521, %v2522
        %v2524 = vrot.slane %v2523, 1
        %v2525 = vadd.f32 %v2523, %v2524
        %vm2526 = vcmask 253952
        %2527 = vst.msk [vmem:[%s525] sm:$0x1] %vm2526, %v2525
        %s2528 = sand.u32 %s310, 1
        %s2529 = scalar_lea.sflag [#allocation4], %s2528
        %s2530 = sand.u32 %s310, 1
        %s2531 = scalar_lea.vmem [#allocation8], %s2530
        // Predicated region
        $region81: #{tpu_custom_call.1} parent=67 // pred_check
          %p2532 = pneg %p320
        $region82: #{tpu_custom_call.1} parent=67 // pred_check_branch
          %2534 = sbr.rel (%p2532) target = $region84
        $region83: #{tpu_custom_call.1} parent=67 // pred_region
          %s2536 = ssub.s32 16, 16
          %2537 = vsyncadd %s2529, %s2536
          %s2538 = smul.addr %s30, 16
          %s2539 = scalar_lea.hbm %s12, %s2538
          %s2541 = sshll.u32 %s2531, 4
          %s2542 = int_to_ptr.vmem [resolvable:$true] %s2541
          %2544 = dma.vmem_to_hbm [thread:$0]  %s2542, 16, %s2539, %s2529
        $region84: #{tpu_custom_call.1} parent=67 // pred_fallthru
          _
      $region68: #{tpu_custom_call.1} parent=5 // pred_fallthru
        _
      %p2545 = scmp.le.s32.totalorder 2, %s25
      // Predicated region
      $region85: #{tpu_custom_call.1} parent=5 // pred_check
        %p2546 = pneg %p2545
      $region86: #{tpu_custom_call.1} parent=5 // pred_check_branch
        %2548 = sbr.rel (%p2546) target = $region88
      $region87: #{tpu_custom_call.1} parent=5 // pred_region
        %s2549 = ssub.s32 %s25, 2
        // Predicated region
        $region89: #{tpu_custom_call.1} parent=87 // pred_check
          %p2550 = pneg %p326
        $region90: #{tpu_custom_call.1} parent=87 // pred_check_branch
          %2552 = sbr.rel (%p2550) target = $region92
        $region91: #{tpu_custom_call.1} parent=87 // pred_region
          %s2553 = sand.u32 %s311, 1
          %s2554 = scalar_lea.sflag [#allocation4], %s2553
          %s2555 = sand.u32 %s311, 1
          %s2556 = scalar_lea.vmem [#allocation8], %s2555
          %2557 = dma.done %s2554, 16
        $region92: #{tpu_custom_call.1} parent=87 // pred_fallthru
          _
      $region88: #{tpu_custom_call.1} parent=5 // pred_fallthru
        _
    $region6: #{tpu_custom_call.1} parent=1 // loop_footer
      %s29 = sadd.s32 1, %s25
    $region7: #{tpu_custom_call.1} parent=1 // loop_footer_branch
      %24 = sbr.rel target = $region3
    $region8: #{tpu_custom_call.1} parent=1 // loop_exit
      _
    %2558 = vsyncpa [#allocation3], 1
    %s2559 = scalar_lea.sflag [#allocation3], 1
    %2560 = vsyncpa %s2559, 1
    %2561 = vsyncpa [#allocation6], 1
    %2562 = vsyncpa [#allocation4], 1
    %s2563 = scalar_lea.sflag [#allocation4], 1
    %2564 = vsyncpa %s2563, 1

</llo_original>
